<compile_context>
chip_gen: v7x
topology: tpu7x:2x2x1
jax: 0.10.0
libtpu: 0.0.40
codegen_flags: <defaults>
</compile_context>

<pallas_src>
import functools

import jax
import jax.numpy as jnp
from jax.experimental import pallas as pl
from jax.experimental.pallas import tpu as pltpu

EPS = 1e-5          # BatchNorm2d default eps
NEG_SLOPE = 0.2     # LeakyReLU negative_slope
STRIDE = 2
PADDING = 1
OUT_PAD = (1, 0)    # output_padding=(1, 0)


def _round_up(x, m):
    return ((x + m - 1) // m) * m


# ----------------------------------------------------------------------------
# Fused Pallas kernel: tiled matmul (bf16 in, f32 acc) + shift + activation
# ----------------------------------------------------------------------------
def _fused_matmul_kernel(a_ref, w_ref, t_ref, o_ref, *, act):
    acc = jnp.dot(a_ref[...], w_ref[...], preferred_element_type=jnp.float32)
    y = acc + t_ref[...]                        # folded conv bias + BatchNorm
    if act == "relu":
        y = jnp.maximum(y, 0.0)
    elif act == "leaky":
        y = jnp.where(y > 0.0, y, NEG_SLOPE * y)
    elif act == "tanh":
        y = jnp.tanh(y)
    o_ref[...] = y.astype(o_ref.dtype)


def _choose_tm(M, tm_max=512):
    """Largest 128-multiple tile <= tm_max with minimal M padding; prefer >= 2
    grid steps when M allows (keeps both v7x TensorCores busy)."""
    best, best_pad = 128, _round_up(M, 128)
    for tm in range(128, min(tm_max, _round_up(M, 128)) + 1, 128):
        mpad = _round_up(M, tm)
        if M > 128 and mpad // tm < 2:
            continue
        if mpad < best_pad or (mpad == best_pad and tm > best):
            best, best_pad = tm, mpad
    return best


def fused_matmul_bias_act(a, w, shift, act, out_dtype=jnp.float32, tm_max=512):
    """out[m, n] = act((a @ w)[m, n] + shift[n]).

    a: (M, K) bf16 patches; w: (K, Nc) bf16 weights (BN scale already folded);
    shift: (Nc,) f32.  N is padded to a multiple of 128 so every store is a
    full-lane (unmasked) vst; accumulation and epilogue run in f32, the result
    is stored as `out_dtype` (bf16 for intermediate layers, f32 for the final
    tanh layer).
    """
    M, K = a.shape
    Nc = w.shape[1]
    Npad = _round_up(Nc, 128)
    tm = _choose_tm(M, tm_max)
    Mpad = _round_up(M, tm)
    if Mpad != M:
        a = jnp.pad(a, ((0, Mpad - M), (0, 0)))
    if Npad != Nc:
        w = jnp.pad(w, ((0, 0), (0, Npad - Nc)))
        shift = jnp.pad(shift, (0, Npad - Nc))
    shift2 = shift.reshape(1, Npad).astype(jnp.float32)

    out = pl.pallas_call(
        functools.partial(_fused_matmul_kernel, act=act),
        out_shape=jax.ShapeDtypeStruct((Mpad, Npad), out_dtype),
        grid=(Mpad // tm,),
        in_specs=[
            pl.BlockSpec((tm, K), lambda i: (i, 0)),      # patch tile (bf16)
            pl.BlockSpec((K, Npad), lambda i: (0, 0)),    # full weight (bf16)
            pl.BlockSpec((1, Npad), lambda i: (0, 0)),    # folded bias/BN shift
        ],
        out_specs=pl.BlockSpec((tm, Npad), lambda i: (i, 0)),
        compiler_params=pltpu.CompilerParams(dimension_semantics=("parallel",)),
    )(a, w, shift2)
    return out[:M, :Nc]


# ----------------------------------------------------------------------------
# Polyphase (sub-pixel) decomposition of ConvTranspose2d — trace-time planning
# ----------------------------------------------------------------------------
def _phase_plan(k, s, p, op, in_size):
    """Per-axis plan: for each output phase r = oh % s, which kernel taps kh
    contribute and which (undilated) input offset d they read (ih = m + d for
    output row oh = s*m + r)."""
    out_size = (in_size - 1) * s - 2 * p + k + op
    m_count = -(-out_size // s)               # ceil(out_size / s)
    pad_lo = k - 1 - p                        # dense-equivalent conv padding
    taps = []
    for r in range(s):
        lst = []
        for kk in range(k):
            t = r + kk - pad_lo
            if t % s == 0:
                lst.append((kk, t // s))
        taps.append(lst)
    all_d = [d for lst in taps for (_, d) in lst]
    dmin, dmax = min(all_d), max(all_d)
    win = dmax - dmin + 1                     # input-window size per position
    pad_before = max(0, -dmin)
    pad_after = max(0, (m_count - 1) + dmax - (in_size - 1))
    start = dmin + pad_before                 # window start offset in padded x
    return dict(out=out_size, m=m_count, win=win, dmin=dmin, taps=taps,
                pad_before=pad_before, pad_after=pad_after, start=start)


def _deconv_phase_weight(W_T, plan_h, plan_w):
    """Packed polyphase weight matrix (win_h*win_w*Cin, s*s*Cout).
    W_T has the PyTorch ConvTranspose2d layout (Cin, Cout, kH, kW)."""
    Cin, Cout, kH, kW = W_T.shape
    s = STRIDE
    # dense-equivalent kernel of the transposed conv: flip + swap in/out.
    Wc = jnp.flip(W_T, axis=(2, 3)).transpose(1, 0, 2, 3)   # (Cout, Cin, kH, kW)
    Wm = jnp.zeros((plan_h["win"], plan_w["win"], Cin, s * s, Cout), jnp.float32)
    for rh in range(s):
        for kh, dh in plan_h["taps"][rh]:
            for rw in range(s):
                for kw, dw in plan_w["taps"][rw]:
                    Wm = Wm.at[dh - plan_h["dmin"], dw - plan_w["dmin"], :,
                               rh * s + rw, :].set(Wc[:, :, kh, kw].T)
    return Wm.reshape(plan_h["win"] * plan_w["win"] * Cin, s * s * Cout)


def _window_patches(x_pad, plan_h, plan_w):
    """(N*Mh*Mw, win_h*win_w*C) window patches of an already-padded NHWC input."""
    N, _, _, C = x_pad.shape
    Mh, Mw = plan_h["m"], plan_w["m"]
    sh, sw = plan_h["start"], plan_w["start"]
    cols = [x_pad[:, sh + dh: sh + dh + Mh, sw + dw: sw + dw + Mw, :]
            for dh in range(plan_h["win"]) for dw in range(plan_w["win"])]
    patches = jnp.concatenate(cols, axis=-1)
    return patches.reshape(N * Mh * Mw, plan_h["win"] * plan_w["win"] * C)


# ----------------------------------------------------------------------------
# Layers
# ----------------------------------------------------------------------------
def conv_transpose_bn_act(x, W_T, b, gamma, beta, mean, var, act):
    """ConvTranspose2d(stride=2, padding=1, output_padding=(1,0)) +
    BatchNorm2d(eval) + activation, via polyphase matmul.  x is NHWC (f32 or
    bf16); the result is returned in bf16 (it feeds the next bf16 matmul)."""
    Cin, Cout, kH, kW = W_T.shape
    N, H, W, _ = x.shape
    ph = _phase_plan(kH, STRIDE, PADDING, OUT_PAD[0], H)
    pw = _phase_plan(kW, STRIDE, PADDING, OUT_PAD[1], W)

    x_pad = jnp.pad(x.astype(jnp.bfloat16),
                    ((0, 0), (ph["pad_before"], ph["pad_after"]),
                     (pw["pad_before"], pw["pad_after"]), (0, 0)))
    patches = _window_patches(x_pad, ph, pw)              # (M, win*win*Cin) bf16

    inv = 1.0 / jnp.sqrt(var + EPS)
    scale = gamma * inv
    shift = (b - mean) * scale + beta
    s2 = STRIDE * STRIDE
    Wmat = _deconv_phase_weight(W_T, ph, pw) * jnp.tile(scale, s2)[None, :]
    y = fused_matmul_bias_act(patches, Wmat.astype(jnp.bfloat16),
                              jnp.tile(shift, s2), act,
                              out_dtype=jnp.bfloat16)     # (M, s2*Cout) bf16

    # pixel shuffle: out[n, s*mh+rh, s*mw+rw, c] = y[n, mh, mw, rh, rw, c]
    Mh, Mw = ph["m"], pw["m"]
    y = y.reshape(N, Mh, Mw, STRIDE, STRIDE, Cout)
    y = y.transpose(0, 1, 3, 2, 4, 5).reshape(N, Mh * STRIDE, Mw * STRIDE, Cout)
    return y[:, :ph["out"], :pw["out"], :]


def conv2d_tanh(x, W, b, padding=3):
    """Conv2d(k=7, s=1, p=3) + tanh.  x is NHWC, W is (Cout, Cin, kH, kW)."""
    Cout, Cin, kH, kW = W.shape
    xp = jnp.pad(x.astype(jnp.bfloat16),
                 ((0, 0), (padding, padding), (padding, padding), (0, 0)))
    N, Hp, Wp, _ = xp.shape
    Ho, Wo = Hp - kH + 1, Wp - kW + 1
    # TODO(synk): the 7x7 im2col is still materialized by XLA (49x blow-up of
    # the 8-channel activation); an in-kernel shifted-window reduction would
    # remove that HBM traffic entirely.
    cols = [xp[:, dh:dh + Ho, dw:dw + Wo, :] for dh in range(kH) for dw in range(kW)]
    patches = jnp.concatenate(cols, axis=-1).reshape(N * Ho * Wo, kH * kW * Cin)
    Wmat = W.transpose(2, 3, 1, 0).reshape(kH * kW * Cin, Cout).astype(jnp.bfloat16)
    y = fused_matmul_bias_act(patches, Wmat, b, "tanh", out_dtype=jnp.float32)
    return y.reshape(N, Ho, Wo, Cout)


def decoder_forward(x_nchw, params, activation):
    """Decoder.forward, inference semantics (BN uses running stats)."""
    x = jnp.transpose(x_nchw, (0, 2, 3, 1))      # NCHW -> NHWC
    for name in ("l1", "l2", "l3"):
        p = params[name]
        x = conv_transpose_bn_act(x, p["w"], p["b"], p["gamma"], p["beta"],
                                  p["mean"], p["var"], activation)
        # TODO(synk): Dropout2d(0.2) is the identity in eval mode; training-mode
        # per-channel dropout (with 1/(1-p) rescale) is not implemented here.
    p = params["out"]
    x = conv2d_tanh(x, p["w"], p["b"])
    return jnp.transpose(x, (0, 3, 1, 2))        # NHWC -> NCHW (matches PyTorch)


# ----------------------------------------------------------------------------
# Deterministic parameter init (shapes taken from Decoder.__init__)
# ----------------------------------------------------------------------------
def init_params(key, out_dims, kernel_size):
    keys = iter(jax.random.split(key, 32))
    nk = lambda: next(keys)

    def convt_layer(cin, cout):
        fan = cin * kernel_size * kernel_size
        return dict(
            w=jax.random.normal(nk(), (cin, cout, kernel_size, kernel_size),
                                jnp.float32) / jnp.sqrt(fan),
            b=0.1 * jax.random.normal(nk(), (cout,), jnp.float32),
            gamma=1.0 + 0.1 * jax.random.normal(nk(), (cout,), jnp.float32),
            beta=0.1 * jax.random.normal(nk(), (cout,), jnp.float32),
            mean=0.1 * jax.random.normal(nk(), (cout,), jnp.float32),
            var=0.5 + jax.random.uniform(nk(), (cout,), jnp.float32),
        )

    return dict(
        l1=convt_layer(64, 32),
        l2=convt_layer(32, 16),
        l3=convt_layer(16, 8),
        out=dict(
            w=jax.random.normal(nk(), (out_dims, 8, 7, 7),
                                jnp.float32) / jnp.sqrt(8 * 49),
            b=0.1 * jax.random.normal(nk(), (out_dims,), jnp.float32),
        ),
    )


# ----------------------------------------------------------------------------
# Pure-JAX reference (lax conv, f32) used to validate the Pallas path
# ----------------------------------------------------------------------------
def reference_forward(x, params, activation):
    act_fn = (lambda v: jnp.maximum(v, 0.0)) if activation == "relu" else \
             (lambda v: jnp.where(v > 0.0, v, NEG_SLOPE * v))

    def convT(x, W_T, b, stride=2, padding=1, out_pad=(1, 0)):
        k = W_T.shape[2]
        Wc = jnp.flip(W_T, axis=(2, 3)).transpose(1, 0, 2, 3)
        y = jax.lax.conv_general_dilated(
            x, Wc, window_strides=(1, 1),
            padding=[(k - 1 - padding, k - 1 - padding + out_pad[0]),
                     (k - 1 - padding, k - 1 - padding + out_pad[1])],
            lhs_dilation=(stride, stride),
            dimension_numbers=("NCHW", "OIHW", "NCHW"))
        return y + b.reshape(1, -1, 1, 1)

    def bn(x, p):
        sh = lambda v: v.reshape(1, -1, 1, 1)
        return ((x - sh(p["mean"])) / jnp.sqrt(sh(p["var"]) + EPS)
                * sh(p["gamma"]) + sh(p["beta"]))

    for name in ("l1", "l2", "l3"):
        p = params[name]
        x = act_fn(bn(convT(x, p["w"], p["b"]), p))
    p = params["out"]
    y = jax.lax.conv_general_dilated(
        x, p["w"], window_strides=(1, 1), padding=[(3, 3), (3, 3)],
        dimension_numbers=("NCHW", "OIHW", "NCHW"))
    return jnp.tanh(y + p["b"].reshape(1, -1, 1, 1))


if __name__ == "__main__":
    key = jax.random.PRNGKey(0)
    pkey, xkey = jax.random.split(key)

    out_dims, kernel_size, activation = 3, 3, "leaky"
    params = init_params(pkey, out_dims, kernel_size)

    # Module input is NCHW with 64 channels (small spatial for the demo).
    x = jax.random.normal(xkey, (2, 64, 8, 8), jnp.float32)

    fwd = jax.jit(lambda xx: decoder_forward(xx, params, activation))
    out = jax.block_until_ready(fwd(x))

    # H: 8->16->32->64 ; W: 8->15->29->57 (output_padding=(1,0) is asymmetric)
    assert out.shape == (2, out_dims, 64, 57), out.shape

    ref = reference_forward(x, params, activation)
    # Tolerance accounts for bf16 matmul operands / bf16 inter-layer activations
    # (f32 accumulate and epilogue everywhere).
    assert jnp.allclose(out, ref, atol=3e-2, rtol=3e-2), \
        float(jnp.max(jnp.abs(out - ref)))

    print("KERNEL_OK")
</pallas_src>

<mosaic_0001>
module attributes {stable_mosaic.version = 11 : i64} {
  func.func @_fused_matmul_kernel(%arg0: i32, %arg1: memref<128x256xbf16, #tpu.memory_space<vmem>>, %arg2: memref<256x128xbf16, #tpu.memory_space<vmem>>, %arg3: memref<1x128xf32, #tpu.memory_space<vmem>>, %arg4: memref<128x128xbf16, #tpu.memory_space<vmem>>) attributes {dimension_semantics = [#tpu.dimension_semantics<parallel>], iteration_bounds = array<i64: 1>, scalar_prefetch = 0 : i64, scratch_operands = 0 : i64, tpu.core_type = #tpu.core_type<tc>, window_params = [{transform_indices = @transform_0, window_bounds = array<i64: 128, 256>}, {pipeline_mode = #tpu.pipeline_mode<synchronous>, transform_indices = @transform_1, window_bounds = array<i64: 256, 128>}, {pipeline_mode = #tpu.pipeline_mode<synchronous>, transform_indices = @transform_2, window_bounds = array<i64: 1, 128>}, {transform_indices = @transform_3, window_bounds = array<i64: 128, 128>}]} {
    %c0 = arith.constant 0 : index
    %c0_0 = arith.constant 0 : index
    %0 = vector.load %arg1[%c0, %c0_0] : memref<128x256xbf16, #tpu.memory_space<vmem>>, vector<128x256xbf16>
    %c0_1 = arith.constant 0 : index
    %c0_2 = arith.constant 0 : index
    %1 = vector.load %arg2[%c0_1, %c0_2] : memref<256x128xbf16, #tpu.memory_space<vmem>>, vector<256x128xbf16>
    %cst = arith.constant dense<0.000000e+00> : vector<128x128xf32>
    %2 = tpu.matmul %0, %1, %cst {dimension_numbers = #tpu.dot_dimension_numbers<[1], [0], [0], [1], [0, 0, 1, 1], [], []>} : vector<128x256xbf16>, vector<256x128xbf16>, vector<128x128xf32> -> vector<128x128xf32>
    %c0_3 = arith.constant 0 : index
    %c0_4 = arith.constant 0 : index
    %3 = vector.load %arg3[%c0_3, %c0_4] : memref<1x128xf32, #tpu.memory_space<vmem>>, vector<1x128xf32>
    %4 = vector.broadcast %3 : vector<1x128xf32> to vector<128x128xf32>
    %5 = arith.addf %2, %4 : vector<128x128xf32>
    %cst_5 = arith.constant 0.000000e+00 : f32
    %6 = vector.broadcast %cst_5 : f32 to vector<128x128xf32>
    %7 = arith.cmpf ogt, %5, %6 : vector<128x128xf32>
    %cst_6 = arith.constant 2.000000e-01 : f32
    %8 = vector.broadcast %cst_6 : f32 to vector<128x128xf32>
    %9 = arith.mulf %8, %5 : vector<128x128xf32>
    %10 = arith.select %7, %5, %9 : vector<128x128xi1>, vector<128x128xf32>
    %11 = arith.truncf %10 : vector<128x128xf32> to vector<128x128xbf16>
    %c0_7 = arith.constant 0 : index
    %c0_8 = arith.constant 0 : index
    %12 = vector.load %arg4[%c0_7, %c0_8] : memref<128x128xbf16, #tpu.memory_space<vmem>>, vector<128x128xbf16>
    tpu.vector_store %arg4[%c0_7, %c0_8], %11 {strides = array<i32>} : memref<128x128xbf16, #tpu.memory_space<vmem>>, vector<128x128xbf16>,
    return
  }
  func.func @transform_0(%arg0: i32) -> (i32, i32) {
    %c0_i32 = arith.constant 0 : i32
    %c0_i32_0 = arith.constant 0 : i32
    return %arg0, %c0_i32 : i32, i32
  }
  func.func @transform_1(%arg0: i32) -> (i32, i32) {
    %c0_i32 = arith.constant 0 : i32
    %c0_i32_0 = arith.constant 0 : i32
    %c0_i32_1 = arith.constant 0 : i32
    return %c0_i32, %c0_i32_0 : i32, i32
  }
  func.func @transform_2(%arg0: i32) -> (i32, i32) {
    %c0_i32 = arith.constant 0 : i32
    %c0_i32_0 = arith.constant 0 : i32
    %c0_i32_1 = arith.constant 0 : i32
    return %c0_i32, %c0_i32_0 : i32, i32
  }
  func.func @transform_3(%arg0: i32) -> (i32, i32) {
    %c0_i32 = arith.constant 0 : i32
    %c0_i32_0 = arith.constant 0 : i32
    return %arg0, %c0_i32 : i32, i32
  }
}

module attributes {stable_mosaic.version = 11 : i64} {
  func.func @_fused_matmul_kernel(%arg0: i32, %arg1: memref<256x128xbf16, #tpu.memory_space<vmem>>, %arg2: memref<128x128xbf16, #tpu.memory_space<vmem>>, %arg3: memref<1x128xf32, #tpu.memory_space<vmem>>, %arg4: memref<256x128xbf16, #tpu.memory_space<vmem>>) attributes {dimension_semantics = [#tpu.dimension_semantics<parallel>], iteration_bounds = array<i64: 2>, scalar_prefetch = 0 : i64, scratch_operands = 0 : i64, tpu.core_type = #tpu.core_type<tc>, window_params = [{transform_indices = @transform_0, window_bounds = array<i64: 256, 128>}, {pipeline_mode = #tpu.pipeline_mode<synchronous>, transform_indices = @transform_1, window_bounds = array<i64: 128, 128>}, {pipeline_mode = #tpu.pipeline_mode<synchronous>, transform_indices = @transform_2, window_bounds = array<i64: 1, 128>}, {transform_indices = @transform_3, window_bounds = array<i64: 256, 128>}]} {
    %c0 = arith.constant 0 : index
    %c0_0 = arith.constant 0 : index
    %0 = vector.load %arg1[%c0, %c0_0] : memref<256x128xbf16, #tpu.memory_space<vmem>>, vector<256x128xbf16>
    %c0_1 = arith.constant 0 : index
    %c0_2 = arith.constant 0 : index
    %1 = vector.load %arg2[%c0_1, %c0_2] : memref<128x128xbf16, #tpu.memory_space<vmem>>, vector<128x128xbf16>
    %cst = arith.constant dense<0.000000e+00> : vector<256x128xf32>
    %2 = tpu.matmul %0, %1, %cst {dimension_numbers = #tpu.dot_dimension_numbers<[1], [0], [0], [1], [0, 0, 1, 1], [], []>} : vector<256x128xbf16>, vector<128x128xbf16>, vector<256x128xf32> -> vector<256x128xf32>
    %c0_3 = arith.constant 0 : index
    %c0_4 = arith.constant 0 : index
    %3 = vector.load %arg3[%c0_3, %c0_4] : memref<1x128xf32, #tpu.memory_space<vmem>>, vector<1x128xf32>
    %4 = vector.broadcast %3 : vector<1x128xf32> to vector<256x128xf32>
    %5 = arith.addf %2, %4 : vector<256x128xf32>
    %cst_5 = arith.constant 0.000000e+00 : f32
    %6 = vector.broadcast %cst_5 : f32 to vector<256x128xf32>
    %7 = arith.cmpf ogt, %5, %6 : vector<256x128xf32>
    %cst_6 = arith.constant 2.000000e-01 : f32
    %8 = vector.broadcast %cst_6 : f32 to vector<256x128xf32>
    %9 = arith.mulf %8, %5 : vector<256x128xf32>
    %10 = arith.select %7, %5, %9 : vector<256x128xi1>, vector<256x128xf32>
    %11 = arith.truncf %10 : vector<256x128xf32> to vector<256x128xbf16>
    %c0_7 = arith.constant 0 : index
    %c0_8 = arith.constant 0 : index
    %12 = vector.load %arg4[%c0_7, %c0_8] : memref<256x128xbf16, #tpu.memory_space<vmem>>, vector<256x128xbf16>
    tpu.vector_store %arg4[%c0_7, %c0_8], %11 {strides = array<i32>} : memref<256x128xbf16, #tpu.memory_space<vmem>>, vector<256x128xbf16>,
    return
  }
  func.func @transform_0(%arg0: i32) -> (i32, i32) {
    %c0_i32 = arith.constant 0 : i32
    %c0_i32_0 = arith.constant 0 : i32
    return %arg0, %c0_i32 : i32, i32
  }
  func.func @transform_1(%arg0: i32) -> (i32, i32) {
    %c0_i32 = arith.constant 0 : i32
    %c0_i32_0 = arith.constant 0 : i32
    %c0_i32_1 = arith.constant 0 : i32
    return %c0_i32, %c0_i32_0 : i32, i32
  }
  func.func @transform_2(%arg0: i32) -> (i32, i32) {
    %c0_i32 = arith.constant 0 : i32
    %c0_i32_0 = arith.constant 0 : i32
    %c0_i32_1 = arith.constant 0 : i32
    return %c0_i32, %c0_i32_0 : i32, i32
  }
  func.func @transform_3(%arg0: i32) -> (i32, i32) {
    %c0_i32 = arith.constant 0 : i32
    %c0_i32_0 = arith.constant 0 : i32
    return %arg0, %c0_i32 : i32, i32
  }
}

module attributes {stable_mosaic.version = 11 : i64} {
  func.func @_fused_matmul_kernel(%arg0: i32, %arg1: memref<384x64xbf16, #tpu.memory_space<vmem>>, %arg2: memref<64x128xbf16, #tpu.memory_space<vmem>>, %arg3: memref<1x128xf32, #tpu.memory_space<vmem>>, %arg4: memref<384x128xbf16, #tpu.memory_space<vmem>>) attributes {dimension_semantics = [#tpu.dimension_semantics<parallel>], iteration_bounds = array<i64: 5>, scalar_prefetch = 0 : i64, scratch_operands = 0 : i64, tpu.core_type = #tpu.core_type<tc>, window_params = [{transform_indices = @transform_0, window_bounds = array<i64: 384, 64>}, {pipeline_mode = #tpu.pipeline_mode<synchronous>, transform_indices = @transform_1, window_bounds = array<i64: 64, 128>}, {pipeline_mode = #tpu.pipeline_mode<synchronous>, transform_indices = @transform_2, window_bounds = array<i64: 1, 128>}, {transform_indices = @transform_3, window_bounds = array<i64: 384, 128>}]} {
    %c0 = arith.constant 0 : index
    %c0_0 = arith.constant 0 : index
    %0 = vector.load %arg1[%c0, %c0_0] : memref<384x64xbf16, #tpu.memory_space<vmem>>, vector<384x64xbf16>
    %c0_1 = arith.constant 0 : index
    %c0_2 = arith.constant 0 : index
    %1 = vector.load %arg2[%c0_1, %c0_2] : memref<64x128xbf16, #tpu.memory_space<vmem>>, vector<64x128xbf16>
    %cst = arith.constant dense<0.000000e+00> : vector<384x128xf32>
    %2 = tpu.matmul %0, %1, %cst {dimension_numbers = #tpu.dot_dimension_numbers<[1], [0], [0], [1], [0, 0, 1, 1], [], []>} : vector<384x64xbf16>, vector<64x128xbf16>, vector<384x128xf32> -> vector<384x128xf32>
    %c0_3 = arith.constant 0 : index
    %c0_4 = arith.constant 0 : index
    %3 = vector.load %arg3[%c0_3, %c0_4] : memref<1x128xf32, #tpu.memory_space<vmem>>, vector<1x128xf32>
    %4 = vector.broadcast %3 : vector<1x128xf32> to vector<384x128xf32>
    %5 = arith.addf %2, %4 : vector<384x128xf32>
    %cst_5 = arith.constant 0.000000e+00 : f32
    %6 = vector.broadcast %cst_5 : f32 to vector<384x128xf32>
    %7 = arith.cmpf ogt, %5, %6 : vector<384x128xf32>
    %cst_6 = arith.constant 2.000000e-01 : f32
    %8 = vector.broadcast %cst_6 : f32 to vector<384x128xf32>
    %9 = arith.mulf %8, %5 : vector<384x128xf32>
    %10 = arith.select %7, %5, %9 : vector<384x128xi1>, vector<384x128xf32>
    %11 = arith.truncf %10 : vector<384x128xf32> to vector<384x128xbf16>
    %c0_7 = arith.constant 0 : index
    %c0_8 = arith.constant 0 : index
    %12 = vector.load %arg4[%c0_7, %c0_8] : memref<384x128xbf16, #tpu.memory_space<vmem>>, vector<384x128xbf16>
    tpu.vector_store %arg4[%c0_7, %c0_8], %11 {strides = array<i32>} : memref<384x128xbf16, #tpu.memory_space<vmem>>, vector<384x128xbf16>,
    return
  }
  func.func @transform_0(%arg0: i32) -> (i32, i32) {
    %c0_i32 = arith.constant 0 : i32
    %c0_i32_0 = arith.constant 0 : i32
    return %arg0, %c0_i32 : i32, i32
  }
  func.func @transform_1(%arg0: i32) -> (i32, i32) {
    %c0_i32 = arith.constant 0 : i32
    %c0_i32_0 = arith.constant 0 : i32
    %c0_i32_1 = arith.constant 0 : i32
    return %c0_i32, %c0_i32_0 : i32, i32
  }
  func.func @transform_2(%arg0: i32) -> (i32, i32) {
    %c0_i32 = arith.constant 0 : i32
    %c0_i32_0 = arith.constant 0 : i32
    %c0_i32_1 = arith.constant 0 : i32
    return %c0_i32, %c0_i32_0 : i32, i32
  }
  func.func @transform_3(%arg0: i32) -> (i32, i32) {
    %c0_i32 = arith.constant 0 : i32
    %c0_i32_0 = arith.constant 0 : i32
    return %arg0, %c0_i32 : i32, i32
  }
}

module attributes {stable_mosaic.version = 11 : i64} {
  func.func @_fused_matmul_kernel(%arg0: i32, %arg1: memref<384x392xbf16, #tpu.memory_space<vmem>>, %arg2: memref<392x128xbf16, #tpu.memory_space<vmem>>, %arg3: memref<1x128xf32, #tpu.memory_space<vmem>>, %arg4: memref<384x128xf32, #tpu.memory_space<vmem>>) attributes {dimension_semantics = [#tpu.dimension_semantics<parallel>], iteration_bounds = array<i64: 19>, scalar_prefetch = 0 : i64, scratch_operands = 0 : i64, tpu.core_type = #tpu.core_type<tc>, window_params = [{transform_indices = @transform_0, window_bounds = array<i64: 384, 392>}, {pipeline_mode = #tpu.pipeline_mode<synchronous>, transform_indices = @transform_1, window_bounds = array<i64: 392, 128>}, {pipeline_mode = #tpu.pipeline_mode<synchronous>, transform_indices = @transform_2, window_bounds = array<i64: 1, 128>}, {transform_indices = @transform_3, window_bounds = array<i64: 384, 128>}]} {
    %c0 = arith.constant 0 : index
    %c0_0 = arith.constant 0 : index
    %0 = vector.load %arg1[%c0, %c0_0] : memref<384x392xbf16, #tpu.memory_space<vmem>>, vector<384x392xbf16>
    %c0_1 = arith.constant 0 : index
    %c0_2 = arith.constant 0 : index
    %1 = vector.load %arg2[%c0_1, %c0_2] : memref<392x128xbf16, #tpu.memory_space<vmem>>, vector<392x128xbf16>
    %cst = arith.constant dense<0.000000e+00> : vector<384x128xf32>
    %2 = tpu.matmul %0, %1, %cst {dimension_numbers = #tpu.dot_dimension_numbers<[1], [0], [0], [1], [0, 0, 1, 1], [], []>} : vector<384x392xbf16>, vector<392x128xbf16>, vector<384x128xf32> -> vector<384x128xf32>
    %c0_3 = arith.constant 0 : index
    %c0_4 = arith.constant 0 : index
    %3 = vector.load %arg3[%c0_3, %c0_4] : memref<1x128xf32, #tpu.memory_space<vmem>>, vector<1x128xf32>
    %4 = vector.broadcast %3 : vector<1x128xf32> to vector<384x128xf32>
    %5 = arith.addf %2, %4 : vector<384x128xf32>
    %6 = math.tanh %5 : vector<384x128xf32>
    %c0_5 = arith.constant 0 : index
    %c0_6 = arith.constant 0 : index
    %7 = vector.load %arg4[%c0_5, %c0_6] : memref<384x128xf32, #tpu.memory_space<vmem>>, vector<384x128xf32>
    tpu.vector_store %arg4[%c0_5, %c0_6], %6 {strides = array<i32>} : memref<384x128xf32, #tpu.memory_space<vmem>>, vector<384x128xf32>,
    return
  }
  func.func @transform_0(%arg0: i32) -> (i32, i32) {
    %c0_i32 = arith.constant 0 : i32
    %c0_i32_0 = arith.constant 0 : i32
    return %arg0, %c0_i32 : i32, i32
  }
  func.func @transform_1(%arg0: i32) -> (i32, i32) {
    %c0_i32 = arith.constant 0 : i32
    %c0_i32_0 = arith.constant 0 : i32
    %c0_i32_1 = arith.constant 0 : i32
    return %c0_i32, %c0_i32_0 : i32, i32
  }
  func.func @transform_2(%arg0: i32) -> (i32, i32) {
    %c0_i32 = arith.constant 0 : i32
    %c0_i32_0 = arith.constant 0 : i32
    %c0_i32_1 = arith.constant 0 : i32
    return %c0_i32, %c0_i32_0 : i32, i32
  }
  func.func @transform_3(%arg0: i32) -> (i32, i32) {
    %c0_i32 = arith.constant 0 : i32
    %c0_i32_0 = arith.constant 0 : i32
    return %arg0, %c0_i32 : i32, i32
  }
}

</mosaic_0001>

<llo_original>
// kernel: mul.13
$region0: #{mul.13}
  %s0 = inlined_call_operand.vmem [shape: f32[4,32], index: 0, kind: input, shape index: {}]
  %s1 = inlined_call_operand.vmem [shape: f32[128], index: 1, kind: output, shape index: {}]
  $region1: #{mul.13} parent=0
    #allocation0 [shape = 'u8[4096]{0}', space=vmem, size = 0x1000, scoped, tag = 'scoped mem for output reshape']
    #allocation1 [shape = 'u8[4096]{0}', space=vmem, size = 0x1000, scoped, tag = 'scoped mem for input reshape']
    %s3 = sshllo.u32 0, 4
    %v4 = vld [vmem:[%s0] sm:%s3]
    %5 = vst [vmem:[#allocation1] sm:%s3] %v4
    %v6 = vld [vmem:[#allocation1] sm:$0x1]
    %vm7 = vcmask 261120
    %8 = vst.msk [vmem:[#allocation0] sm:$0x1] %vm7, %v6
    %s9 = scalar_lea.vmem [#allocation1], 3
    %v10 = vld [vmem:[%s9] sm:$0x1]
    %11 = vrot.lane.b32.xlu0 %v10, 96
    %v12 = vpop.permute.xlu0 %11
    %vm13 = vcmask 1048320
    %14 = vst.msk [vmem:[#allocation0] sm:$0x1] %vm13, %v12
    %s15 = scalar_lea.vmem [#allocation1], 2
    %v16 = vld [vmem:[%s15] sm:$0x1]
    %17 = vrot.lane.b32.xlu0 %v16, 64
    %v18 = vpop.permute.xlu0 %17
    %vm19 = vcmask 785920
    %20 = vst.msk [vmem:[#allocation0] sm:$0x1] %vm19, %v18
    %s21 = scalar_lea.vmem [#allocation1], 1
    %v22 = vld [vmem:[%s21] sm:$0x1]
    %23 = vrot.lane.b32.xlu0 %v22, 32
    %v24 = vpop.permute.xlu0 %23
    %vm25 = vcmask 523520
    %26 = vst.msk [vmem:[#allocation0] sm:$0x1] %vm25, %v24
    %s28 = sshllo.u32 0, 1
    %v30 = vld [vmem:[#allocation0] sm:%s28]
    %s31 = sshllo.u32 0, 1
    %32 = vst [vmem:[%s1] sm:%s31] %v30

// kernel: tile.31
$region0: #{tile.31}
  %s0 = inlined_call_operand.vmem [shape: f32[4,32], index: 0, kind: input, shape index: {}]
  %s1 = inlined_call_operand.vmem [shape: f32[1,128], index: 1, kind: output, shape index: {}]
  $region1: #{tile.31} parent=0
    #allocation0 [shape = 'u8[4096]{0}', space=vmem, size = 0x1000, scoped, tag = 'scoped mem for output reshape']
    #allocation1 [shape = 'u8[4096]{0}', space=vmem, size = 0x1000, scoped, tag = 'scoped mem for input reshape']
    %s3 = sshllo.u32 0, 4
    %v4 = vld [vmem:[%s0] sm:%s3]
    %5 = vst [vmem:[#allocation1] sm:%s3] %v4
    %v6 = vld [vmem:[#allocation1] sm:$0x1]
    %vm7 = vcmask 261120
    %8 = vst.msk [vmem:[#allocation0] sm:$0x1] %vm7, %v6
    %s9 = scalar_lea.vmem [#allocation1], 3
    %v10 = vld [vmem:[%s9] sm:$0x1]
    %11 = vrot.lane.b32.xlu0 %v10, 96
    %v12 = vpop.permute.xlu0 %11
    %vm13 = vcmask 1048320
    %14 = vst.msk [vmem:[#allocation0] sm:$0x1] %vm13, %v12
    %s15 = scalar_lea.vmem [#allocation1], 2
    %v16 = vld [vmem:[%s15] sm:$0x1]
    %17 = vrot.lane.b32.xlu0 %v16, 64
    %v18 = vpop.permute.xlu0 %17
    %vm19 = vcmask 785920
    %20 = vst.msk [vmem:[#allocation0] sm:$0x1] %vm19, %v18
    %s21 = scalar_lea.vmem [#allocation1], 1
    %v22 = vld [vmem:[%s21] sm:$0x1]
    %23 = vrot.lane.b32.xlu0 %v22, 32
    %v24 = vpop.permute.xlu0 %23
    %vm25 = vcmask 523520
    %26 = vst.msk [vmem:[#allocation0] sm:$0x1] %vm25, %v24
    %s28 = sshllo.u32 0, 1
    %v30 = vld [vmem:[#allocation0] sm:%s28]
    %s31 = sshllo.u32 0, 1
    %32 = vst [vmem:[%s1] sm:%s31] %v30

// kernel: tile.34
$region0: #{tile.34}
  #allocation2 [shape = 's32[1]{0}', space=sflag, size = 0x4, scoped, tag = 'scoped memory for tile.34']
  %s0 = inlined_call_operand.hbm [shape: f32[16], index: 0, kind: input, shape index: {}]
  %s1 = inlined_call_operand.vmem [shape: f32[4,16], index: 1, kind: output, shape index: {}]
  $region1: #{tile.34} parent=0
    #allocation0 [shape = 'u8[512]{0}', space=vmem, size = 0x400, scoped, tag = 'operand span for operand 0']
    #allocation1 [shape = 's32[1]{0}', space=sflag, size = 0x4, scoped, tag = 'scoped memory for tile.34']
    %2 = vsyncpa [#allocation1], 0
    // Predicated region
    $region2: #{tile.34} parent=1 // pred_check
      _
    $region3: #{tile.34} parent=1 // pred_check_branch
      %4 = sbr.rel (0) target = $region5
    $region4: #{tile.34} parent=1 // pred_region
      %s6 = ssub.s32 16, 16
      %7 = vsyncadd [#allocation1], %s6
      %s9 = sshll.u32 [#allocation0], 4
      %s10 = int_to_ptr.vmem [resolvable:$true] %s9
      %12 = dma.hbm_to_vmem [thread:$0]  %s0, 16, %s10, [#allocation1]
    $region5: #{tile.34} parent=1 // pred_fallthru
      _
    // Predicated region
    $region6: #{tile.34} parent=1 // pred_check
      _
    $region7: #{tile.34} parent=1 // pred_check_branch
      %14 = sbr.rel (0) target = $region9
    $region8: #{tile.34} parent=1 // pred_region
      %15 = dma.done [#allocation1], 16
    $region9: #{tile.34} parent=1 // pred_fallthru
      _
    %v16 = vld [vmem:[#allocation0] ss:$0 sm:$0xff]
    %17 = vst [vmem:[%s1] sm:$0xf] %v16
    %18 = vsyncpa [#allocation1], 1

// kernel: tile.26
$region0: #{tile.26}
  #allocation2 [shape = 's32[1]{0}', space=sflag, size = 0x4, scoped, tag = 'scoped memory for tile.26']
  %s0 = inlined_call_operand.hbm [shape: f32[32], index: 0, kind: input, shape index: {}]
  %s1 = inlined_call_operand.vmem [shape: f32[4,32], index: 1, kind: output, shape index: {}]
  $region1: #{tile.26} parent=0
    #allocation0 [shape = 'u8[512]{0}', space=vmem, size = 0x400, scoped, tag = 'operand span for operand 0']
    #allocation1 [shape = 's32[1]{0}', space=sflag, size = 0x4, scoped, tag = 'scoped memory for tile.26']
    %2 = vsyncpa [#allocation1], 0
    // Predicated region
    $region2: #{tile.26} parent=1 // pred_check
      _
    $region3: #{tile.26} parent=1 // pred_check_branch
      %4 = sbr.rel (0) target = $region5
    $region4: #{tile.26} parent=1 // pred_region
      %s6 = ssub.s32 16, 16
      %7 = vsyncadd [#allocation1], %s6
      %s9 = sshll.u32 [#allocation0], 4
      %s10 = int_to_ptr.vmem [resolvable:$true] %s9
      %12 = dma.hbm_to_vmem [thread:$0]  %s0, 16, %s10, [#allocation1]
    $region5: #{tile.26} parent=1 // pred_fallthru
      _
    // Predicated region
    $region6: #{tile.26} parent=1 // pred_check
      _
    $region7: #{tile.26} parent=1 // pred_check_branch
      %14 = sbr.rel (0) target = $region9
    $region8: #{tile.26} parent=1 // pred_region
      %15 = dma.done [#allocation1], 16
    $region9: #{tile.26} parent=1 // pred_fallthru
      _
    %v16 = vld [vmem:[#allocation0] ss:$0 sm:$0xff]
    %17 = vst [vmem:[%s1] sm:$0xf] %v16
    %18 = vsyncpa [#allocation1], 1

// kernel: mul.21
$region0: #{mul.21}
  %s0 = inlined_call_operand.vmem [shape: f32[4,8], index: 0, kind: input, shape index: {}]
  %s1 = inlined_call_operand.vmem [shape: f32[32], index: 1, kind: output, shape index: {}]
  $region1: #{mul.21} parent=0
    #allocation0 [shape = 'u8[4096]{0}', space=vmem, size = 0x1000, scoped, tag = 'scoped mem for output reshape']
    #allocation1 [shape = 'u8[4096]{0}', space=vmem, size = 0x1000, scoped, tag = 'scoped mem for input reshape']
    %s3 = sshllo.u32 0, 4
    %v4 = vld [vmem:[%s0] sm:%s3]
    %5 = vst [vmem:[#allocation1] sm:%s3] %v4
    %v6 = vld [vmem:[#allocation1] sm:$0x1]
    %vm7 = vcmask 64512
    %8 = vst.msk [vmem:[#allocation0] sm:$0x1] %vm7, %v6
    %s9 = scalar_lea.vmem [#allocation1], 3
    %v10 = vld [vmem:[%s9] sm:$0x1]
    %11 = vrot.lane.b32.xlu0 %v10, 24
    %v12 = vpop.permute.xlu0 %11
    %vm13 = vcmask 261312
    %14 = vst.msk [vmem:[#allocation0] sm:$0x1] %vm13, %v12
    %s15 = scalar_lea.vmem [#allocation1], 2
    %v16 = vld [vmem:[%s15] sm:$0x1]
    %17 = vrot.lane.b32.xlu0 %v16, 16
    %v18 = vpop.permute.xlu0 %17
    %vm19 = vcmask 195712
    %20 = vst.msk [vmem:[#allocation0] sm:$0x1] %vm19, %v18
    %s21 = scalar_lea.vmem [#allocation1], 1
    %v22 = vld [vmem:[%s21] sm:$0x1]
    %23 = vrot.lane.b32.xlu0 %v22, 8
    %v24 = vpop.permute.xlu0 %23
    %vm25 = vcmask 130112
    %26 = vst.msk [vmem:[#allocation0] sm:$0x1] %vm25, %v24
    %s28 = sshllo.u32 0, 1
    %v30 = vld [vmem:[#allocation0] sm:%s28]
    %s31 = sshllo.u32 0, 1
    %32 = vst [vmem:[%s1] sm:%s31] %v30

// kernel: tile.42
$region0: #{tile.42}
  #allocation2 [shape = 's32[1]{0}', space=sflag, size = 0x4, scoped, tag = 'scoped memory for tile.42']
  %s0 = inlined_call_operand.hbm [shape: f32[8], index: 0, kind: input, shape index: {}]
  %s1 = inlined_call_operand.vmem [shape: f32[4,8], index: 1, kind: output, shape index: {}]
  $region1: #{tile.42} parent=0
    #allocation0 [shape = 'u8[512]{0}', space=vmem, size = 0x400, scoped, tag = 'operand span for operand 0']
    #allocation1 [shape = 's32[1]{0}', space=sflag, size = 0x4, scoped, tag = 'scoped memory for tile.42']
    %2 = vsyncpa [#allocation1], 0
    // Predicated region
    $region2: #{tile.42} parent=1 // pred_check
      _
    $region3: #{tile.42} parent=1 // pred_check_branch
      %4 = sbr.rel (0) target = $region5
    $region4: #{tile.42} parent=1 // pred_region
      %s6 = ssub.s32 16, 16
      %7 = vsyncadd [#allocation1], %s6
      %s9 = sshll.u32 [#allocation0], 4
      %s10 = int_to_ptr.vmem [resolvable:$true] %s9
      %12 = dma.hbm_to_vmem [thread:$0]  %s0, 16, %s10, [#allocation1]
    $region5: #{tile.42} parent=1 // pred_fallthru
      _
    // Predicated region
    $region6: #{tile.42} parent=1 // pred_check
      _
    $region7: #{tile.42} parent=1 // pred_check_branch
      %14 = sbr.rel (0) target = $region9
    $region8: #{tile.42} parent=1 // pred_region
      %15 = dma.done [#allocation1], 16
    $region9: #{tile.42} parent=1 // pred_fallthru
      _
    %v16 = vld [vmem:[#allocation0] ss:$0 sm:$0xff]
    %17 = vst [vmem:[%s1] sm:$0xf] %v16
    %18 = vsyncpa [#allocation1], 1

// kernel: mul.17
$region0: #{mul.17}
  %s0 = inlined_call_operand.vmem [shape: f32[4,16], index: 0, kind: input, shape index: {}]
  %s1 = inlined_call_operand.vmem [shape: f32[64], index: 1, kind: output, shape index: {}]
  $region1: #{mul.17} parent=0
    #allocation0 [shape = 'u8[4096]{0}', space=vmem, size = 0x1000, scoped, tag = 'scoped mem for output reshape']
    #allocation1 [shape = 'u8[4096]{0}', space=vmem, size = 0x1000, scoped, tag = 'scoped mem for input reshape']
    %s3 = sshllo.u32 0, 4
    %v4 = vld [vmem:[%s0] sm:%s3]
    %5 = vst [vmem:[#allocation1] sm:%s3] %v4
    %v6 = vld [vmem:[#allocation1] sm:$0x1]
    %vm7 = vcmask 130048
    %8 = vst.msk [vmem:[#allocation0] sm:$0x1] %vm7, %v6
    %s9 = scalar_lea.vmem [#allocation1], 3
    %v10 = vld [vmem:[%s9] sm:$0x1]
    %11 = vrot.lane.b32.xlu0 %v10, 48
    %v12 = vpop.permute.xlu0 %11
    %vm13 = vcmask 523648
    %14 = vst.msk [vmem:[#allocation0] sm:$0x1] %vm13, %v12
    %s15 = scalar_lea.vmem [#allocation1], 2
    %v16 = vld [vmem:[%s15] sm:$0x1]
    %17 = vrot.lane.b32.xlu0 %v16, 32
    %v18 = vpop.permute.xlu0 %17
    %vm19 = vcmask 392448
    %20 = vst.msk [vmem:[#allocation0] sm:$0x1] %vm19, %v18
    %s21 = scalar_lea.vmem [#allocation1], 1
    %v22 = vld [vmem:[%s21] sm:$0x1]
    %23 = vrot.lane.b32.xlu0 %v22, 16
    %v24 = vpop.permute.xlu0 %23
    %vm25 = vcmask 261248
    %26 = vst.msk [vmem:[#allocation0] sm:$0x1] %vm25, %v24
    %s28 = sshllo.u32 0, 1
    %v30 = vld [vmem:[#allocation0] sm:%s28]
    %s31 = sshllo.u32 0, 1
    %32 = vst [vmem:[%s1] sm:%s31] %v30

// kernel: _lambda_.4
$region0: #{_lambda_.4}
  #allocation0 [shape = 'u32[]', space=smem, size = 0x4, offset = 0x4, fixed_abs, tag = 'smem constant byte address 0x4 - core index']
  #allocation1 [shape = 'u32[144,128]{1,0:T(1,128)}', space=vmem, size = 0x12000, scoped, tag = 'internal scratch']
  %s0 = inlined_call_operand.vmem [shape: bf16[128,256], index: 0, kind: input, shape index: {}]
  %s1 = inlined_call_operand.vmem [shape: bf16[256,128], index: 1, kind: input, shape index: {}]
  %s2 = inlined_call_operand.vmem [shape: f32[1,128], index: 2, kind: input, shape index: {}]
  %s3 = inlined_call_operand.vmem [shape: bf16[128,128], index: 3, kind: output, shape index: {}]
  %s4 = sld [smem:[#allocation0]]
  $region22: #{_lambda_.4} parent=0
    _
  %s6 = ssub.s32 1, %s4
  %s7 = scalar_select 0, %s6, %s4
  // Predicated region
  $region2: #{_lambda_.4} parent=0 // pred_check
    _
  $region3: #{_lambda_.4} parent=0 // pred_check_branch
    %9 = sbr.rel (0) target = $region5
  $region4: #{_lambda_.4} parent=0 // pred_region
    _
  $region5: #{_lambda_.4} parent=0 // pred_fallthru
    _
  // Predicated region
  $region6: #{_lambda_.4} parent=0 // pred_check
    _
  $region7: #{_lambda_.4} parent=0 // pred_check_branch
    %11 = sbr.rel (0) target = $region9
  $region8: #{_lambda_.4} parent=0 // pred_region
    _
  $region9: #{_lambda_.4} parent=0 // pred_fallthru
    _
  // Predicated region
  $region10: #{_lambda_.4} parent=0 // pred_check
    _
  $region11: #{_lambda_.4} parent=0 // pred_check_branch
    %13 = sbr.rel (0) target = $region13
  $region12: #{_lambda_.4} parent=0 // pred_region
    _
  $region13: #{_lambda_.4} parent=0 // pred_fallthru
    _
  %v15 = vld [vmem:[%s0] sm:$0xff]
  %v16 = vld [vmem:[%s0 + $0x8] sm:$0xff]
  %v17 = vld [vmem:[%s0 + $0x10] sm:$0xff]
  %v18 = vld [vmem:[%s0 + $0x18] sm:$0xff]
  %v19 = vld [vmem:[%s0 + $0x20] sm:$0xff]
  %v20 = vld [vmem:[%s0 + $0x28] sm:$0xff]
  %v21 = vld [vmem:[%s0 + $0x30] sm:$0xff]
  %v22 = vld [vmem:[%s0 + $0x38] sm:$0xff]
  %v23 = vld [vmem:[%s0 + $0x40] sm:$0xff]
  %v24 = vld [vmem:[%s0 + $0x48] sm:$0xff]
  %v25 = vld [vmem:[%s0 + $0x50] sm:$0xff]
  %v26 = vld [vmem:[%s0 + $0x58] sm:$0xff]
  %v27 = vld [vmem:[%s0 + $0x60] sm:$0xff]
  %v28 = vld [vmem:[%s0 + $0x68] sm:$0xff]
  %v29 = vld [vmem:[%s0 + $0x70] sm:$0xff]
  %v30 = vld [vmem:[%s0 + $0x78] sm:$0xff]
  %v31 = vld [vmem:[%s1] sm:$0xf]
  %v32 = vld [vmem:[%s1 + $0x4] sm:$0xf]
  %v33 = vld [vmem:[%s1 + $0x8] sm:$0xf]
  %v34 = vld [vmem:[%s1 + $0xc] sm:$0xf]
  %v35 = vld [vmem:[%s1 + $0x10] sm:$0xf]
  %v36 = vld [vmem:[%s1 + $0x14] sm:$0xf]
  %v37 = vld [vmem:[%s1 + $0x18] sm:$0xf]
  %v38 = vld [vmem:[%s1 + $0x1c] sm:$0xf]
  %v39 = vld [vmem:[%s1 + $0x20] sm:$0xf]
  %v40 = vld [vmem:[%s1 + $0x24] sm:$0xf]
  %v41 = vld [vmem:[%s1 + $0x28] sm:$0xf]
  %v42 = vld [vmem:[%s1 + $0x2c] sm:$0xf]
  %v43 = vld [vmem:[%s1 + $0x30] sm:$0xf]
  %v44 = vld [vmem:[%s1 + $0x34] sm:$0xf]
  %v45 = vld [vmem:[%s1 + $0x38] sm:$0xf]
  %v46 = vld [vmem:[%s1 + $0x3c] sm:$0xf]
  %v47 = vld [vmem:[%s1 + $0x40] sm:$0xf]
  %v48 = vld [vmem:[%s1 + $0x44] sm:$0xf]
  %v49 = vld [vmem:[%s1 + $0x48] sm:$0xf]
  %v50 = vld [vmem:[%s1 + $0x4c] sm:$0xf]
  %v51 = vld [vmem:[%s1 + $0x50] sm:$0xf]
  %v52 = vld [vmem:[%s1 + $0x54] sm:$0xf]
  %v53 = vld [vmem:[%s1 + $0x58] sm:$0xf]
  %v54 = vld [vmem:[%s1 + $0x5c] sm:$0xf]
  %v55 = vld [vmem:[%s1 + $0x60] sm:$0xf]
  %v56 = vld [vmem:[%s1 + $0x64] sm:$0xf]
  %v57 = vld [vmem:[%s1 + $0x68] sm:$0xf]
  %v58 = vld [vmem:[%s1 + $0x6c] sm:$0xf]
  %v59 = vld [vmem:[%s1 + $0x70] sm:$0xf]
  %v60 = vld [vmem:[%s1 + $0x74] sm:$0xf]
  %v61 = vld [vmem:[%s1 + $0x78] sm:$0xf]
  %v62 = vld [vmem:[%s1 + $0x7c] sm:$0xf]
  %v63 = vld [vmem:[%s2] sm:$0x1]
  %v65 = vlaneseq
  %v66 = vshrl.u32 %v65, 7
  %v67 = vsub.s32 0, %v66
  %v68 = vrot.slane %v63, %v67
  %v86 = vunpack.c.l.b16 %v15
  %v87 = vunpack.c.h.b16 %v15
  %v88 = vunpack.c.l.b16 %v16
  %v89 = vunpack.c.h.b16 %v16
  %v90 = vunpack.c.l.b16 %v17
  %v91 = vunpack.c.h.b16 %v17
  %v92 = vunpack.c.l.b16 %v18
  %v93 = vunpack.c.h.b16 %v18
  %v94 = vunpack.c.l.b16 %v19
  %v95 = vunpack.c.h.b16 %v19
  %v96 = vunpack.c.l.b16 %v20
  %v97 = vunpack.c.h.b16 %v20
  %v98 = vunpack.c.l.b16 %v21
  %v99 = vunpack.c.h.b16 %v21
  %v100 = vunpack.c.l.b16 %v22
  %v101 = vunpack.c.h.b16 %v22
  %v102 = vunpack.c.l.b16 %v23
  %v103 = vunpack.c.h.b16 %v23
  %v104 = vunpack.c.l.b16 %v24
  %v105 = vunpack.c.h.b16 %v24
  %v106 = vunpack.c.l.b16 %v25
  %v107 = vunpack.c.h.b16 %v25
  %v108 = vunpack.c.l.b16 %v26
  %v109 = vunpack.c.h.b16 %v26
  %v110 = vunpack.c.l.b16 %v27
  %v111 = vunpack.c.h.b16 %v27
  %v112 = vunpack.c.l.b16 %v28
  %v113 = vunpack.c.h.b16 %v28
  %v114 = vunpack.c.l.b16 %v29
  %v115 = vunpack.c.h.b16 %v29
  %v116 = vunpack.c.l.b16 %v30
  %v117 = vunpack.c.h.b16 %v30
  %v118 = vpack.c.b16 %v88, %v86
  %v119 = vpack.c.b16 %v89, %v87
  %v120 = vpack.c.b16 %v92, %v90
  %v121 = vpack.c.b16 %v93, %v91
  %v122 = vpack.c.b16 %v96, %v94
  %v123 = vpack.c.b16 %v97, %v95
  %v124 = vpack.c.b16 %v100, %v98
  %v125 = vpack.c.b16 %v101, %v99
  %v126 = vpack.c.b16 %v104, %v102
  %v127 = vpack.c.b16 %v105, %v103
  %v128 = vpack.c.b16 %v108, %v106
  %v129 = vpack.c.b16 %v109, %v107
  %v130 = vpack.c.b16 %v112, %v110
  %v131 = vpack.c.b16 %v113, %v111
  %v132 = vpack.c.b16 %v116, %v114
  %v133 = vpack.c.b16 %v117, %v115
  %v182 = vunpack.c.l.b16 %v31
  %v183 = vunpack.c.l.b16 %v32
  %v184 = vunpack.c.l.b16 %v33
  %v185 = vunpack.c.l.b16 %v34
  %v186 = vunpack.c.l.b16 %v35
  %v187 = vunpack.c.l.b16 %v36
  %v188 = vunpack.c.l.b16 %v37
  %v189 = vunpack.c.l.b16 %v38
  %v190 = vunpack.c.l.b16 %v39
  %v191 = vunpack.c.l.b16 %v40
  %v192 = vunpack.c.l.b16 %v41
  %v193 = vunpack.c.l.b16 %v42
  %v194 = vunpack.c.l.b16 %v43
  %v195 = vunpack.c.l.b16 %v44
  %v196 = vunpack.c.l.b16 %v45
  %v197 = vunpack.c.l.b16 %v46
  %v198 = vunpack.c.l.b16 %v47
  %v199 = vunpack.c.l.b16 %v48
  %v200 = vunpack.c.l.b16 %v49
  %v201 = vunpack.c.l.b16 %v50
  %v202 = vunpack.c.l.b16 %v51
  %v203 = vunpack.c.l.b16 %v52
  %v204 = vunpack.c.l.b16 %v53
  %v205 = vunpack.c.l.b16 %v54
  %v206 = vunpack.c.l.b16 %v55
  %v207 = vunpack.c.l.b16 %v56
  %v208 = vunpack.c.l.b16 %v57
  %v209 = vunpack.c.l.b16 %v58
  %v210 = vunpack.c.l.b16 %v59
  %v211 = vunpack.c.l.b16 %v60
  %v212 = vunpack.c.l.b16 %v61
  %v213 = vunpack.c.l.b16 %v62
  %v214 = vpack.c.b16 %v183, %v182
  %v215 = vpack.c.b16 %v185, %v184
  %v216 = vpack.c.b16 %v187, %v186
  %v217 = vpack.c.b16 %v189, %v188
  %v218 = vpack.c.b16 %v191, %v190
  %v219 = vpack.c.b16 %v193, %v192
  %v220 = vpack.c.b16 %v195, %v194
  %v221 = vpack.c.b16 %v197, %v196
  %v222 = vpack.c.b16 %v199, %v198
  %v223 = vpack.c.b16 %v201, %v200
  %v224 = vpack.c.b16 %v203, %v202
  %v225 = vpack.c.b16 %v205, %v204
  %v226 = vpack.c.b16 %v207, %v206
  %v227 = vpack.c.b16 %v209, %v208
  %v228 = vpack.c.b16 %v211, %v210
  %v229 = vpack.c.b16 %v213, %v212
  %246 = vmatprep.subr.bf16.mxu0 0
  %247 = vmatpush1.bf16.msra.mxu0 %v214
  %248 = vmatprep.subr.bf16.mxu0 0
  %249 = vmatpush1.bf16.msra.mxu0 %v215
  %250 = vmatprep.subr.bf16.mxu0 0
  %251 = vmatpush1.bf16.msra.mxu0 %v216
  %252 = vmatprep.subr.bf16.mxu0 0
  %253 = vmatpush1.bf16.msra.mxu0 %v217
  %254 = vmatprep.subr.bf16.mxu0 0
  %255 = vmatpush1.bf16.msra.mxu0 %v218
  %256 = vmatprep.subr.bf16.mxu0 0
  %257 = vmatpush1.bf16.msra.mxu0 %v219
  %258 = vmatprep.subr.bf16.mxu0 0
  %259 = vmatpush1.bf16.msra.mxu0 %v220
  %260 = vmatprep.subr.bf16.mxu0 0
  %261 = vmatpush1.bf16.msra.mxu0 %v221
  %262 = vmatprep.subr.bf16.mxu0 0
  %263 = vmatpush1.bf16.msra.mxu0 %v222
  %264 = vmatprep.subr.bf16.mxu0 0
  %265 = vmatpush1.bf16.msra.mxu0 %v223
  %266 = vmatprep.subr.bf16.mxu0 0
  %267 = vmatpush1.bf16.msra.mxu0 %v224
  %268 = vmatprep.subr.bf16.mxu0 0
  %269 = vmatpush1.bf16.msra.mxu0 %v225
  %270 = vmatprep.subr.bf16.mxu0 0
  %271 = vmatpush1.bf16.msra.mxu0 %v226
  %272 = vmatprep.subr.bf16.mxu0 0
  %273 = vmatpush1.bf16.msra.mxu0 %v227
  %274 = vmatprep.subr.bf16.mxu0 0
  %275 = vmatpush1.bf16.msra.mxu0 %v228
  %276 = vmatprep.subr.bf16.mxu0 0
  %277 = vmatpush1.bf16.msra.mxu0 %v229
  %278 = vmatprep.mubr.bf16.mxu0 %v119
  %279 = vmatmul.mubr.bf16.gmra.mrb[0].mxu0 %v118
  %v280 = vpop.f32.mrb[0].mxu0
  %v281 = vadd.f32 %v68, %v280
  %v282 = vpop.f32.mrb[0].mxu0
  %v283 = vpop.f32.mrb[0].mxu0
  %v284 = vadd.f32 %v68, %v283
  %v285 = vpop.f32.mrb[0].mxu0
  %286 = vmatprep.mubr.bf16.mxu0 %v121
  %287 = vmatmul.mubr.bf16.gmra.mrb[0].mxu0 %v120
  %v288 = vpop.f32.mrb[0].mxu0
  %v289 = vadd.f32 %v68, %v288
  %v290 = vpop.f32.mrb[0].mxu0
  %v291 = vpop.f32.mrb[0].mxu0
  %v292 = vadd.f32 %v68, %v291
  %v293 = vpop.f32.mrb[0].mxu0
  %294 = vmatprep.mubr.bf16.mxu0 %v123
  %295 = vmatmul.mubr.bf16.gmra.mrb[0].mxu0 %v122
  %v296 = vpop.f32.mrb[0].mxu0
  %v297 = vadd.f32 %v68, %v296
  %v298 = vpop.f32.mrb[0].mxu0
  %v299 = vpop.f32.mrb[0].mxu0
  %v300 = vadd.f32 %v68, %v299
  %v301 = vpop.f32.mrb[0].mxu0
  %302 = vmatprep.mubr.bf16.mxu0 %v125
  %303 = vmatmul.mubr.bf16.gmra.mrb[0].mxu0 %v124
  %v304 = vpop.f32.mrb[0].mxu0
  %v305 = vadd.f32 %v68, %v304
  %v306 = vpop.f32.mrb[0].mxu0
  %v307 = vpop.f32.mrb[0].mxu0
  %v308 = vadd.f32 %v68, %v307
  %v309 = vpop.f32.mrb[0].mxu0
  %310 = vmatprep.mubr.bf16.mxu0 %v127
  %311 = vmatmul.mubr.bf16.gmra.mrb[0].mxu0 %v126
  %v312 = vpop.f32.mrb[0].mxu0
  %v313 = vadd.f32 %v68, %v312
  %v314 = vpop.f32.mrb[0].mxu0
  %v315 = vpop.f32.mrb[0].mxu0
  %v316 = vadd.f32 %v68, %v315
  %v317 = vpop.f32.mrb[0].mxu0
  %318 = vmatprep.mubr.bf16.mxu0 %v129
  %319 = vmatmul.mubr.bf16.gmra.mrb[0].mxu0 %v128
  %v320 = vpop.f32.mrb[0].mxu0
  %v321 = vadd.f32 %v68, %v320
  %v322 = vpop.f32.mrb[0].mxu0
  %v323 = vpop.f32.mrb[0].mxu0
  %v324 = vadd.f32 %v68, %v323
  %v325 = vpop.f32.mrb[0].mxu0
  %326 = vmatprep.mubr.bf16.mxu0 %v131
  %327 = vmatmul.mubr.bf16.gmra.mrb[0].mxu0 %v130
  %v328 = vpop.f32.mrb[0].mxu0
  %v329 = vadd.f32 %v68, %v328
  %v330 = vpop.f32.mrb[0].mxu0
  %v331 = vpop.f32.mrb[0].mxu0
  %v332 = vadd.f32 %v68, %v331
  %v333 = vpop.f32.mrb[0].mxu0
  %334 = vmatprep.mubr.bf16.mxu0 %v133
  %335 = vmatmul.mubr.bf16.gmra.mrb[0].mxu0 %v132
  %v336 = vpop.f32.mrb[0].mxu0
  %v337 = vadd.f32 %v68, %v336
  %v338 = vpop.f32.mrb[0].mxu0
  %v339 = vpop.f32.mrb[0].mxu0
  %v340 = vadd.f32 %v68, %v339
  %v341 = vpop.f32.mrb[0].mxu0
  %342 = vdwg.mxu0
  %vm343 = vcmp.gt.f32.partialorder %v281, 0.0
  %vm344 = vcmp.gt.f32.partialorder %v284, 0.0
  %vm345 = vcmp.gt.f32.partialorder %v289, 0.0
  %vm346 = vcmp.gt.f32.partialorder %v292, 0.0
  %vm347 = vcmp.gt.f32.partialorder %v297, 0.0
  %vm348 = vcmp.gt.f32.partialorder %v300, 0.0
  %vm349 = vcmp.gt.f32.partialorder %v305, 0.0
  %vm350 = vcmp.gt.f32.partialorder %v308, 0.0
  %vm351 = vcmp.gt.f32.partialorder %v313, 0.0
  %vm352 = vcmp.gt.f32.partialorder %v316, 0.0
  %vm353 = vcmp.gt.f32.partialorder %v321, 0.0
  %vm354 = vcmp.gt.f32.partialorder %v324, 0.0
  %vm355 = vcmp.gt.f32.partialorder %v329, 0.0
  %vm356 = vcmp.gt.f32.partialorder %v332, 0.0
  %vm357 = vcmp.gt.f32.partialorder %v337, 0.0
  %vm358 = vcmp.gt.f32.partialorder %v340, 0.0
  %v359 = vmul.f32 %v281, 0.2
  %v360 = vmul.f32 %v284, 0.2
  %v361 = vmul.f32 %v289, 0.2
  %v362 = vmul.f32 %v292, 0.2
  %v363 = vmul.f32 %v297, 0.2
  %v364 = vmul.f32 %v300, 0.2
  %v365 = vmul.f32 %v305, 0.2
  %v366 = vmul.f32 %v308, 0.2
  %v367 = vmul.f32 %v313, 0.2
  %v368 = vmul.f32 %v316, 0.2
  %v369 = vmul.f32 %v321, 0.2
  %v370 = vmul.f32 %v324, 0.2
  %v371 = vmul.f32 %v329, 0.2
  %v372 = vmul.f32 %v332, 0.2
  %v373 = vmul.f32 %v337, 0.2
  %v374 = vmul.f32 %v340, 0.2
  %v375 = vsel %vm343, %v281, %v359
  %v376 = vsel %vm344, %v284, %v360
  %v377 = vsel %vm345, %v289, %v361
  %v378 = vsel %vm346, %v292, %v362
  %v379 = vsel %vm347, %v297, %v363
  %v380 = vsel %vm348, %v300, %v364
  %v381 = vsel %vm349, %v305, %v365
  %v382 = vsel %vm350, %v308, %v366
  %v383 = vsel %vm351, %v313, %v367
  %v384 = vsel %vm352, %v316, %v368
  %v385 = vsel %vm353, %v321, %v369
  %v386 = vsel %vm354, %v324, %v370
  %v387 = vsel %vm355, %v329, %v371
  %v388 = vsel %vm356, %v332, %v372
  %v389 = vsel %vm357, %v337, %v373
  %v390 = vsel %vm358, %v340, %v374
  %v391 = vpack.c.bf16 %v376, %v375
  %v392 = vpack.c.bf16 %v378, %v377
  %v393 = vpack.c.bf16 %v380, %v379
  %v394 = vpack.c.bf16 %v382, %v381
  %v395 = vpack.c.bf16 %v384, %v383
  %v396 = vpack.c.bf16 %v386, %v385
  %v397 = vpack.c.bf16 %v388, %v387
  %v398 = vpack.c.bf16 %v390, %v389
  %v407 = vunpack.c.l.b16 %v391
  %v408 = vunpack.c.h.b16 %v391
  %v409 = vunpack.c.l.b16 %v392
  %v410 = vunpack.c.h.b16 %v392
  %v411 = vunpack.c.l.b16 %v393
  %v412 = vunpack.c.h.b16 %v393
  %v413 = vunpack.c.l.b16 %v394
  %v414 = vunpack.c.h.b16 %v394
  %v415 = vunpack.c.l.b16 %v395
  %v416 = vunpack.c.h.b16 %v395
  %v417 = vunpack.c.l.b16 %v396
  %v418 = vunpack.c.h.b16 %v396
  %v419 = vunpack.c.l.b16 %v397
  %v420 = vunpack.c.h.b16 %v397
  %v421 = vunpack.c.l.b16 %v398
  %v422 = vunpack.c.h.b16 %v398
  %v423 = vpack.c.b16 %v407, %v407
  %v424 = vpack.c.b16 %v408, %v408
  %v425 = vpack.c.b16 %v409, %v409
  %v426 = vpack.c.b16 %v410, %v410
  %v427 = vpack.c.b16 %v411, %v411
  %v428 = vpack.c.b16 %v412, %v412
  %v429 = vpack.c.b16 %v413, %v413
  %v430 = vpack.c.b16 %v414, %v414
  %v431 = vpack.c.b16 %v415, %v415
  %v432 = vpack.c.b16 %v416, %v416
  %v433 = vpack.c.b16 %v417, %v417
  %v434 = vpack.c.b16 %v418, %v418
  %v435 = vpack.c.b16 %v419, %v419
  %v436 = vpack.c.b16 %v420, %v420
  %v437 = vpack.c.b16 %v421, %v421
  %v438 = vpack.c.b16 %v422, %v422
  %455 = vst [vmem:[%s3] sm:$0xf] %v423
  %456 = vst [vmem:[%s3 + $0x4] sm:$0xf] %v424
  %457 = vst [vmem:[%s3 + $0x8] sm:$0xf] %v425
  %458 = vst [vmem:[%s3 + $0xc] sm:$0xf] %v426
  %459 = vst [vmem:[%s3 + $0x10] sm:$0xf] %v427
  %460 = vst [vmem:[%s3 + $0x14] sm:$0xf] %v428
  %461 = vst [vmem:[%s3 + $0x18] sm:$0xf] %v429
  %462 = vst [vmem:[%s3 + $0x1c] sm:$0xf] %v430
  %463 = vst [vmem:[%s3 + $0x20] sm:$0xf] %v431
  %464 = vst [vmem:[%s3 + $0x24] sm:$0xf] %v432
  %465 = vst [vmem:[%s3 + $0x28] sm:$0xf] %v433
  %466 = vst [vmem:[%s3 + $0x2c] sm:$0xf] %v434
  %467 = vst [vmem:[%s3 + $0x30] sm:$0xf] %v435
  %468 = vst [vmem:[%s3 + $0x34] sm:$0xf] %v436
  %469 = vst [vmem:[%s3 + $0x38] sm:$0xf] %v437
  %470 = vst [vmem:[%s3 + $0x3c] sm:$0xf] %v438
  // Predicated region
  $region14: #{_lambda_.4} parent=0 // pred_check
    _
  $region15: #{_lambda_.4} parent=0 // pred_check_branch
    %472 = sbr.rel (0) target = $region17
  $region16: #{_lambda_.4} parent=0 // pred_region
    _
  $region17: #{_lambda_.4} parent=0 // pred_fallthru
    _
  // Predicated region
  $region18: #{_lambda_.4} parent=0 // pred_check
    _
  $region19: #{_lambda_.4} parent=0 // pred_check_branch
    %474 = sbr.rel (0) target = $region21
  $region20: #{_lambda_.4} parent=0 // pred_region
    _
  $region21: #{_lambda_.4} parent=0 // pred_fallthru
    _

// kernel: _lambda_.5
$region0: #{_lambda_.5}
  #allocation0 [shape = 'u32[]', space=smem, size = 0x4, offset = 0x4, fixed_abs, tag = 'smem constant byte address 0x4 - core index']
  #allocation1 [shape = 'u32[144,128]{1,0:T(1,128)}', space=vmem, size = 0x12000, scoped, tag = 'internal scratch']
  %s0 = inlined_call_operand.vmem [shape: bf16[512,128], index: 0, kind: input, shape index: {}]
  %s1 = inlined_call_operand.vmem [shape: bf16[128,128], index: 1, kind: input, shape index: {}]
  %s2 = inlined_call_operand.vmem [shape: f32[1,128], index: 2, kind: input, shape index: {}]
  %s3 = inlined_call_operand.vmem [shape: bf16[512,128], index: 3, kind: output, shape index: {}]
  %s4 = sld [smem:[#allocation0]]
  $region45: #{_lambda_.5} parent=0
    _
  %s6 = ssub.s32 1, %s4
  %s7 = scalar_select 0, %s6, %s4
  loop: start=0, step=1, limit=4
  $region2: #{_lambda_.5} parent=0 // loop_pre_header
    _
  $region3: #{_lambda_.5} parent=0 // loop_header
    %s9 = sphi 0, %s13
    %p10 = scmp.ge.s32.totalorder %s9, 4
    %s19 = sphi 0, %s21
    %s22 = sphi 0, %s19
    %s23 = sphi 0, %s22
    %s39 = sphi 0, %s23
    %s43 = sphi 0, %s43
    %s45 = sphi 0, %s43
    %s46 = sphi 0, %s45
    %s60 = sphi 0, %s46
    %s64 = sphi 0, %s64
    %s66 = sphi 0, %s64
    %s67 = sphi 0, %s66
    %s81 = sphi 0, %s67
    %s87 = sphi 0, %s89
    %s90 = sphi 0, %s87
    %s91 = sphi 0, %s90
    %s107 = sphi 0, %s91
  $region4: #{_lambda_.5} parent=0 // loop_header_branch
    %12 = sbr.rel (%p10) target = $region8
  $region5: #{_lambda_.5} parent=0 // loop_body
    %s14 = ssub.s32 %s9, 1
    %s15 = ssub.s32 %s9, 2
    %s16 = sadd.s32 %s9, 1
    %s17 = ssub.s32 %s9, %s16
    %p18 = scmp.eq.s32.totalorder %s17, 0
    %s20 = sadd.s32 %s19, 1
    %s21 = scalar_select %p18, %s19, %s20
    %p24 = pneg %p18
    %p25 = scmp.eq.s32.totalorder %s9, 1
    %p26 = por %p24, %p25
    %p27 = scmp.ne.s32.totalorder %s19, %s22
    %p28 = scmp.eq.s32.totalorder %s9, 0
    %p29 = por %p27, %p28
    %p30 = scmp.ne.s32.totalorder %s19, %s22
    %p31 = scmp.eq.s32.totalorder %s14, 1
    %p32 = por %p30, %p31
    %p33 = scmp.ne.s32.totalorder %s22, %s23
    %p34 = scmp.eq.s32.totalorder %s14, 0
    %p35 = por %p33, %p34
    %p36 = scmp.ne.s32.totalorder %s22, %s23
    %p37 = scmp.eq.s32.totalorder %s15, 1
    %p38 = por %p36, %p37
    %p40 = scmp.ne.s32.totalorder %s23, %s39
    %p41 = scmp.eq.s32.totalorder %s15, 0
    %p42 = por %p40, %p41
    %s44 = sadd.s32 %s43, 1
    %p47 = scmp.eq.s32.totalorder %s9, 1
    %p48 = scmp.ne.s32.totalorder %s43, %s45
    %p49 = scmp.eq.s32.totalorder %s9, 0
    %p50 = por %p48, %p49
    %p51 = scmp.ne.s32.totalorder %s43, %s45
    %p52 = scmp.eq.s32.totalorder %s14, 1
    %p53 = por %p51, %p52
    %p54 = scmp.ne.s32.totalorder %s45, %s46
    %p55 = scmp.eq.s32.totalorder %s14, 0
    %p56 = por %p54, %p55
    %p57 = scmp.ne.s32.totalorder %s45, %s46
    %p58 = scmp.eq.s32.totalorder %s15, 1
    %p59 = por %p57, %p58
    %p61 = scmp.ne.s32.totalorder %s46, %s60
    %p62 = scmp.eq.s32.totalorder %s15, 0
    %p63 = por %p61, %p62
    %s65 = sadd.s32 %s64, 1
    %p68 = scmp.eq.s32.totalorder %s9, 1
    %p69 = scmp.ne.s32.totalorder %s64, %s66
    %p70 = scmp.eq.s32.totalorder %s9, 0
    %p71 = por %p69, %p70
    %p72 = scmp.ne.s32.totalorder %s64, %s66
    %p73 = scmp.eq.s32.totalorder %s14, 1
    %p74 = por %p72, %p73
    %p75 = scmp.ne.s32.totalorder %s66, %s67
    %p76 = scmp.eq.s32.totalorder %s14, 0
    %p77 = por %p75, %p76
    %p78 = scmp.ne.s32.totalorder %s66, %s67
    %p79 = scmp.eq.s32.totalorder %s15, 1
    %p80 = por %p78, %p79
    %p82 = scmp.ne.s32.totalorder %s67, %s81
    %p83 = scmp.eq.s32.totalorder %s15, 0
    %p84 = por %p82, %p83
    %s85 = ssub.s32 %s9, %s16
    %p86 = scmp.eq.s32.totalorder %s85, 0
    %s88 = sadd.s32 %s87, 1
    %s89 = scalar_select %p86, %s87, %s88
    %p92 = pneg %p86
    %p93 = scmp.eq.s32.totalorder %s9, 1
    %p94 = por %p92, %p93
    %p95 = scmp.ne.s32.totalorder %s87, %s90
    %p96 = scmp.eq.s32.totalorder %s9, 0
    %p97 = por %p95, %p96
    %p98 = scmp.ne.s32.totalorder %s87, %s90
    %p99 = scmp.eq.s32.totalorder %s14, 1
    %p100 = por %p98, %p99
    %p101 = scmp.ne.s32.totalorder %s90, %s91
    %p102 = scmp.eq.s32.totalorder %s14, 0
    %p103 = por %p101, %p102
    %p104 = scmp.ne.s32.totalorder %s90, %s91
    %p105 = scmp.eq.s32.totalorder %s15, 1
    %p106 = por %p104, %p105
    %p108 = scmp.ne.s32.totalorder %s91, %s107
    %p109 = scmp.eq.s32.totalorder %s15, 0
    %p110 = por %p108, %p109
    %p111 = scmp.le.s32.totalorder 1, %s9
    %p112 = scmp.lt.s32.totalorder %s9, 3
    %p113 = pnand %p111, %p112
    %p114 = pneg %p113
    // Predicated region
    $region9: #{_lambda_.5} parent=5 // pred_check
      _
    $region10: #{_lambda_.5} parent=5 // pred_check_branch
      %116 = sbr.rel (%p113) target = $region12
    $region11: #{_lambda_.5} parent=5 // pred_region
      %s117 = ssub.s32 %s9, 1
      // Predicated region
      $region13: #{_lambda_.5} parent=11 // pred_check
        %p118 = pneg %p56
      $region14: #{_lambda_.5} parent=11 // pred_check_branch
        %120 = sbr.rel (%p118) target = $region16
      $region15: #{_lambda_.5} parent=11 // pred_region
        _
      $region16: #{_lambda_.5} parent=11 // pred_fallthru
        _
      // Predicated region
      $region17: #{_lambda_.5} parent=11 // pred_check
        %p121 = pneg %p77
      $region18: #{_lambda_.5} parent=11 // pred_check_branch
        %123 = sbr.rel (%p121) target = $region20
      $region19: #{_lambda_.5} parent=11 // pred_region
        _
      $region20: #{_lambda_.5} parent=11 // pred_fallthru
        _
    $region12: #{_lambda_.5} parent=5 // pred_fallthru
      _
    %p124 = scmp.lt.s32.totalorder %s9, 2
    // Predicated region
    $region21: #{_lambda_.5} parent=5 // pred_check
      %p125 = pneg %p124
    $region22: #{_lambda_.5} parent=5 // pred_check_branch
      %127 = sbr.rel (%p125) target = $region24
    $region23: #{_lambda_.5} parent=5 // pred_region
      // Predicated region
      $region25: #{_lambda_.5} parent=23 // pred_check
        %p128 = pneg %p29
      $region26: #{_lambda_.5} parent=23 // pred_check_branch
        %130 = sbr.rel (%p128) target = $region28
      $region27: #{_lambda_.5} parent=23 // pred_region
        %s131 = smul.u32 32, %s9
        %p132 = scmp.lt.s32.totalorder %s131, 63
        %s133 = scalar_select %p132, %s131, 63
        %s134 = smul.addr %s133, 4
        %s135 = scalar_lea.vmem %s0, %s134
        %s136 = smul.u32 32, %s9
      $region28: #{_lambda_.5} parent=23 // pred_fallthru
        _
    $region24: #{_lambda_.5} parent=5 // pred_fallthru
      _
    %p137 = scmp.le.s32.totalorder 1, %s9
    %p138 = scmp.lt.s32.totalorder %s9, 3
    %p139 = pnand %p137, %p138
    %p140 = pneg %p139
    // Predicated region
    $region29: #{_lambda_.5} parent=5 // pred_check
      _
    $region30: #{_lambda_.5} parent=5 // pred_check_branch
      %142 = sbr.rel (%p139) target = $region32
    $region31: #{_lambda_.5} parent=5 // pred_region
      %s143 = ssub.s32 %s9, 1
      %s144 = smul.u32 32, %s14
      %p145 = scmp.lt.s32.totalorder %s144, 63
      %s146 = scalar_select %p145, %s144, 63
      %s147 = smul.addr %s146, 4
      %s148 = scalar_lea.vmem %s0, %s147
      %p149 = pneg %p35
      %p150 = pneg %p32
      %p151 = pneg %p56
      %p152 = pneg %p53
      %p153 = pneg %p77
      %p154 = pneg %p74
      %p155 = pneg %p103
      %p156 = pneg %p100
      %s157 = smul.u32 32, %s14
      %p158 = scmp.lt.s32.totalorder %s157, 63
      %s159 = scalar_select %p158, %s157, 63
      %s160 = smul.addr %s159, 4
      %s161 = scalar_lea.vmem %s3, %s160
      %s162 = smul.u32 32, %s14
      %p163 = scmp.lt.s32.totalorder %s162, 63
      %s164 = scalar_select %p163, %s162, 63
      %s165 = smul.addr %s164, 4
      %s166 = scalar_lea.vmem %s0, %s165
      %s167 = smul.u32 32, %s14
      %s168 = smul.u32 32, %s14
      %p169 = scmp.lt.s32.totalorder %s168, 63
      %s170 = scalar_select %p169, %s168, 63
      %s171 = smul.addr %s170, 4
      %s172 = scalar_lea.vmem %s3, %s171
      %s173 = smul.u32 32, %s14
      %v175 = vld [vmem:[%s166] sm:$0xf]
      %v176 = vld [vmem:[%s166 + $0x4] sm:$0xf]
      %v177 = vld [vmem:[%s166 + $0x8] sm:$0xf]
      %v178 = vld [vmem:[%s166 + $0xc] sm:$0xf]
      %v179 = vld [vmem:[%s166 + $0x10] sm:$0xf]
      %v180 = vld [vmem:[%s166 + $0x14] sm:$0xf]
      %v181 = vld [vmem:[%s166 + $0x18] sm:$0xf]
      %v182 = vld [vmem:[%s166 + $0x1c] sm:$0xf]
      %v183 = vld [vmem:[%s166 + $0x20] sm:$0xf]
      %v184 = vld [vmem:[%s166 + $0x24] sm:$0xf]
      %v185 = vld [vmem:[%s166 + $0x28] sm:$0xf]
      %v186 = vld [vmem:[%s166 + $0x2c] sm:$0xf]
      %v187 = vld [vmem:[%s166 + $0x30] sm:$0xf]
      %v188 = vld [vmem:[%s166 + $0x34] sm:$0xf]
      %v189 = vld [vmem:[%s166 + $0x38] sm:$0xf]
      %v190 = vld [vmem:[%s166 + $0x3c] sm:$0xf]
      %v191 = vld [vmem:[%s166 + $0x40] sm:$0xf]
      %v192 = vld [vmem:[%s166 + $0x44] sm:$0xf]
      %v193 = vld [vmem:[%s166 + $0x48] sm:$0xf]
      %v194 = vld [vmem:[%s166 + $0x4c] sm:$0xf]
      %v195 = vld [vmem:[%s166 + $0x50] sm:$0xf]
      %v196 = vld [vmem:[%s166 + $0x54] sm:$0xf]
      %v197 = vld [vmem:[%s166 + $0x58] sm:$0xf]
      %v198 = vld [vmem:[%s166 + $0x5c] sm:$0xf]
      %v199 = vld [vmem:[%s166 + $0x60] sm:$0xf]
      %v200 = vld [vmem:[%s166 + $0x64] sm:$0xf]
      %v201 = vld [vmem:[%s166 + $0x68] sm:$0xf]
      %v202 = vld [vmem:[%s166 + $0x6c] sm:$0xf]
      %v203 = vld [vmem:[%s166 + $0x70] sm:$0xf]
      %v204 = vld [vmem:[%s166 + $0x74] sm:$0xf]
      %v205 = vld [vmem:[%s166 + $0x78] sm:$0xf]
      %v206 = vld [vmem:[%s166 + $0x7c] sm:$0xf]
      %v207 = vld [vmem:[%s1] sm:$0xf]
      %v208 = vld [vmem:[%s1 + $0x4] sm:$0xf]
      %v209 = vld [vmem:[%s1 + $0x8] sm:$0xf]
      %v210 = vld [vmem:[%s1 + $0xc] sm:$0xf]
      %v211 = vld [vmem:[%s1 + $0x10] sm:$0xf]
      %v212 = vld [vmem:[%s1 + $0x14] sm:$0xf]
      %v213 = vld [vmem:[%s1 + $0x18] sm:$0xf]
      %v214 = vld [vmem:[%s1 + $0x1c] sm:$0xf]
      %v215 = vld [vmem:[%s1 + $0x20] sm:$0xf]
      %v216 = vld [vmem:[%s1 + $0x24] sm:$0xf]
      %v217 = vld [vmem:[%s1 + $0x28] sm:$0xf]
      %v218 = vld [vmem:[%s1 + $0x2c] sm:$0xf]
      %v219 = vld [vmem:[%s1 + $0x30] sm:$0xf]
      %v220 = vld [vmem:[%s1 + $0x34] sm:$0xf]
      %v221 = vld [vmem:[%s1 + $0x38] sm:$0xf]
      %v222 = vld [vmem:[%s1 + $0x3c] sm:$0xf]
      %v223 = vld [vmem:[%s2] sm:$0x1]
      %v225 = vlaneseq
      %v226 = vshrl.u32 %v225, 7
      %v227 = vsub.s32 0, %v226
      %v228 = vrot.slane %v223, %v227
      %v262 = vunpack.c.l.b16 %v175
      %v263 = vunpack.c.l.b16 %v176
      %v264 = vunpack.c.l.b16 %v177
      %v265 = vunpack.c.l.b16 %v178
      %v266 = vunpack.c.l.b16 %v179
      %v267 = vunpack.c.l.b16 %v180
      %v268 = vunpack.c.l.b16 %v181
      %v269 = vunpack.c.l.b16 %v182
      %v270 = vunpack.c.l.b16 %v183
      %v271 = vunpack.c.l.b16 %v184
      %v272 = vunpack.c.l.b16 %v185
      %v273 = vunpack.c.l.b16 %v186
      %v274 = vunpack.c.l.b16 %v187
      %v275 = vunpack.c.l.b16 %v188
      %v276 = vunpack.c.l.b16 %v189
      %v277 = vunpack.c.l.b16 %v190
      %v278 = vunpack.c.l.b16 %v191
      %v279 = vunpack.c.l.b16 %v192
      %v280 = vunpack.c.l.b16 %v193
      %v281 = vunpack.c.l.b16 %v194
      %v282 = vunpack.c.l.b16 %v195
      %v283 = vunpack.c.l.b16 %v196
      %v284 = vunpack.c.l.b16 %v197
      %v285 = vunpack.c.l.b16 %v198
      %v286 = vunpack.c.l.b16 %v199
      %v287 = vunpack.c.l.b16 %v200
      %v288 = vunpack.c.l.b16 %v201
      %v289 = vunpack.c.l.b16 %v202
      %v290 = vunpack.c.l.b16 %v203
      %v291 = vunpack.c.l.b16 %v204
      %v292 = vunpack.c.l.b16 %v205
      %v293 = vunpack.c.l.b16 %v206
      %v294 = vpack.c.b16 %v263, %v262
      %v295 = vpack.c.b16 %v265, %v264
      %v296 = vpack.c.b16 %v267, %v266
      %v297 = vpack.c.b16 %v269, %v268
      %v298 = vpack.c.b16 %v271, %v270
      %v299 = vpack.c.b16 %v273, %v272
      %v300 = vpack.c.b16 %v275, %v274
      %v301 = vpack.c.b16 %v277, %v276
      %v302 = vpack.c.b16 %v279, %v278
      %v303 = vpack.c.b16 %v281, %v280
      %v304 = vpack.c.b16 %v283, %v282
      %v305 = vpack.c.b16 %v285, %v284
      %v306 = vpack.c.b16 %v287, %v286
      %v307 = vpack.c.b16 %v289, %v288
      %v308 = vpack.c.b16 %v291, %v290
      %v309 = vpack.c.b16 %v293, %v292
      %v342 = vunpack.c.l.b16 %v207
      %v343 = vunpack.c.l.b16 %v208
      %v344 = vunpack.c.l.b16 %v209
      %v345 = vunpack.c.l.b16 %v210
      %v346 = vunpack.c.l.b16 %v211
      %v347 = vunpack.c.l.b16 %v212
      %v348 = vunpack.c.l.b16 %v213
      %v349 = vunpack.c.l.b16 %v214
      %v350 = vunpack.c.l.b16 %v215
      %v351 = vunpack.c.l.b16 %v216
      %v352 = vunpack.c.l.b16 %v217
      %v353 = vunpack.c.l.b16 %v218
      %v354 = vunpack.c.l.b16 %v219
      %v355 = vunpack.c.l.b16 %v220
      %v356 = vunpack.c.l.b16 %v221
      %v357 = vunpack.c.l.b16 %v222
      %v358 = vpack.c.b16 %v343, %v342
      %v359 = vpack.c.b16 %v345, %v344
      %v360 = vpack.c.b16 %v347, %v346
      %v361 = vpack.c.b16 %v349, %v348
      %v362 = vpack.c.b16 %v351, %v350
      %v363 = vpack.c.b16 %v353, %v352
      %v364 = vpack.c.b16 %v355, %v354
      %v365 = vpack.c.b16 %v357, %v356
      %374 = vmatprep.subr.bf16.mxu0 0
      %375 = vmatpush1.bf16.msra.mxu0 %v358
      %376 = vmatprep.subr.bf16.mxu0 0
      %377 = vmatpush1.bf16.msra.mxu0 %v359
      %378 = vmatprep.subr.bf16.mxu0 0
      %379 = vmatpush1.bf16.msra.mxu0 %v360
      %380 = vmatprep.subr.bf16.mxu0 0
      %381 = vmatpush1.bf16.msra.mxu0 %v361
      %382 = vmatprep.subr.bf16.mxu0 0
      %383 = vmatpush1.bf16.msra.mxu0 %v362
      %384 = vmatprep.subr.bf16.mxu0 0
      %385 = vmatpush1.bf16.msra.mxu0 %v363
      %386 = vmatprep.subr.bf16.mxu0 0
      %387 = vmatpush1.bf16.msra.mxu0 %v364
      %388 = vmatprep.subr.bf16.mxu0 0
      %389 = vmatpush1.bf16.msra.mxu0 %v365
      %390 = vmatprep.subr.bf16.mxu0 0
      %391 = vmatpush1.bf16.msra.mxu0 0
      %392 = vmatprep.subr.bf16.mxu0 0
      %393 = vmatpush1.bf16.msra.mxu0 0
      %394 = vmatprep.subr.bf16.mxu0 0
      %395 = vmatpush1.bf16.msra.mxu0 0
      %396 = vmatprep.subr.bf16.mxu0 0
      %397 = vmatpush1.bf16.msra.mxu0 0
      %398 = vmatprep.subr.bf16.mxu0 0
      %399 = vmatpush1.bf16.msra.mxu0 0
      %400 = vmatprep.subr.bf16.mxu0 0
      %401 = vmatpush1.bf16.msra.mxu0 0
      %402 = vmatprep.subr.bf16.mxu0 0
      %403 = vmatpush1.bf16.msra.mxu0 0
      %404 = vmatprep.subr.bf16.mxu0 0
      %405 = vmatpush1.bf16.msra.mxu0 0
      %406 = vmatprep.mubr.bf16.mxu0 0
      %407 = vmatmul.mubr.bf16.gmra.mrb[0].mxu0 %v294
      %v408 = vpop.f32.mrb[0].mxu0
      %v409 = vadd.f32 %v228, %v408
      %v410 = vpop.f32.mrb[0].mxu0
      %v411 = vpop.f32.mrb[0].mxu0
      %v412 = vadd.f32 %v228, %v411
      %v413 = vpop.f32.mrb[0].mxu0
      %414 = vmatprep.mubr.bf16.mxu0 0
      %415 = vmatmul.mubr.bf16.gmra.mrb[0].mxu0 %v295
      %v416 = vpop.f32.mrb[0].mxu0
      %v417 = vadd.f32 %v228, %v416
      %v418 = vpop.f32.mrb[0].mxu0
      %v419 = vpop.f32.mrb[0].mxu0
      %v420 = vadd.f32 %v228, %v419
      %v421 = vpop.f32.mrb[0].mxu0
      %422 = vmatprep.mubr.bf16.mxu0 0
      %423 = vmatmul.mubr.bf16.gmra.mrb[0].mxu0 %v296
      %v424 = vpop.f32.mrb[0].mxu0
      %v425 = vadd.f32 %v228, %v424
      %v426 = vpop.f32.mrb[0].mxu0
      %v427 = vpop.f32.mrb[0].mxu0
      %v428 = vadd.f32 %v228, %v427
      %v429 = vpop.f32.mrb[0].mxu0
      %430 = vmatprep.mubr.bf16.mxu0 0
      %431 = vmatmul.mubr.bf16.gmra.mrb[0].mxu0 %v297
      %v432 = vpop.f32.mrb[0].mxu0
      %v433 = vadd.f32 %v228, %v432
      %v434 = vpop.f32.mrb[0].mxu0
      %v435 = vpop.f32.mrb[0].mxu0
      %v436 = vadd.f32 %v228, %v435
      %v437 = vpop.f32.mrb[0].mxu0
      %438 = vmatprep.mubr.bf16.mxu0 0
      %439 = vmatmul.mubr.bf16.gmra.mrb[0].mxu0 %v298
      %v440 = vpop.f32.mrb[0].mxu0
      %v441 = vadd.f32 %v228, %v440
      %v442 = vpop.f32.mrb[0].mxu0
      %v443 = vpop.f32.mrb[0].mxu0
      %v444 = vadd.f32 %v228, %v443
      %v445 = vpop.f32.mrb[0].mxu0
      %446 = vmatprep.mubr.bf16.mxu0 0
      %447 = vmatmul.mubr.bf16.gmra.mrb[0].mxu0 %v299
      %v448 = vpop.f32.mrb[0].mxu0
      %v449 = vadd.f32 %v228, %v448
      %v450 = vpop.f32.mrb[0].mxu0
      %v451 = vpop.f32.mrb[0].mxu0
      %v452 = vadd.f32 %v228, %v451
      %v453 = vpop.f32.mrb[0].mxu0
      %454 = vmatprep.mubr.bf16.mxu0 0
      %455 = vmatmul.mubr.bf16.gmra.mrb[0].mxu0 %v300
      %v456 = vpop.f32.mrb[0].mxu0
      %v457 = vadd.f32 %v228, %v456
      %v458 = vpop.f32.mrb[0].mxu0
      %v459 = vpop.f32.mrb[0].mxu0
      %v460 = vadd.f32 %v228, %v459
      %v461 = vpop.f32.mrb[0].mxu0
      %462 = vmatprep.mubr.bf16.mxu0 0
      %463 = vmatmul.mubr.bf16.gmra.mrb[0].mxu0 %v301
      %v464 = vpop.f32.mrb[0].mxu0
      %v465 = vadd.f32 %v228, %v464
      %v466 = vpop.f32.mrb[0].mxu0
      %v467 = vpop.f32.mrb[0].mxu0
      %v468 = vadd.f32 %v228, %v467
      %v469 = vpop.f32.mrb[0].mxu0
      %470 = vmatprep.mubr.bf16.mxu0 0
      %471 = vmatmul.mubr.bf16.gmra.mrb[0].mxu0 %v302
      %v472 = vpop.f32.mrb[0].mxu0
      %v473 = vadd.f32 %v228, %v472
      %v474 = vpop.f32.mrb[0].mxu0
      %v475 = vpop.f32.mrb[0].mxu0
      %v476 = vadd.f32 %v228, %v475
      %v477 = vpop.f32.mrb[0].mxu0
      %478 = vmatprep.mubr.bf16.mxu0 0
      %479 = vmatmul.mubr.bf16.gmra.mrb[0].mxu0 %v303
      %v480 = vpop.f32.mrb[0].mxu0
      %v481 = vadd.f32 %v228, %v480
      %v482 = vpop.f32.mrb[0].mxu0
      %v483 = vpop.f32.mrb[0].mxu0
      %v484 = vadd.f32 %v228, %v483
      %v485 = vpop.f32.mrb[0].mxu0
      %486 = vmatprep.mubr.bf16.mxu0 0
      %487 = vmatmul.mubr.bf16.gmra.mrb[0].mxu0 %v304
      %v488 = vpop.f32.mrb[0].mxu0
      %v489 = vadd.f32 %v228, %v488
      %v490 = vpop.f32.mrb[0].mxu0
      %v491 = vpop.f32.mrb[0].mxu0
      %v492 = vadd.f32 %v228, %v491
      %v493 = vpop.f32.mrb[0].mxu0
      %494 = vmatprep.mubr.bf16.mxu0 0
      %495 = vmatmul.mubr.bf16.gmra.mrb[0].mxu0 %v305
      %v496 = vpop.f32.mrb[0].mxu0
      %v497 = vadd.f32 %v228, %v496
      %v498 = vpop.f32.mrb[0].mxu0
      %v499 = vpop.f32.mrb[0].mxu0
      %v500 = vadd.f32 %v228, %v499
      %v501 = vpop.f32.mrb[0].mxu0
      %502 = vmatprep.mubr.bf16.mxu0 0
      %503 = vmatmul.mubr.bf16.gmra.mrb[0].mxu0 %v306
      %v504 = vpop.f32.mrb[0].mxu0
      %v505 = vadd.f32 %v228, %v504
      %v506 = vpop.f32.mrb[0].mxu0
      %v507 = vpop.f32.mrb[0].mxu0
      %v508 = vadd.f32 %v228, %v507
      %v509 = vpop.f32.mrb[0].mxu0
      %510 = vmatprep.mubr.bf16.mxu0 0
      %511 = vmatmul.mubr.bf16.gmra.mrb[0].mxu0 %v307
      %v512 = vpop.f32.mrb[0].mxu0
      %v513 = vadd.f32 %v228, %v512
      %v514 = vpop.f32.mrb[0].mxu0
      %v515 = vpop.f32.mrb[0].mxu0
      %v516 = vadd.f32 %v228, %v515
      %v517 = vpop.f32.mrb[0].mxu0
      %518 = vmatprep.mubr.bf16.mxu0 0
      %519 = vmatmul.mubr.bf16.gmra.mrb[0].mxu0 %v308
      %v520 = vpop.f32.mrb[0].mxu0
      %v521 = vadd.f32 %v228, %v520
      %v522 = vpop.f32.mrb[0].mxu0
      %v523 = vpop.f32.mrb[0].mxu0
      %v524 = vadd.f32 %v228, %v523
      %v525 = vpop.f32.mrb[0].mxu0
      %526 = vmatprep.mubr.bf16.mxu0 0
      %527 = vmatmul.mubr.bf16.gmra.mrb[0].mxu0 %v309
      %v528 = vpop.f32.mrb[0].mxu0
      %v529 = vadd.f32 %v228, %v528
      %v530 = vpop.f32.mrb[0].mxu0
      %v531 = vpop.f32.mrb[0].mxu0
      %v532 = vadd.f32 %v228, %v531
      %v533 = vpop.f32.mrb[0].mxu0
      %534 = vdwg.mxu0
      %vm535 = vcmp.gt.f32.partialorder %v409, 0.0
      %vm536 = vcmp.gt.f32.partialorder %v412, 0.0
      %vm537 = vcmp.gt.f32.partialorder %v417, 0.0
      %vm538 = vcmp.gt.f32.partialorder %v420, 0.0
      %vm539 = vcmp.gt.f32.partialorder %v425, 0.0
      %vm540 = vcmp.gt.f32.partialorder %v428, 0.0
      %vm541 = vcmp.gt.f32.partialorder %v433, 0.0
      %vm542 = vcmp.gt.f32.partialorder %v436, 0.0
      %vm543 = vcmp.gt.f32.partialorder %v441, 0.0
      %vm544 = vcmp.gt.f32.partialorder %v444, 0.0
      %vm545 = vcmp.gt.f32.partialorder %v449, 0.0
      %vm546 = vcmp.gt.f32.partialorder %v452, 0.0
      %vm547 = vcmp.gt.f32.partialorder %v457, 0.0
      %vm548 = vcmp.gt.f32.partialorder %v460, 0.0
      %vm549 = vcmp.gt.f32.partialorder %v465, 0.0
      %vm550 = vcmp.gt.f32.partialorder %v468, 0.0
      %vm551 = vcmp.gt.f32.partialorder %v473, 0.0
      %vm552 = vcmp.gt.f32.partialorder %v476, 0.0
      %vm553 = vcmp.gt.f32.partialorder %v481, 0.0
      %vm554 = vcmp.gt.f32.partialorder %v484, 0.0
      %vm555 = vcmp.gt.f32.partialorder %v489, 0.0
      %vm556 = vcmp.gt.f32.partialorder %v492, 0.0
      %vm557 = vcmp.gt.f32.partialorder %v497, 0.0
      %vm558 = vcmp.gt.f32.partialorder %v500, 0.0
      %vm559 = vcmp.gt.f32.partialorder %v505, 0.0
      %vm560 = vcmp.gt.f32.partialorder %v508, 0.0
      %vm561 = vcmp.gt.f32.partialorder %v513, 0.0
      %vm562 = vcmp.gt.f32.partialorder %v516, 0.0
      %vm563 = vcmp.gt.f32.partialorder %v521, 0.0
      %vm564 = vcmp.gt.f32.partialorder %v524, 0.0
      %vm565 = vcmp.gt.f32.partialorder %v529, 0.0
      %vm566 = vcmp.gt.f32.partialorder %v532, 0.0
      %v567 = vmul.f32 %v409, 0.2
      %v568 = vmul.f32 %v412, 0.2
      %v569 = vmul.f32 %v417, 0.2
      %v570 = vmul.f32 %v420, 0.2
      %v571 = vmul.f32 %v425, 0.2
      %v572 = vmul.f32 %v428, 0.2
      %v573 = vmul.f32 %v433, 0.2
      %v574 = vmul.f32 %v436, 0.2
      %v575 = vmul.f32 %v441, 0.2
      %v576 = vmul.f32 %v444, 0.2
      %v577 = vmul.f32 %v449, 0.2
      %v578 = vmul.f32 %v452, 0.2
      %v579 = vmul.f32 %v457, 0.2
      %v580 = vmul.f32 %v460, 0.2
      %v581 = vmul.f32 %v465, 0.2
      %v582 = vmul.f32 %v468, 0.2
      %v583 = vmul.f32 %v473, 0.2
      %v584 = vmul.f32 %v476, 0.2
      %v585 = vmul.f32 %v481, 0.2
      %v586 = vmul.f32 %v484, 0.2
      %v587 = vmul.f32 %v489, 0.2
      %v588 = vmul.f32 %v492, 0.2
      %v589 = vmul.f32 %v497, 0.2
      %v590 = vmul.f32 %v500, 0.2
      %v591 = vmul.f32 %v505, 0.2
      %v592 = vmul.f32 %v508, 0.2
      %v593 = vmul.f32 %v513, 0.2
      %v594 = vmul.f32 %v516, 0.2
      %v595 = vmul.f32 %v521, 0.2
      %v596 = vmul.f32 %v524, 0.2
      %v597 = vmul.f32 %v529, 0.2
      %v598 = vmul.f32 %v532, 0.2
      %v599 = vsel %vm535, %v409, %v567
      %v600 = vsel %vm536, %v412, %v568
      %v601 = vsel %vm537, %v417, %v569
      %v602 = vsel %vm538, %v420, %v570
      %v603 = vsel %vm539, %v425, %v571
      %v604 = vsel %vm540, %v428, %v572
      %v605 = vsel %vm541, %v433, %v573
      %v606 = vsel %vm542, %v436, %v574
      %v607 = vsel %vm543, %v441, %v575
      %v608 = vsel %vm544, %v444, %v576
      %v609 = vsel %vm545, %v449, %v577
      %v610 = vsel %vm546, %v452, %v578
      %v611 = vsel %vm547, %v457, %v579
      %v612 = vsel %vm548, %v460, %v580
      %v613 = vsel %vm549, %v465, %v581
      %v614 = vsel %vm550, %v468, %v582
      %v615 = vsel %vm551, %v473, %v583
      %v616 = vsel %vm552, %v476, %v584
      %v617 = vsel %vm553, %v481, %v585
      %v618 = vsel %vm554, %v484, %v586
      %v619 = vsel %vm555, %v489, %v587
      %v620 = vsel %vm556, %v492, %v588
      %v621 = vsel %vm557, %v497, %v589
      %v622 = vsel %vm558, %v500, %v590
      %v623 = vsel %vm559, %v505, %v591
      %v624 = vsel %vm560, %v508, %v592
      %v625 = vsel %vm561, %v513, %v593
      %v626 = vsel %vm562, %v516, %v594
      %v627 = vsel %vm563, %v521, %v595
      %v628 = vsel %vm564, %v524, %v596
      %v629 = vsel %vm565, %v529, %v597
      %v630 = vsel %vm566, %v532, %v598
      %v631 = vpack.c.bf16 %v600, %v599
      %v632 = vpack.c.bf16 %v602, %v601
      %v633 = vpack.c.bf16 %v604, %v603
      %v634 = vpack.c.bf16 %v606, %v605
      %v635 = vpack.c.bf16 %v608, %v607
      %v636 = vpack.c.bf16 %v610, %v609
      %v637 = vpack.c.bf16 %v612, %v611
      %v638 = vpack.c.bf16 %v614, %v613
      %v639 = vpack.c.bf16 %v616, %v615
      %v640 = vpack.c.bf16 %v618, %v617
      %v641 = vpack.c.bf16 %v620, %v619
      %v642 = vpack.c.bf16 %v622, %v621
      %v643 = vpack.c.bf16 %v624, %v623
      %v644 = vpack.c.bf16 %v626, %v625
      %v645 = vpack.c.bf16 %v628, %v627
      %v646 = vpack.c.bf16 %v630, %v629
      %v663 = vunpack.c.l.b16 %v631
      %v664 = vunpack.c.h.b16 %v631
      %v665 = vunpack.c.l.b16 %v632
      %v666 = vunpack.c.h.b16 %v632
      %v667 = vunpack.c.l.b16 %v633
      %v668 = vunpack.c.h.b16 %v633
      %v669 = vunpack.c.l.b16 %v634
      %v670 = vunpack.c.h.b16 %v634
      %v671 = vunpack.c.l.b16 %v635
      %v672 = vunpack.c.h.b16 %v635
      %v673 = vunpack.c.l.b16 %v636
      %v674 = vunpack.c.h.b16 %v636
      %v675 = vunpack.c.l.b16 %v637
      %v676 = vunpack.c.h.b16 %v637
      %v677 = vunpack.c.l.b16 %v638
      %v678 = vunpack.c.h.b16 %v638
      %v679 = vunpack.c.l.b16 %v639
      %v680 = vunpack.c.h.b16 %v639
      %v681 = vunpack.c.l.b16 %v640
      %v682 = vunpack.c.h.b16 %v640
      %v683 = vunpack.c.l.b16 %v641
      %v684 = vunpack.c.h.b16 %v641
      %v685 = vunpack.c.l.b16 %v642
      %v686 = vunpack.c.h.b16 %v642
      %v687 = vunpack.c.l.b16 %v643
      %v688 = vunpack.c.h.b16 %v643
      %v689 = vunpack.c.l.b16 %v644
      %v690 = vunpack.c.h.b16 %v644
      %v691 = vunpack.c.l.b16 %v645
      %v692 = vunpack.c.h.b16 %v645
      %v693 = vunpack.c.l.b16 %v646
      %v694 = vunpack.c.h.b16 %v646
      %v695 = vpack.c.b16 %v663, %v663
      %v696 = vpack.c.b16 %v664, %v664
      %v697 = vpack.c.b16 %v665, %v665
      %v698 = vpack.c.b16 %v666, %v666
      %v699 = vpack.c.b16 %v667, %v667
      %v700 = vpack.c.b16 %v668, %v668
      %v701 = vpack.c.b16 %v669, %v669
      %v702 = vpack.c.b16 %v670, %v670
      %v703 = vpack.c.b16 %v671, %v671
      %v704 = vpack.c.b16 %v672, %v672
      %v705 = vpack.c.b16 %v673, %v673
      %v706 = vpack.c.b16 %v674, %v674
      %v707 = vpack.c.b16 %v675, %v675
      %v708 = vpack.c.b16 %v676, %v676
      %v709 = vpack.c.b16 %v677, %v677
      %v710 = vpack.c.b16 %v678, %v678
      %v711 = vpack.c.b16 %v679, %v679
      %v712 = vpack.c.b16 %v680, %v680
      %v713 = vpack.c.b16 %v681, %v681
      %v714 = vpack.c.b16 %v682, %v682
      %v715 = vpack.c.b16 %v683, %v683
      %v716 = vpack.c.b16 %v684, %v684
      %v717 = vpack.c.b16 %v685, %v685
      %v718 = vpack.c.b16 %v686, %v686
      %v719 = vpack.c.b16 %v687, %v687
      %v720 = vpack.c.b16 %v688, %v688
      %v721 = vpack.c.b16 %v689, %v689
      %v722 = vpack.c.b16 %v690, %v690
      %v723 = vpack.c.b16 %v691, %v691
      %v724 = vpack.c.b16 %v692, %v692
      %v725 = vpack.c.b16 %v693, %v693
      %v726 = vpack.c.b16 %v694, %v694
      %759 = vst [vmem:[%s172] sm:$0xf] %v695
      %760 = vst [vmem:[%s172 + $0x4] sm:$0xf] %v696
      %761 = vst [vmem:[%s172 + $0x8] sm:$0xf] %v697
      %762 = vst [vmem:[%s172 + $0xc] sm:$0xf] %v698
      %763 = vst [vmem:[%s172 + $0x10] sm:$0xf] %v699
      %764 = vst [vmem:[%s172 + $0x14] sm:$0xf] %v700
      %765 = vst [vmem:[%s172 + $0x18] sm:$0xf] %v701
      %766 = vst [vmem:[%s172 + $0x1c] sm:$0xf] %v702
      %767 = vst [vmem:[%s172 + $0x20] sm:$0xf] %v703
      %768 = vst [vmem:[%s172 + $0x24] sm:$0xf] %v704
      %769 = vst [vmem:[%s172 + $0x28] sm:$0xf] %v705
      %770 = vst [vmem:[%s172 + $0x2c] sm:$0xf] %v706
      %771 = vst [vmem:[%s172 + $0x30] sm:$0xf] %v707
      %772 = vst [vmem:[%s172 + $0x34] sm:$0xf] %v708
      %773 = vst [vmem:[%s172 + $0x38] sm:$0xf] %v709
      %774 = vst [vmem:[%s172 + $0x3c] sm:$0xf] %v710
      %775 = vst [vmem:[%s172 + $0x40] sm:$0xf] %v711
      %776 = vst [vmem:[%s172 + $0x44] sm:$0xf] %v712
      %777 = vst [vmem:[%s172 + $0x48] sm:$0xf] %v713
      %778 = vst [vmem:[%s172 + $0x4c] sm:$0xf] %v714
      %779 = vst [vmem:[%s172 + $0x50] sm:$0xf] %v715
      %780 = vst [vmem:[%s172 + $0x54] sm:$0xf] %v716
      %781 = vst [vmem:[%s172 + $0x58] sm:$0xf] %v717
      %782 = vst [vmem:[%s172 + $0x5c] sm:$0xf] %v718
      %783 = vst [vmem:[%s172 + $0x60] sm:$0xf] %v719
      %784 = vst [vmem:[%s172 + $0x64] sm:$0xf] %v720
      %785 = vst [vmem:[%s172 + $0x68] sm:$0xf] %v721
      %786 = vst [vmem:[%s172 + $0x6c] sm:$0xf] %v722
      %787 = vst [vmem:[%s172 + $0x70] sm:$0xf] %v723
      %788 = vst [vmem:[%s172 + $0x74] sm:$0xf] %v724
      %789 = vst [vmem:[%s172 + $0x78] sm:$0xf] %v725
      %790 = vst [vmem:[%s172 + $0x7c] sm:$0xf] %v726
      %s791 = smul.u32 32, %s14
      %p792 = scmp.lt.s32.totalorder %s791, 63
      %s793 = scalar_select %p792, %s791, 63
      %s794 = smul.addr %s793, 4
      %s795 = scalar_lea.vmem %s3, %s794
      // Predicated region
      $region33: #{_lambda_.5} parent=31 // pred_check
        %p796 = pneg %p100
      $region34: #{_lambda_.5} parent=31 // pred_check_branch
        %798 = sbr.rel (%p796) target = $region36
      $region35: #{_lambda_.5} parent=31 // pred_region
        %s799 = smul.u32 32, %s14
      $region36: #{_lambda_.5} parent=31 // pred_fallthru
        _
    $region32: #{_lambda_.5} parent=5 // pred_fallthru
      _
    %p800 = scmp.le.s32.totalorder 2, %s9
    // Predicated region
    $region37: #{_lambda_.5} parent=5 // pred_check
      %p801 = pneg %p800
    $region38: #{_lambda_.5} parent=5 // pred_check_branch
      %803 = sbr.rel (%p801) target = $region40
    $region39: #{_lambda_.5} parent=5 // pred_region
      %s804 = ssub.s32 %s9, 2
      // Predicated region
      $region41: #{_lambda_.5} parent=39 // pred_check
        %p805 = pneg %p106
      $region42: #{_lambda_.5} parent=39 // pred_check_branch
        %807 = sbr.rel (%p805) target = $region44
      $region43: #{_lambda_.5} parent=39 // pred_region
        %s808 = smul.u32 32, %s15
        %p809 = scmp.lt.s32.totalorder %s808, 63
        %s810 = scalar_select %p809, %s808, 63
        %s811 = smul.addr %s810, 4
        %s812 = scalar_lea.vmem %s3, %s811
      $region44: #{_lambda_.5} parent=39 // pred_fallthru
        _
    $region40: #{_lambda_.5} parent=5 // pred_fallthru
      _
  $region6: #{_lambda_.5} parent=0 // loop_footer
    %s13 = sadd.s32 1, %s9
  $region7: #{_lambda_.5} parent=0 // loop_footer_branch
    %8 = sbr.rel target = $region3
  $region8: #{_lambda_.5} parent=0 // loop_exit
    _

// kernel: _lambda_.6
$region0: #{_lambda_.6}
  #allocation0 [shape = 'u32[]', space=smem, size = 0x4, offset = 0x4, fixed_abs, tag = 'smem constant byte address 0x4 - core index']
  #allocation1 [shape = 'u32[144,128]{1,0:T(1,128)}', space=vmem, size = 0x12000, scoped, tag = 'internal scratch']
  %s0 = inlined_call_operand.vmem [shape: bf16[1920,64], index: 0, kind: input, shape index: {}]
  %s1 = inlined_call_operand.vmem [shape: bf16[64,128], index: 1, kind: input, shape index: {}]
  %s2 = inlined_call_operand.vmem [shape: f32[1,128], index: 2, kind: input, shape index: {}]
  %s3 = inlined_call_operand.vmem [shape: bf16[1920,128], index: 3, kind: output, shape index: {}]
  %s4 = sld [smem:[#allocation0]]
  $region45: #{_lambda_.6} parent=0
    _
  %s6 = ssub.s32 1, %s4
  %s7 = scalar_select 0, %s6, %s4
  loop: start=0, step=1, limit=7
  $region2: #{_lambda_.6} parent=0 // loop_pre_header
    _
  $region3: #{_lambda_.6} parent=0 // loop_header
    %s9 = sphi 0, %s13
    %p10 = scmp.ge.s32.totalorder %s9, 7
    %s19 = sphi 0, %s21
    %s22 = sphi 0, %s19
    %s23 = sphi 0, %s22
    %s39 = sphi 0, %s23
    %s43 = sphi 0, %s43
    %s45 = sphi 0, %s43
    %s46 = sphi 0, %s45
    %s60 = sphi 0, %s46
    %s64 = sphi 0, %s64
    %s66 = sphi 0, %s64
    %s67 = sphi 0, %s66
    %s81 = sphi 0, %s67
    %s87 = sphi 0, %s89
    %s90 = sphi 0, %s87
    %s91 = sphi 0, %s90
    %s107 = sphi 0, %s91
  $region4: #{_lambda_.6} parent=0 // loop_header_branch
    %12 = sbr.rel (%p10) target = $region8
  $region5: #{_lambda_.6} parent=0 // loop_body
    %s14 = ssub.s32 %s9, 1
    %s15 = ssub.s32 %s9, 2
    %s16 = sadd.s32 %s9, 1
    %s17 = ssub.s32 %s9, %s16
    %p18 = scmp.eq.s32.totalorder %s17, 0
    %s20 = sadd.s32 %s19, 1
    %s21 = scalar_select %p18, %s19, %s20
    %p24 = pneg %p18
    %p25 = scmp.eq.s32.totalorder %s9, 4
    %p26 = por %p24, %p25
    %p27 = scmp.ne.s32.totalorder %s19, %s22
    %p28 = scmp.eq.s32.totalorder %s9, 0
    %p29 = por %p27, %p28
    %p30 = scmp.ne.s32.totalorder %s19, %s22
    %p31 = scmp.eq.s32.totalorder %s14, 4
    %p32 = por %p30, %p31
    %p33 = scmp.ne.s32.totalorder %s22, %s23
    %p34 = scmp.eq.s32.totalorder %s14, 0
    %p35 = por %p33, %p34
    %p36 = scmp.ne.s32.totalorder %s22, %s23
    %p37 = scmp.eq.s32.totalorder %s15, 4
    %p38 = por %p36, %p37
    %p40 = scmp.ne.s32.totalorder %s23, %s39
    %p41 = scmp.eq.s32.totalorder %s15, 0
    %p42 = por %p40, %p41
    %s44 = sadd.s32 %s43, 1
    %p47 = scmp.eq.s32.totalorder %s9, 4
    %p48 = scmp.ne.s32.totalorder %s43, %s45
    %p49 = scmp.eq.s32.totalorder %s9, 0
    %p50 = por %p48, %p49
    %p51 = scmp.ne.s32.totalorder %s43, %s45
    %p52 = scmp.eq.s32.totalorder %s14, 4
    %p53 = por %p51, %p52
    %p54 = scmp.ne.s32.totalorder %s45, %s46
    %p55 = scmp.eq.s32.totalorder %s14, 0
    %p56 = por %p54, %p55
    %p57 = scmp.ne.s32.totalorder %s45, %s46
    %p58 = scmp.eq.s32.totalorder %s15, 4
    %p59 = por %p57, %p58
    %p61 = scmp.ne.s32.totalorder %s46, %s60
    %p62 = scmp.eq.s32.totalorder %s15, 0
    %p63 = por %p61, %p62
    %s65 = sadd.s32 %s64, 1
    %p68 = scmp.eq.s32.totalorder %s9, 4
    %p69 = scmp.ne.s32.totalorder %s64, %s66
    %p70 = scmp.eq.s32.totalorder %s9, 0
    %p71 = por %p69, %p70
    %p72 = scmp.ne.s32.totalorder %s64, %s66
    %p73 = scmp.eq.s32.totalorder %s14, 4
    %p74 = por %p72, %p73
    %p75 = scmp.ne.s32.totalorder %s66, %s67
    %p76 = scmp.eq.s32.totalorder %s14, 0
    %p77 = por %p75, %p76
    %p78 = scmp.ne.s32.totalorder %s66, %s67
    %p79 = scmp.eq.s32.totalorder %s15, 4
    %p80 = por %p78, %p79
    %p82 = scmp.ne.s32.totalorder %s67, %s81
    %p83 = scmp.eq.s32.totalorder %s15, 0
    %p84 = por %p82, %p83
    %s85 = ssub.s32 %s9, %s16
    %p86 = scmp.eq.s32.totalorder %s85, 0
    %s88 = sadd.s32 %s87, 1
    %s89 = scalar_select %p86, %s87, %s88
    %p92 = pneg %p86
    %p93 = scmp.eq.s32.totalorder %s9, 4
    %p94 = por %p92, %p93
    %p95 = scmp.ne.s32.totalorder %s87, %s90
    %p96 = scmp.eq.s32.totalorder %s9, 0
    %p97 = por %p95, %p96
    %p98 = scmp.ne.s32.totalorder %s87, %s90
    %p99 = scmp.eq.s32.totalorder %s14, 4
    %p100 = por %p98, %p99
    %p101 = scmp.ne.s32.totalorder %s90, %s91
    %p102 = scmp.eq.s32.totalorder %s14, 0
    %p103 = por %p101, %p102
    %p104 = scmp.ne.s32.totalorder %s90, %s91
    %p105 = scmp.eq.s32.totalorder %s15, 4
    %p106 = por %p104, %p105
    %p108 = scmp.ne.s32.totalorder %s91, %s107
    %p109 = scmp.eq.s32.totalorder %s15, 0
    %p110 = por %p108, %p109
    %p111 = scmp.le.s32.totalorder 1, %s9
    %p112 = scmp.lt.s32.totalorder %s9, 6
    %p113 = pnand %p111, %p112
    %p114 = pneg %p113
    // Predicated region
    $region9: #{_lambda_.6} parent=5 // pred_check
      _
    $region10: #{_lambda_.6} parent=5 // pred_check_branch
      %116 = sbr.rel (%p113) target = $region12
    $region11: #{_lambda_.6} parent=5 // pred_region
      %s117 = ssub.s32 %s9, 1
      // Predicated region
      $region13: #{_lambda_.6} parent=11 // pred_check
        %p118 = pneg %p56
      $region14: #{_lambda_.6} parent=11 // pred_check_branch
        %120 = sbr.rel (%p118) target = $region16
      $region15: #{_lambda_.6} parent=11 // pred_region
        _
      $region16: #{_lambda_.6} parent=11 // pred_fallthru
        _
      // Predicated region
      $region17: #{_lambda_.6} parent=11 // pred_check
        %p121 = pneg %p77
      $region18: #{_lambda_.6} parent=11 // pred_check_branch
        %123 = sbr.rel (%p121) target = $region20
      $region19: #{_lambda_.6} parent=11 // pred_region
        _
      $region20: #{_lambda_.6} parent=11 // pred_fallthru
        _
    $region12: #{_lambda_.6} parent=5 // pred_fallthru
      _
    %p124 = scmp.lt.s32.totalorder %s9, 5
    // Predicated region
    $region21: #{_lambda_.6} parent=5 // pred_check
      %p125 = pneg %p124
    $region22: #{_lambda_.6} parent=5 // pred_check_branch
      %127 = sbr.rel (%p125) target = $region24
    $region23: #{_lambda_.6} parent=5 // pred_region
      // Predicated region
      $region25: #{_lambda_.6} parent=23 // pred_check
        %p128 = pneg %p29
      $region26: #{_lambda_.6} parent=23 // pred_check_branch
        %130 = sbr.rel (%p128) target = $region28
      $region27: #{_lambda_.6} parent=23 // pred_region
        %s131 = smul.u32 48, %s9
        %p132 = scmp.lt.s32.totalorder %s131, 239
        %s133 = scalar_select %p132, %s131, 239
        %s134 = smul.addr %s133, 4
        %s135 = scalar_lea.vmem %s0, %s134
        %s136 = smul.u32 48, %s9
      $region28: #{_lambda_.6} parent=23 // pred_fallthru
        _
    $region24: #{_lambda_.6} parent=5 // pred_fallthru
      _
    %p137 = scmp.le.s32.totalorder 1, %s9
    %p138 = scmp.lt.s32.totalorder %s9, 6
    %p139 = pnand %p137, %p138
    %p140 = pneg %p139
    // Predicated region
    $region29: #{_lambda_.6} parent=5 // pred_check
      _
    $region30: #{_lambda_.6} parent=5 // pred_check_branch
      %142 = sbr.rel (%p139) target = $region32
    $region31: #{_lambda_.6} parent=5 // pred_region
      %s143 = ssub.s32 %s9, 1
      %s144 = smul.u32 48, %s14
      %p145 = scmp.lt.s32.totalorder %s144, 239
      %s146 = scalar_select %p145, %s144, 239
      %s147 = smul.addr %s146, 4
      %s148 = scalar_lea.vmem %s0, %s147
      %p149 = pneg %p35
      %p150 = pneg %p32
      %p151 = pneg %p56
      %p152 = pneg %p53
      %p153 = pneg %p77
      %p154 = pneg %p74
      %p155 = pneg %p103
      %p156 = pneg %p100
      %s157 = smul.u32 48, %s14
      %p158 = scmp.lt.s32.totalorder %s157, 239
      %s159 = scalar_select %p158, %s157, 239
      %s160 = smul.addr %s159, 4
      %s161 = scalar_lea.vmem %s3, %s160
      %s162 = smul.u32 48, %s14
      %p163 = scmp.lt.s32.totalorder %s162, 239
      %s164 = scalar_select %p163, %s162, 239
      %s165 = smul.addr %s164, 4
      %s166 = scalar_lea.vmem %s0, %s165
      %s167 = smul.u32 48, %s14
      %s168 = smul.u32 48, %s14
      %p169 = scmp.lt.s32.totalorder %s168, 239
      %s170 = scalar_select %p169, %s168, 239
      %s171 = smul.addr %s170, 4
      %s172 = scalar_lea.vmem %s3, %s171
      %s173 = smul.u32 48, %s14
      %v175 = vld [vmem:[%s166] sm:$0xf]
      %v176 = vld [vmem:[%s166 + $0x4] sm:$0xf]
      %v177 = vld [vmem:[%s166 + $0x8] sm:$0xf]
      %v178 = vld [vmem:[%s166 + $0xc] sm:$0xf]
      %v179 = vld [vmem:[%s166 + $0x10] sm:$0xf]
      %v180 = vld [vmem:[%s166 + $0x14] sm:$0xf]
      %v181 = vld [vmem:[%s166 + $0x18] sm:$0xf]
      %v182 = vld [vmem:[%s166 + $0x1c] sm:$0xf]
      %v183 = vld [vmem:[%s166 + $0x20] sm:$0xf]
      %v184 = vld [vmem:[%s166 + $0x24] sm:$0xf]
      %v185 = vld [vmem:[%s166 + $0x28] sm:$0xf]
      %v186 = vld [vmem:[%s166 + $0x2c] sm:$0xf]
      %v187 = vld [vmem:[%s166 + $0x30] sm:$0xf]
      %v188 = vld [vmem:[%s166 + $0x34] sm:$0xf]
      %v189 = vld [vmem:[%s166 + $0x38] sm:$0xf]
      %v190 = vld [vmem:[%s166 + $0x3c] sm:$0xf]
      %v191 = vld [vmem:[%s166 + $0x40] sm:$0xf]
      %v192 = vld [vmem:[%s166 + $0x44] sm:$0xf]
      %v193 = vld [vmem:[%s166 + $0x48] sm:$0xf]
      %v194 = vld [vmem:[%s166 + $0x4c] sm:$0xf]
      %v195 = vld [vmem:[%s166 + $0x50] sm:$0xf]
      %v196 = vld [vmem:[%s166 + $0x54] sm:$0xf]
      %v197 = vld [vmem:[%s166 + $0x58] sm:$0xf]
      %v198 = vld [vmem:[%s166 + $0x5c] sm:$0xf]
      %v199 = vld [vmem:[%s166 + $0x60] sm:$0xf]
      %v200 = vld [vmem:[%s166 + $0x64] sm:$0xf]
      %v201 = vld [vmem:[%s166 + $0x68] sm:$0xf]
      %v202 = vld [vmem:[%s166 + $0x6c] sm:$0xf]
      %v203 = vld [vmem:[%s166 + $0x70] sm:$0xf]
      %v204 = vld [vmem:[%s166 + $0x74] sm:$0xf]
      %v205 = vld [vmem:[%s166 + $0x78] sm:$0xf]
      %v206 = vld [vmem:[%s166 + $0x7c] sm:$0xf]
      %v207 = vld [vmem:[%s166 + $0x80] sm:$0xf]
      %v208 = vld [vmem:[%s166 + $0x84] sm:$0xf]
      %v209 = vld [vmem:[%s166 + $0x88] sm:$0xf]
      %v210 = vld [vmem:[%s166 + $0x8c] sm:$0xf]
      %v211 = vld [vmem:[%s166 + $0x90] sm:$0xf]
      %v212 = vld [vmem:[%s166 + $0x94] sm:$0xf]
      %v213 = vld [vmem:[%s166 + $0x98] sm:$0xf]
      %v214 = vld [vmem:[%s166 + $0x9c] sm:$0xf]
      %v215 = vld [vmem:[%s166 + $0xa0] sm:$0xf]
      %v216 = vld [vmem:[%s166 + $0xa4] sm:$0xf]
      %v217 = vld [vmem:[%s166 + $0xa8] sm:$0xf]
      %v218 = vld [vmem:[%s166 + $0xac] sm:$0xf]
      %v219 = vld [vmem:[%s166 + $0xb0] sm:$0xf]
      %v220 = vld [vmem:[%s166 + $0xb4] sm:$0xf]
      %v221 = vld [vmem:[%s166 + $0xb8] sm:$0xf]
      %v222 = vld [vmem:[%s166 + $0xbc] sm:$0xf]
      %v223 = vld [vmem:[%s1] sm:$0xf]
      %v224 = vld [vmem:[%s1 + $0x4] sm:$0xf]
      %v225 = vld [vmem:[%s1 + $0x8] sm:$0xf]
      %v226 = vld [vmem:[%s1 + $0xc] sm:$0xf]
      %v227 = vld [vmem:[%s1 + $0x10] sm:$0xf]
      %v228 = vld [vmem:[%s1 + $0x14] sm:$0xf]
      %v229 = vld [vmem:[%s1 + $0x18] sm:$0xf]
      %v230 = vld [vmem:[%s1 + $0x1c] sm:$0xf]
      %v231 = vld [vmem:[%s2] sm:$0x1]
      %v233 = vlaneseq
      %v234 = vshrl.u32 %v233, 7
      %v235 = vsub.s32 0, %v234
      %v236 = vrot.slane %v231, %v235
      %v286 = vunpack.c.l.b16 %v175
      %v287 = vunpack.c.l.b16 %v176
      %v288 = vunpack.c.l.b16 %v177
      %v289 = vunpack.c.l.b16 %v178
      %v290 = vunpack.c.l.b16 %v179
      %v291 = vunpack.c.l.b16 %v180
      %v292 = vunpack.c.l.b16 %v181
      %v293 = vunpack.c.l.b16 %v182
      %v294 = vunpack.c.l.b16 %v183
      %v295 = vunpack.c.l.b16 %v184
      %v296 = vunpack.c.l.b16 %v185
      %v297 = vunpack.c.l.b16 %v186
      %v298 = vunpack.c.l.b16 %v187
      %v299 = vunpack.c.l.b16 %v188
      %v300 = vunpack.c.l.b16 %v189
      %v301 = vunpack.c.l.b16 %v190
      %v302 = vunpack.c.l.b16 %v191
      %v303 = vunpack.c.l.b16 %v192
      %v304 = vunpack.c.l.b16 %v193
      %v305 = vunpack.c.l.b16 %v194
      %v306 = vunpack.c.l.b16 %v195
      %v307 = vunpack.c.l.b16 %v196
      %v308 = vunpack.c.l.b16 %v197
      %v309 = vunpack.c.l.b16 %v198
      %v310 = vunpack.c.l.b16 %v199
      %v311 = vunpack.c.l.b16 %v200
      %v312 = vunpack.c.l.b16 %v201
      %v313 = vunpack.c.l.b16 %v202
      %v314 = vunpack.c.l.b16 %v203
      %v315 = vunpack.c.l.b16 %v204
      %v316 = vunpack.c.l.b16 %v205
      %v317 = vunpack.c.l.b16 %v206
      %v318 = vunpack.c.l.b16 %v207
      %v319 = vunpack.c.l.b16 %v208
      %v320 = vunpack.c.l.b16 %v209
      %v321 = vunpack.c.l.b16 %v210
      %v322 = vunpack.c.l.b16 %v211
      %v323 = vunpack.c.l.b16 %v212
      %v324 = vunpack.c.l.b16 %v213
      %v325 = vunpack.c.l.b16 %v214
      %v326 = vunpack.c.l.b16 %v215
      %v327 = vunpack.c.l.b16 %v216
      %v328 = vunpack.c.l.b16 %v217
      %v329 = vunpack.c.l.b16 %v218
      %v330 = vunpack.c.l.b16 %v219
      %v331 = vunpack.c.l.b16 %v220
      %v332 = vunpack.c.l.b16 %v221
      %v333 = vunpack.c.l.b16 %v222
      %v334 = vpack.c.b16 %v287, %v286
      %v335 = vpack.c.b16 %v289, %v288
      %v336 = vpack.c.b16 %v291, %v290
      %v337 = vpack.c.b16 %v293, %v292
      %v338 = vpack.c.b16 %v295, %v294
      %v339 = vpack.c.b16 %v297, %v296
      %v340 = vpack.c.b16 %v299, %v298
      %v341 = vpack.c.b16 %v301, %v300
      %v342 = vpack.c.b16 %v303, %v302
      %v343 = vpack.c.b16 %v305, %v304
      %v344 = vpack.c.b16 %v307, %v306
      %v345 = vpack.c.b16 %v309, %v308
      %v346 = vpack.c.b16 %v311, %v310
      %v347 = vpack.c.b16 %v313, %v312
      %v348 = vpack.c.b16 %v315, %v314
      %v349 = vpack.c.b16 %v317, %v316
      %v350 = vpack.c.b16 %v319, %v318
      %v351 = vpack.c.b16 %v321, %v320
      %v352 = vpack.c.b16 %v323, %v322
      %v353 = vpack.c.b16 %v325, %v324
      %v354 = vpack.c.b16 %v327, %v326
      %v355 = vpack.c.b16 %v329, %v328
      %v356 = vpack.c.b16 %v331, %v330
      %v357 = vpack.c.b16 %v333, %v332
      %v366 = vunpack.c.l.b16 %v223
      %v367 = vunpack.c.l.b16 %v224
      %v368 = vunpack.c.l.b16 %v225
      %v369 = vunpack.c.l.b16 %v226
      %v370 = vunpack.c.l.b16 %v227
      %v371 = vunpack.c.l.b16 %v228
      %v372 = vunpack.c.l.b16 %v229
      %v373 = vunpack.c.l.b16 %v230
      %v374 = vpack.c.b16 %v367, %v366
      %v375 = vpack.c.b16 %v369, %v368
      %v376 = vpack.c.b16 %v371, %v370
      %v377 = vpack.c.b16 %v373, %v372
      %vm382 = vcmask 523264
      %v384 = vsel %vm382, %v334, 0
      %v387 = vsel %vm382, %v335, 0
      %v390 = vsel %vm382, %v336, 0
      %v393 = vsel %vm382, %v337, 0
      %v396 = vsel %vm382, %v338, 0
      %v399 = vsel %vm382, %v339, 0
      %v402 = vsel %vm382, %v340, 0
      %v405 = vsel %vm382, %v341, 0
      %v408 = vsel %vm382, %v342, 0
      %v411 = vsel %vm382, %v343, 0
      %v414 = vsel %vm382, %v344, 0
      %v417 = vsel %vm382, %v345, 0
      %v420 = vsel %vm382, %v346, 0
      %v423 = vsel %vm382, %v347, 0
      %v426 = vsel %vm382, %v348, 0
      %v429 = vsel %vm382, %v349, 0
      %v432 = vsel %vm382, %v350, 0
      %v435 = vsel %vm382, %v351, 0
      %v438 = vsel %vm382, %v352, 0
      %v441 = vsel %vm382, %v353, 0
      %v444 = vsel %vm382, %v354, 0
      %v447 = vsel %vm382, %v355, 0
      %v450 = vsel %vm382, %v356, 0
      %v453 = vsel %vm382, %v357, 0
      %455 = vmatprep.subr.bf16.mxu0 0
      %456 = vmatpush1.bf16.msra.mxu0 %v374
      %457 = vmatprep.subr.bf16.mxu0 0
      %458 = vmatpush1.bf16.msra.mxu0 %v375
      %459 = vmatprep.subr.bf16.mxu0 0
      %460 = vmatpush1.bf16.msra.mxu0 %v376
      %461 = vmatprep.subr.bf16.mxu0 0
      %462 = vmatpush1.bf16.msra.mxu0 %v377
      %463 = vmatprep.subr.bf16.mxu0 0
      %464 = vmatpush1.bf16.msra.mxu0 0
      %465 = vmatprep.subr.bf16.mxu0 0
      %466 = vmatpush1.bf16.msra.mxu0 0
      %467 = vmatprep.subr.bf16.mxu0 0
      %468 = vmatpush1.bf16.msra.mxu0 0
      %469 = vmatprep.subr.bf16.mxu0 0
      %470 = vmatpush1.bf16.msra.mxu0 0
      %471 = vmatprep.subr.bf16.mxu0 0
      %472 = vmatpush1.bf16.msra.mxu0 0
      %473 = vmatprep.subr.bf16.mxu0 0
      %474 = vmatpush1.bf16.msra.mxu0 0
      %475 = vmatprep.subr.bf16.mxu0 0
      %476 = vmatpush1.bf16.msra.mxu0 0
      %477 = vmatprep.subr.bf16.mxu0 0
      %478 = vmatpush1.bf16.msra.mxu0 0
      %479 = vmatprep.subr.bf16.mxu0 0
      %480 = vmatpush1.bf16.msra.mxu0 0
      %481 = vmatprep.subr.bf16.mxu0 0
      %482 = vmatpush1.bf16.msra.mxu0 0
      %483 = vmatprep.subr.bf16.mxu0 0
      %484 = vmatpush1.bf16.msra.mxu0 0
      %485 = vmatprep.subr.bf16.mxu0 0
      %486 = vmatpush1.bf16.msra.mxu0 0
      %487 = vmatprep.mubr.bf16.mxu0 0
      %488 = vmatmul.mubr.bf16.gmra.mrb[0].mxu0 %v384
      %v489 = vpop.f32.mrb[0].mxu0
      %v490 = vadd.f32 %v236, %v489
      %v491 = vpop.f32.mrb[0].mxu0
      %v492 = vpop.f32.mrb[0].mxu0
      %v493 = vadd.f32 %v236, %v492
      %v494 = vpop.f32.mrb[0].mxu0
      %495 = vmatprep.mubr.bf16.mxu0 0
      %496 = vmatmul.mubr.bf16.gmra.mrb[0].mxu0 %v387
      %v497 = vpop.f32.mrb[0].mxu0
      %v498 = vadd.f32 %v236, %v497
      %v499 = vpop.f32.mrb[0].mxu0
      %v500 = vpop.f32.mrb[0].mxu0
      %v501 = vadd.f32 %v236, %v500
      %v502 = vpop.f32.mrb[0].mxu0
      %503 = vmatprep.mubr.bf16.mxu0 0
      %504 = vmatmul.mubr.bf16.gmra.mrb[0].mxu0 %v390
      %v505 = vpop.f32.mrb[0].mxu0
      %v506 = vadd.f32 %v236, %v505
      %v507 = vpop.f32.mrb[0].mxu0
      %v508 = vpop.f32.mrb[0].mxu0
      %v509 = vadd.f32 %v236, %v508
      %v510 = vpop.f32.mrb[0].mxu0
      %511 = vmatprep.mubr.bf16.mxu0 0
      %512 = vmatmul.mubr.bf16.gmra.mrb[0].mxu0 %v393
      %v513 = vpop.f32.mrb[0].mxu0
      %v514 = vadd.f32 %v236, %v513
      %v515 = vpop.f32.mrb[0].mxu0
      %v516 = vpop.f32.mrb[0].mxu0
      %v517 = vadd.f32 %v236, %v516
      %v518 = vpop.f32.mrb[0].mxu0
      %519 = vmatprep.mubr.bf16.mxu0 0
      %520 = vmatmul.mubr.bf16.gmra.mrb[0].mxu0 %v396
      %v521 = vpop.f32.mrb[0].mxu0
      %v522 = vadd.f32 %v236, %v521
      %v523 = vpop.f32.mrb[0].mxu0
      %v524 = vpop.f32.mrb[0].mxu0
      %v525 = vadd.f32 %v236, %v524
      %v526 = vpop.f32.mrb[0].mxu0
      %527 = vmatprep.mubr.bf16.mxu0 0
      %528 = vmatmul.mubr.bf16.gmra.mrb[0].mxu0 %v399
      %v529 = vpop.f32.mrb[0].mxu0
      %v530 = vadd.f32 %v236, %v529
      %v531 = vpop.f32.mrb[0].mxu0
      %v532 = vpop.f32.mrb[0].mxu0
      %v533 = vadd.f32 %v236, %v532
      %v534 = vpop.f32.mrb[0].mxu0
      %535 = vmatprep.mubr.bf16.mxu0 0
      %536 = vmatmul.mubr.bf16.gmra.mrb[0].mxu0 %v402
      %v537 = vpop.f32.mrb[0].mxu0
      %v538 = vadd.f32 %v236, %v537
      %v539 = vpop.f32.mrb[0].mxu0
      %v540 = vpop.f32.mrb[0].mxu0
      %v541 = vadd.f32 %v236, %v540
      %v542 = vpop.f32.mrb[0].mxu0
      %543 = vmatprep.mubr.bf16.mxu0 0
      %544 = vmatmul.mubr.bf16.gmra.mrb[0].mxu0 %v405
      %v545 = vpop.f32.mrb[0].mxu0
      %v546 = vadd.f32 %v236, %v545
      %v547 = vpop.f32.mrb[0].mxu0
      %v548 = vpop.f32.mrb[0].mxu0
      %v549 = vadd.f32 %v236, %v548
      %v550 = vpop.f32.mrb[0].mxu0
      %551 = vmatprep.mubr.bf16.mxu0 0
      %552 = vmatmul.mubr.bf16.gmra.mrb[0].mxu0 %v408
      %v553 = vpop.f32.mrb[0].mxu0
      %v554 = vadd.f32 %v236, %v553
      %v555 = vpop.f32.mrb[0].mxu0
      %v556 = vpop.f32.mrb[0].mxu0
      %v557 = vadd.f32 %v236, %v556
      %v558 = vpop.f32.mrb[0].mxu0
      %559 = vmatprep.mubr.bf16.mxu0 0
      %560 = vmatmul.mubr.bf16.gmra.mrb[0].mxu0 %v411
      %v561 = vpop.f32.mrb[0].mxu0
      %v562 = vadd.f32 %v236, %v561
      %v563 = vpop.f32.mrb[0].mxu0
      %v564 = vpop.f32.mrb[0].mxu0
      %v565 = vadd.f32 %v236, %v564
      %v566 = vpop.f32.mrb[0].mxu0
      %567 = vmatprep.mubr.bf16.mxu0 0
      %568 = vmatmul.mubr.bf16.gmra.mrb[0].mxu0 %v414
      %v569 = vpop.f32.mrb[0].mxu0
      %v570 = vadd.f32 %v236, %v569
      %v571 = vpop.f32.mrb[0].mxu0
      %v572 = vpop.f32.mrb[0].mxu0
      %v573 = vadd.f32 %v236, %v572
      %v574 = vpop.f32.mrb[0].mxu0
      %575 = vmatprep.mubr.bf16.mxu0 0
      %576 = vmatmul.mubr.bf16.gmra.mrb[0].mxu0 %v417
      %v577 = vpop.f32.mrb[0].mxu0
      %v578 = vadd.f32 %v236, %v577
      %v579 = vpop.f32.mrb[0].mxu0
      %v580 = vpop.f32.mrb[0].mxu0
      %v581 = vadd.f32 %v236, %v580
      %v582 = vpop.f32.mrb[0].mxu0
      %583 = vmatprep.mubr.bf16.mxu0 0
      %584 = vmatmul.mubr.bf16.gmra.mrb[0].mxu0 %v420
      %v585 = vpop.f32.mrb[0].mxu0
      %v586 = vadd.f32 %v236, %v585
      %v587 = vpop.f32.mrb[0].mxu0
      %v588 = vpop.f32.mrb[0].mxu0
      %v589 = vadd.f32 %v236, %v588
      %v590 = vpop.f32.mrb[0].mxu0
      %591 = vmatprep.mubr.bf16.mxu0 0
      %592 = vmatmul.mubr.bf16.gmra.mrb[0].mxu0 %v423
      %v593 = vpop.f32.mrb[0].mxu0
      %v594 = vadd.f32 %v236, %v593
      %v595 = vpop.f32.mrb[0].mxu0
      %v596 = vpop.f32.mrb[0].mxu0
      %v597 = vadd.f32 %v236, %v596
      %v598 = vpop.f32.mrb[0].mxu0
      %599 = vmatprep.mubr.bf16.mxu0 0
      %600 = vmatmul.mubr.bf16.gmra.mrb[0].mxu0 %v426
      %v601 = vpop.f32.mrb[0].mxu0
      %v602 = vadd.f32 %v236, %v601
      %v603 = vpop.f32.mrb[0].mxu0
      %v604 = vpop.f32.mrb[0].mxu0
      %v605 = vadd.f32 %v236, %v604
      %v606 = vpop.f32.mrb[0].mxu0
      %607 = vmatprep.mubr.bf16.mxu0 0
      %608 = vmatmul.mubr.bf16.gmra.mrb[0].mxu0 %v429
      %v609 = vpop.f32.mrb[0].mxu0
      %v610 = vadd.f32 %v236, %v609
      %v611 = vpop.f32.mrb[0].mxu0
      %v612 = vpop.f32.mrb[0].mxu0
      %v613 = vadd.f32 %v236, %v612
      %v614 = vpop.f32.mrb[0].mxu0
      %615 = vmatprep.mubr.bf16.mxu0 0
      %616 = vmatmul.mubr.bf16.gmra.mrb[0].mxu0 %v432
      %v617 = vpop.f32.mrb[0].mxu0
      %v618 = vadd.f32 %v236, %v617
      %v619 = vpop.f32.mrb[0].mxu0
      %v620 = vpop.f32.mrb[0].mxu0
      %v621 = vadd.f32 %v236, %v620
      %v622 = vpop.f32.mrb[0].mxu0
      %623 = vmatprep.mubr.bf16.mxu0 0
      %624 = vmatmul.mubr.bf16.gmra.mrb[0].mxu0 %v435
      %v625 = vpop.f32.mrb[0].mxu0
      %v626 = vadd.f32 %v236, %v625
      %v627 = vpop.f32.mrb[0].mxu0
      %v628 = vpop.f32.mrb[0].mxu0
      %v629 = vadd.f32 %v236, %v628
      %v630 = vpop.f32.mrb[0].mxu0
      %631 = vmatprep.mubr.bf16.mxu0 0
      %632 = vmatmul.mubr.bf16.gmra.mrb[0].mxu0 %v438
      %v633 = vpop.f32.mrb[0].mxu0
      %v634 = vadd.f32 %v236, %v633
      %v635 = vpop.f32.mrb[0].mxu0
      %v636 = vpop.f32.mrb[0].mxu0
      %v637 = vadd.f32 %v236, %v636
      %v638 = vpop.f32.mrb[0].mxu0
      %639 = vmatprep.mubr.bf16.mxu0 0
      %640 = vmatmul.mubr.bf16.gmra.mrb[0].mxu0 %v441
      %v641 = vpop.f32.mrb[0].mxu0
      %v642 = vadd.f32 %v236, %v641
      %v643 = vpop.f32.mrb[0].mxu0
      %v644 = vpop.f32.mrb[0].mxu0
      %v645 = vadd.f32 %v236, %v644
      %v646 = vpop.f32.mrb[0].mxu0
      %647 = vmatprep.mubr.bf16.mxu0 0
      %648 = vmatmul.mubr.bf16.gmra.mrb[0].mxu0 %v444
      %v649 = vpop.f32.mrb[0].mxu0
      %v650 = vadd.f32 %v236, %v649
      %v651 = vpop.f32.mrb[0].mxu0
      %v652 = vpop.f32.mrb[0].mxu0
      %v653 = vadd.f32 %v236, %v652
      %v654 = vpop.f32.mrb[0].mxu0
      %655 = vmatprep.mubr.bf16.mxu0 0
      %656 = vmatmul.mubr.bf16.gmra.mrb[0].mxu0 %v447
      %v657 = vpop.f32.mrb[0].mxu0
      %v658 = vadd.f32 %v236, %v657
      %v659 = vpop.f32.mrb[0].mxu0
      %v660 = vpop.f32.mrb[0].mxu0
      %v661 = vadd.f32 %v236, %v660
      %v662 = vpop.f32.mrb[0].mxu0
      %663 = vmatprep.mubr.bf16.mxu0 0
      %664 = vmatmul.mubr.bf16.gmra.mrb[0].mxu0 %v450
      %v665 = vpop.f32.mrb[0].mxu0
      %v666 = vadd.f32 %v236, %v665
      %v667 = vpop.f32.mrb[0].mxu0
      %v668 = vpop.f32.mrb[0].mxu0
      %v669 = vadd.f32 %v236, %v668
      %v670 = vpop.f32.mrb[0].mxu0
      %671 = vmatprep.mubr.bf16.mxu0 0
      %672 = vmatmul.mubr.bf16.gmra.mrb[0].mxu0 %v453
      %v673 = vpop.f32.mrb[0].mxu0
      %v674 = vadd.f32 %v236, %v673
      %v675 = vpop.f32.mrb[0].mxu0
      %v676 = vpop.f32.mrb[0].mxu0
      %v677 = vadd.f32 %v236, %v676
      %v678 = vpop.f32.mrb[0].mxu0
      %679 = vdwg.mxu0
      %vm680 = vcmp.gt.f32.partialorder %v490, 0.0
      %vm681 = vcmp.gt.f32.partialorder %v493, 0.0
      %vm682 = vcmp.gt.f32.partialorder %v498, 0.0
      %vm683 = vcmp.gt.f32.partialorder %v501, 0.0
      %vm684 = vcmp.gt.f32.partialorder %v506, 0.0
      %vm685 = vcmp.gt.f32.partialorder %v509, 0.0
      %vm686 = vcmp.gt.f32.partialorder %v514, 0.0
      %vm687 = vcmp.gt.f32.partialorder %v517, 0.0
      %vm688 = vcmp.gt.f32.partialorder %v522, 0.0
      %vm689 = vcmp.gt.f32.partialorder %v525, 0.0
      %vm690 = vcmp.gt.f32.partialorder %v530, 0.0
      %vm691 = vcmp.gt.f32.partialorder %v533, 0.0
      %vm692 = vcmp.gt.f32.partialorder %v538, 0.0
      %vm693 = vcmp.gt.f32.partialorder %v541, 0.0
      %vm694 = vcmp.gt.f32.partialorder %v546, 0.0
      %vm695 = vcmp.gt.f32.partialorder %v549, 0.0
      %vm696 = vcmp.gt.f32.partialorder %v554, 0.0
      %vm697 = vcmp.gt.f32.partialorder %v557, 0.0
      %vm698 = vcmp.gt.f32.partialorder %v562, 0.0
      %vm699 = vcmp.gt.f32.partialorder %v565, 0.0
      %vm700 = vcmp.gt.f32.partialorder %v570, 0.0
      %vm701 = vcmp.gt.f32.partialorder %v573, 0.0
      %vm702 = vcmp.gt.f32.partialorder %v578, 0.0
      %vm703 = vcmp.gt.f32.partialorder %v581, 0.0
      %vm704 = vcmp.gt.f32.partialorder %v586, 0.0
      %vm705 = vcmp.gt.f32.partialorder %v589, 0.0
      %vm706 = vcmp.gt.f32.partialorder %v594, 0.0
      %vm707 = vcmp.gt.f32.partialorder %v597, 0.0
      %vm708 = vcmp.gt.f32.partialorder %v602, 0.0
      %vm709 = vcmp.gt.f32.partialorder %v605, 0.0
      %vm710 = vcmp.gt.f32.partialorder %v610, 0.0
      %vm711 = vcmp.gt.f32.partialorder %v613, 0.0
      %vm712 = vcmp.gt.f32.partialorder %v618, 0.0
      %vm713 = vcmp.gt.f32.partialorder %v621, 0.0
      %vm714 = vcmp.gt.f32.partialorder %v626, 0.0
      %vm715 = vcmp.gt.f32.partialorder %v629, 0.0
      %vm716 = vcmp.gt.f32.partialorder %v634, 0.0
      %vm717 = vcmp.gt.f32.partialorder %v637, 0.0
      %vm718 = vcmp.gt.f32.partialorder %v642, 0.0
      %vm719 = vcmp.gt.f32.partialorder %v645, 0.0
      %vm720 = vcmp.gt.f32.partialorder %v650, 0.0
      %vm721 = vcmp.gt.f32.partialorder %v653, 0.0
      %vm722 = vcmp.gt.f32.partialorder %v658, 0.0
      %vm723 = vcmp.gt.f32.partialorder %v661, 0.0
      %vm724 = vcmp.gt.f32.partialorder %v666, 0.0
      %vm725 = vcmp.gt.f32.partialorder %v669, 0.0
      %vm726 = vcmp.gt.f32.partialorder %v674, 0.0
      %vm727 = vcmp.gt.f32.partialorder %v677, 0.0
      %v728 = vmul.f32 %v490, 0.2
      %v729 = vmul.f32 %v493, 0.2
      %v730 = vmul.f32 %v498, 0.2
      %v731 = vmul.f32 %v501, 0.2
      %v732 = vmul.f32 %v506, 0.2
      %v733 = vmul.f32 %v509, 0.2
      %v734 = vmul.f32 %v514, 0.2
      %v735 = vmul.f32 %v517, 0.2
      %v736 = vmul.f32 %v522, 0.2
      %v737 = vmul.f32 %v525, 0.2
      %v738 = vmul.f32 %v530, 0.2
      %v739 = vmul.f32 %v533, 0.2
      %v740 = vmul.f32 %v538, 0.2
      %v741 = vmul.f32 %v541, 0.2
      %v742 = vmul.f32 %v546, 0.2
      %v743 = vmul.f32 %v549, 0.2
      %v744 = vmul.f32 %v554, 0.2
      %v745 = vmul.f32 %v557, 0.2
      %v746 = vmul.f32 %v562, 0.2
      %v747 = vmul.f32 %v565, 0.2
      %v748 = vmul.f32 %v570, 0.2
      %v749 = vmul.f32 %v573, 0.2
      %v750 = vmul.f32 %v578, 0.2
      %v751 = vmul.f32 %v581, 0.2
      %v752 = vmul.f32 %v586, 0.2
      %v753 = vmul.f32 %v589, 0.2
      %v754 = vmul.f32 %v594, 0.2
      %v755 = vmul.f32 %v597, 0.2
      %v756 = vmul.f32 %v602, 0.2
      %v757 = vmul.f32 %v605, 0.2
      %v758 = vmul.f32 %v610, 0.2
      %v759 = vmul.f32 %v613, 0.2
      %v760 = vmul.f32 %v618, 0.2
      %v761 = vmul.f32 %v621, 0.2
      %v762 = vmul.f32 %v626, 0.2
      %v763 = vmul.f32 %v629, 0.2
      %v764 = vmul.f32 %v634, 0.2
      %v765 = vmul.f32 %v637, 0.2
      %v766 = vmul.f32 %v642, 0.2
      %v767 = vmul.f32 %v645, 0.2
      %v768 = vmul.f32 %v650, 0.2
      %v769 = vmul.f32 %v653, 0.2
      %v770 = vmul.f32 %v658, 0.2
      %v771 = vmul.f32 %v661, 0.2
      %v772 = vmul.f32 %v666, 0.2
      %v773 = vmul.f32 %v669, 0.2
      %v774 = vmul.f32 %v674, 0.2
      %v775 = vmul.f32 %v677, 0.2
      %v776 = vsel %vm680, %v490, %v728
      %v777 = vsel %vm681, %v493, %v729
      %v778 = vsel %vm682, %v498, %v730
      %v779 = vsel %vm683, %v501, %v731
      %v780 = vsel %vm684, %v506, %v732
      %v781 = vsel %vm685, %v509, %v733
      %v782 = vsel %vm686, %v514, %v734
      %v783 = vsel %vm687, %v517, %v735
      %v784 = vsel %vm688, %v522, %v736
      %v785 = vsel %vm689, %v525, %v737
      %v786 = vsel %vm690, %v530, %v738
      %v787 = vsel %vm691, %v533, %v739
      %v788 = vsel %vm692, %v538, %v740
      %v789 = vsel %vm693, %v541, %v741
      %v790 = vsel %vm694, %v546, %v742
      %v791 = vsel %vm695, %v549, %v743
      %v792 = vsel %vm696, %v554, %v744
      %v793 = vsel %vm697, %v557, %v745
      %v794 = vsel %vm698, %v562, %v746
      %v795 = vsel %vm699, %v565, %v747
      %v796 = vsel %vm700, %v570, %v748
      %v797 = vsel %vm701, %v573, %v749
      %v798 = vsel %vm702, %v578, %v750
      %v799 = vsel %vm703, %v581, %v751
      %v800 = vsel %vm704, %v586, %v752
      %v801 = vsel %vm705, %v589, %v753
      %v802 = vsel %vm706, %v594, %v754
      %v803 = vsel %vm707, %v597, %v755
      %v804 = vsel %vm708, %v602, %v756
      %v805 = vsel %vm709, %v605, %v757
      %v806 = vsel %vm710, %v610, %v758
      %v807 = vsel %vm711, %v613, %v759
      %v808 = vsel %vm712, %v618, %v760
      %v809 = vsel %vm713, %v621, %v761
      %v810 = vsel %vm714, %v626, %v762
      %v811 = vsel %vm715, %v629, %v763
      %v812 = vsel %vm716, %v634, %v764
      %v813 = vsel %vm717, %v637, %v765
      %v814 = vsel %vm718, %v642, %v766
      %v815 = vsel %vm719, %v645, %v767
      %v816 = vsel %vm720, %v650, %v768
      %v817 = vsel %vm721, %v653, %v769
      %v818 = vsel %vm722, %v658, %v770
      %v819 = vsel %vm723, %v661, %v771
      %v820 = vsel %vm724, %v666, %v772
      %v821 = vsel %vm725, %v669, %v773
      %v822 = vsel %vm726, %v674, %v774
      %v823 = vsel %vm727, %v677, %v775
      %v824 = vpack.c.bf16 %v777, %v776
      %v825 = vpack.c.bf16 %v779, %v778
      %v826 = vpack.c.bf16 %v781, %v780
      %v827 = vpack.c.bf16 %v783, %v782
      %v828 = vpack.c.bf16 %v785, %v784
      %v829 = vpack.c.bf16 %v787, %v786
      %v830 = vpack.c.bf16 %v789, %v788
      %v831 = vpack.c.bf16 %v791, %v790
      %v832 = vpack.c.bf16 %v793, %v792
      %v833 = vpack.c.bf16 %v795, %v794
      %v834 = vpack.c.bf16 %v797, %v796
      %v835 = vpack.c.bf16 %v799, %v798
      %v836 = vpack.c.bf16 %v801, %v800
      %v837 = vpack.c.bf16 %v803, %v802
      %v838 = vpack.c.bf16 %v805, %v804
      %v839 = vpack.c.bf16 %v807, %v806
      %v840 = vpack.c.bf16 %v809, %v808
      %v841 = vpack.c.bf16 %v811, %v810
      %v842 = vpack.c.bf16 %v813, %v812
      %v843 = vpack.c.bf16 %v815, %v814
      %v844 = vpack.c.bf16 %v817, %v816
      %v845 = vpack.c.bf16 %v819, %v818
      %v846 = vpack.c.bf16 %v821, %v820
      %v847 = vpack.c.bf16 %v823, %v822
      %v872 = vunpack.c.l.b16 %v824
      %v873 = vunpack.c.h.b16 %v824
      %v874 = vunpack.c.l.b16 %v825
      %v875 = vunpack.c.h.b16 %v825
      %v876 = vunpack.c.l.b16 %v826
      %v877 = vunpack.c.h.b16 %v826
      %v878 = vunpack.c.l.b16 %v827
      %v879 = vunpack.c.h.b16 %v827
      %v880 = vunpack.c.l.b16 %v828
      %v881 = vunpack.c.h.b16 %v828
      %v882 = vunpack.c.l.b16 %v829
      %v883 = vunpack.c.h.b16 %v829
      %v884 = vunpack.c.l.b16 %v830
      %v885 = vunpack.c.h.b16 %v830
      %v886 = vunpack.c.l.b16 %v831
      %v887 = vunpack.c.h.b16 %v831
      %v888 = vunpack.c.l.b16 %v832
      %v889 = vunpack.c.h.b16 %v832
      %v890 = vunpack.c.l.b16 %v833
      %v891 = vunpack.c.h.b16 %v833
      %v892 = vunpack.c.l.b16 %v834
      %v893 = vunpack.c.h.b16 %v834
      %v894 = vunpack.c.l.b16 %v835
      %v895 = vunpack.c.h.b16 %v835
      %v896 = vunpack.c.l.b16 %v836
      %v897 = vunpack.c.h.b16 %v836
      %v898 = vunpack.c.l.b16 %v837
      %v899 = vunpack.c.h.b16 %v837
      %v900 = vunpack.c.l.b16 %v838
      %v901 = vunpack.c.h.b16 %v838
      %v902 = vunpack.c.l.b16 %v839
      %v903 = vunpack.c.h.b16 %v839
      %v904 = vunpack.c.l.b16 %v840
      %v905 = vunpack.c.h.b16 %v840
      %v906 = vunpack.c.l.b16 %v841
      %v907 = vunpack.c.h.b16 %v841
      %v908 = vunpack.c.l.b16 %v842
      %v909 = vunpack.c.h.b16 %v842
      %v910 = vunpack.c.l.b16 %v843
      %v911 = vunpack.c.h.b16 %v843
      %v912 = vunpack.c.l.b16 %v844
      %v913 = vunpack.c.h.b16 %v844
      %v914 = vunpack.c.l.b16 %v845
      %v915 = vunpack.c.h.b16 %v845
      %v916 = vunpack.c.l.b16 %v846
      %v917 = vunpack.c.h.b16 %v846
      %v918 = vunpack.c.l.b16 %v847
      %v919 = vunpack.c.h.b16 %v847
      %v920 = vpack.c.b16 %v872, %v872
      %v921 = vpack.c.b16 %v873, %v873
      %v922 = vpack.c.b16 %v874, %v874
      %v923 = vpack.c.b16 %v875, %v875
      %v924 = vpack.c.b16 %v876, %v876
      %v925 = vpack.c.b16 %v877, %v877
      %v926 = vpack.c.b16 %v878, %v878
      %v927 = vpack.c.b16 %v879, %v879
      %v928 = vpack.c.b16 %v880, %v880
      %v929 = vpack.c.b16 %v881, %v881
      %v930 = vpack.c.b16 %v882, %v882
      %v931 = vpack.c.b16 %v883, %v883
      %v932 = vpack.c.b16 %v884, %v884
      %v933 = vpack.c.b16 %v885, %v885
      %v934 = vpack.c.b16 %v886, %v886
      %v935 = vpack.c.b16 %v887, %v887
      %v936 = vpack.c.b16 %v888, %v888
      %v937 = vpack.c.b16 %v889, %v889
      %v938 = vpack.c.b16 %v890, %v890
      %v939 = vpack.c.b16 %v891, %v891
      %v940 = vpack.c.b16 %v892, %v892
      %v941 = vpack.c.b16 %v893, %v893
      %v942 = vpack.c.b16 %v894, %v894
      %v943 = vpack.c.b16 %v895, %v895
      %v944 = vpack.c.b16 %v896, %v896
      %v945 = vpack.c.b16 %v897, %v897
      %v946 = vpack.c.b16 %v898, %v898
      %v947 = vpack.c.b16 %v899, %v899
      %v948 = vpack.c.b16 %v900, %v900
      %v949 = vpack.c.b16 %v901, %v901
      %v950 = vpack.c.b16 %v902, %v902
      %v951 = vpack.c.b16 %v903, %v903
      %v952 = vpack.c.b16 %v904, %v904
      %v953 = vpack.c.b16 %v905, %v905
      %v954 = vpack.c.b16 %v906, %v906
      %v955 = vpack.c.b16 %v907, %v907
      %v956 = vpack.c.b16 %v908, %v908
      %v957 = vpack.c.b16 %v909, %v909
      %v958 = vpack.c.b16 %v910, %v910
      %v959 = vpack.c.b16 %v911, %v911
      %v960 = vpack.c.b16 %v912, %v912
      %v961 = vpack.c.b16 %v913, %v913
      %v962 = vpack.c.b16 %v914, %v914
      %v963 = vpack.c.b16 %v915, %v915
      %v964 = vpack.c.b16 %v916, %v916
      %v965 = vpack.c.b16 %v917, %v917
      %v966 = vpack.c.b16 %v918, %v918
      %v967 = vpack.c.b16 %v919, %v919
      %1016 = vst [vmem:[%s172] sm:$0xf] %v920
      %1017 = vst [vmem:[%s172 + $0x4] sm:$0xf] %v921
      %1018 = vst [vmem:[%s172 + $0x8] sm:$0xf] %v922
      %1019 = vst [vmem:[%s172 + $0xc] sm:$0xf] %v923
      %1020 = vst [vmem:[%s172 + $0x10] sm:$0xf] %v924
      %1021 = vst [vmem:[%s172 + $0x14] sm:$0xf] %v925
      %1022 = vst [vmem:[%s172 + $0x18] sm:$0xf] %v926
      %1023 = vst [vmem:[%s172 + $0x1c] sm:$0xf] %v927
      %1024 = vst [vmem:[%s172 + $0x20] sm:$0xf] %v928
      %1025 = vst [vmem:[%s172 + $0x24] sm:$0xf] %v929
      %1026 = vst [vmem:[%s172 + $0x28] sm:$0xf] %v930
      %1027 = vst [vmem:[%s172 + $0x2c] sm:$0xf] %v931
      %1028 = vst [vmem:[%s172 + $0x30] sm:$0xf] %v932
      %1029 = vst [vmem:[%s172 + $0x34] sm:$0xf] %v933
      %1030 = vst [vmem:[%s172 + $0x38] sm:$0xf] %v934
      %1031 = vst [vmem:[%s172 + $0x3c] sm:$0xf] %v935
      %1032 = vst [vmem:[%s172 + $0x40] sm:$0xf] %v936
      %1033 = vst [vmem:[%s172 + $0x44] sm:$0xf] %v937
      %1034 = vst [vmem:[%s172 + $0x48] sm:$0xf] %v938
      %1035 = vst [vmem:[%s172 + $0x4c] sm:$0xf] %v939
      %1036 = vst [vmem:[%s172 + $0x50] sm:$0xf] %v940
      %1037 = vst [vmem:[%s172 + $0x54] sm:$0xf] %v941
      %1038 = vst [vmem:[%s172 + $0x58] sm:$0xf] %v942
      %1039 = vst [vmem:[%s172 + $0x5c] sm:$0xf] %v943
      %1040 = vst [vmem:[%s172 + $0x60] sm:$0xf] %v944
      %1041 = vst [vmem:[%s172 + $0x64] sm:$0xf] %v945
      %1042 = vst [vmem:[%s172 + $0x68] sm:$0xf] %v946
      %1043 = vst [vmem:[%s172 + $0x6c] sm:$0xf] %v947
      %1044 = vst [vmem:[%s172 + $0x70] sm:$0xf] %v948
      %1045 = vst [vmem:[%s172 + $0x74] sm:$0xf] %v949
      %1046 = vst [vmem:[%s172 + $0x78] sm:$0xf] %v950
      %1047 = vst [vmem:[%s172 + $0x7c] sm:$0xf] %v951
      %1048 = vst [vmem:[%s172 + $0x80] sm:$0xf] %v952
      %1049 = vst [vmem:[%s172 + $0x84] sm:$0xf] %v953
      %1050 = vst [vmem:[%s172 + $0x88] sm:$0xf] %v954
      %1051 = vst [vmem:[%s172 + $0x8c] sm:$0xf] %v955
      %1052 = vst [vmem:[%s172 + $0x90] sm:$0xf] %v956
      %1053 = vst [vmem:[%s172 + $0x94] sm:$0xf] %v957
      %1054 = vst [vmem:[%s172 + $0x98] sm:$0xf] %v958
      %1055 = vst [vmem:[%s172 + $0x9c] sm:$0xf] %v959
      %1056 = vst [vmem:[%s172 + $0xa0] sm:$0xf] %v960
      %1057 = vst [vmem:[%s172 + $0xa4] sm:$0xf] %v961
      %1058 = vst [vmem:[%s172 + $0xa8] sm:$0xf] %v962
      %1059 = vst [vmem:[%s172 + $0xac] sm:$0xf] %v963
      %1060 = vst [vmem:[%s172 + $0xb0] sm:$0xf] %v964
      %1061 = vst [vmem:[%s172 + $0xb4] sm:$0xf] %v965
      %1062 = vst [vmem:[%s172 + $0xb8] sm:$0xf] %v966
      %1063 = vst [vmem:[%s172 + $0xbc] sm:$0xf] %v967
      %s1064 = smul.u32 48, %s14
      %p1065 = scmp.lt.s32.totalorder %s1064, 239
      %s1066 = scalar_select %p1065, %s1064, 239
      %s1067 = smul.addr %s1066, 4
      %s1068 = scalar_lea.vmem %s3, %s1067
      // Predicated region
      $region33: #{_lambda_.6} parent=31 // pred_check
        %p1069 = pneg %p100
      $region34: #{_lambda_.6} parent=31 // pred_check_branch
        %1071 = sbr.rel (%p1069) target = $region36
      $region35: #{_lambda_.6} parent=31 // pred_region
        %s1072 = smul.u32 48, %s14
      $region36: #{_lambda_.6} parent=31 // pred_fallthru
        _
    $region32: #{_lambda_.6} parent=5 // pred_fallthru
      _
    %p1073 = scmp.le.s32.totalorder 2, %s9
    // Predicated region
    $region37: #{_lambda_.6} parent=5 // pred_check
      %p1074 = pneg %p1073
    $region38: #{_lambda_.6} parent=5 // pred_check_branch
      %1076 = sbr.rel (%p1074) target = $region40
    $region39: #{_lambda_.6} parent=5 // pred_region
      %s1077 = ssub.s32 %s9, 2
      // Predicated region
      $region41: #{_lambda_.6} parent=39 // pred_check
        %p1078 = pneg %p106
      $region42: #{_lambda_.6} parent=39 // pred_check_branch
        %1080 = sbr.rel (%p1078) target = $region44
      $region43: #{_lambda_.6} parent=39 // pred_region
        %s1081 = smul.u32 48, %s15
        %p1082 = scmp.lt.s32.totalorder %s1081, 239
        %s1083 = scalar_select %p1082, %s1081, 239
        %s1084 = smul.addr %s1083, 4
        %s1085 = scalar_lea.vmem %s3, %s1084
      $region44: #{_lambda_.6} parent=39 // pred_fallthru
        _
    $region40: #{_lambda_.6} parent=5 // pred_fallthru
      _
  $region6: #{_lambda_.6} parent=0 // loop_footer
    %s13 = sadd.s32 1, %s9
  $region7: #{_lambda_.6} parent=0 // loop_footer_branch
    %8 = sbr.rel target = $region3
  $region8: #{_lambda_.6} parent=0 // loop_exit
    _

// kernel: _lambda_.7
$region0: #{_lambda_.7}
  #allocation0 [shape = 'u32[]', space=smem, size = 0x4, offset = 0x4, fixed_abs, tag = 'smem constant byte address 0x4 - core index']
  #allocation1 [shape = 'u32[144,128]{1,0:T(1,128)}', space=vmem, size = 0x12000, scoped, tag = 'internal scratch']
  %s0 = inlined_call_operand.vmem [shape: bf16[7296,392], index: 0, kind: input, shape index: {}]
  %s1 = inlined_call_operand.vmem [shape: bf16[392,128], index: 1, kind: input, shape index: {}]
  %s2 = inlined_call_operand.vmem [shape: f32[1,128], index: 2, kind: input, shape index: {}]
  %s3 = inlined_call_operand.vmem [shape: f32[7296,128], index: 3, kind: output, shape index: {}]
  %s4 = sld [smem:[#allocation0]]
  $region45: #{_lambda_.7} parent=0
    _
  %s6 = ssub.s32 1, %s4
  %s7 = scalar_select 0, %s6, %s4
  loop: start=0, step=1, limit=21
  $region2: #{_lambda_.7} parent=0 // loop_pre_header
    _
  $region3: #{_lambda_.7} parent=0 // loop_header
    %s9 = sphi 0, %s13
    %p10 = scmp.ge.s32.totalorder %s9, 21
    %s19 = sphi 0, %s21
    %s22 = sphi 0, %s19
    %s23 = sphi 0, %s22
    %s39 = sphi 0, %s23
    %s43 = sphi 0, %s43
    %s45 = sphi 0, %s43
    %s46 = sphi 0, %s45
    %s60 = sphi 0, %s46
    %s64 = sphi 0, %s64
    %s66 = sphi 0, %s64
    %s67 = sphi 0, %s66
    %s81 = sphi 0, %s67
    %s87 = sphi 0, %s89
    %s90 = sphi 0, %s87
    %s91 = sphi 0, %s90
    %s107 = sphi 0, %s91
  $region4: #{_lambda_.7} parent=0 // loop_header_branch
    %12 = sbr.rel (%p10) target = $region8
  $region5: #{_lambda_.7} parent=0 // loop_body
    %s14 = ssub.s32 %s9, 1
    %s15 = ssub.s32 %s9, 2
    %s16 = sadd.s32 %s9, 1
    %s17 = ssub.s32 %s9, %s16
    %p18 = scmp.eq.s32.totalorder %s17, 0
    %s20 = sadd.s32 %s19, 1
    %s21 = scalar_select %p18, %s19, %s20
    %p24 = pneg %p18
    %p25 = scmp.eq.s32.totalorder %s9, 18
    %p26 = por %p24, %p25
    %p27 = scmp.ne.s32.totalorder %s19, %s22
    %p28 = scmp.eq.s32.totalorder %s9, 0
    %p29 = por %p27, %p28
    %p30 = scmp.ne.s32.totalorder %s19, %s22
    %p31 = scmp.eq.s32.totalorder %s14, 18
    %p32 = por %p30, %p31
    %p33 = scmp.ne.s32.totalorder %s22, %s23
    %p34 = scmp.eq.s32.totalorder %s14, 0
    %p35 = por %p33, %p34
    %p36 = scmp.ne.s32.totalorder %s22, %s23
    %p37 = scmp.eq.s32.totalorder %s15, 18
    %p38 = por %p36, %p37
    %p40 = scmp.ne.s32.totalorder %s23, %s39
    %p41 = scmp.eq.s32.totalorder %s15, 0
    %p42 = por %p40, %p41
    %s44 = sadd.s32 %s43, 1
    %p47 = scmp.eq.s32.totalorder %s9, 18
    %p48 = scmp.ne.s32.totalorder %s43, %s45
    %p49 = scmp.eq.s32.totalorder %s9, 0
    %p50 = por %p48, %p49
    %p51 = scmp.ne.s32.totalorder %s43, %s45
    %p52 = scmp.eq.s32.totalorder %s14, 18
    %p53 = por %p51, %p52
    %p54 = scmp.ne.s32.totalorder %s45, %s46
    %p55 = scmp.eq.s32.totalorder %s14, 0
    %p56 = por %p54, %p55
    %p57 = scmp.ne.s32.totalorder %s45, %s46
    %p58 = scmp.eq.s32.totalorder %s15, 18
    %p59 = por %p57, %p58
    %p61 = scmp.ne.s32.totalorder %s46, %s60
    %p62 = scmp.eq.s32.totalorder %s15, 0
    %p63 = por %p61, %p62
    %s65 = sadd.s32 %s64, 1
    %p68 = scmp.eq.s32.totalorder %s9, 18
    %p69 = scmp.ne.s32.totalorder %s64, %s66
    %p70 = scmp.eq.s32.totalorder %s9, 0
    %p71 = por %p69, %p70
    %p72 = scmp.ne.s32.totalorder %s64, %s66
    %p73 = scmp.eq.s32.totalorder %s14, 18
    %p74 = por %p72, %p73
    %p75 = scmp.ne.s32.totalorder %s66, %s67
    %p76 = scmp.eq.s32.totalorder %s14, 0
    %p77 = por %p75, %p76
    %p78 = scmp.ne.s32.totalorder %s66, %s67
    %p79 = scmp.eq.s32.totalorder %s15, 18
    %p80 = por %p78, %p79
    %p82 = scmp.ne.s32.totalorder %s67, %s81
    %p83 = scmp.eq.s32.totalorder %s15, 0
    %p84 = por %p82, %p83
    %s85 = ssub.s32 %s9, %s16
    %p86 = scmp.eq.s32.totalorder %s85, 0
    %s88 = sadd.s32 %s87, 1
    %s89 = scalar_select %p86, %s87, %s88
    %p92 = pneg %p86
    %p93 = scmp.eq.s32.totalorder %s9, 18
    %p94 = por %p92, %p93
    %p95 = scmp.ne.s32.totalorder %s87, %s90
    %p96 = scmp.eq.s32.totalorder %s9, 0
    %p97 = por %p95, %p96
    %p98 = scmp.ne.s32.totalorder %s87, %s90
    %p99 = scmp.eq.s32.totalorder %s14, 18
    %p100 = por %p98, %p99
    %p101 = scmp.ne.s32.totalorder %s90, %s91
    %p102 = scmp.eq.s32.totalorder %s14, 0
    %p103 = por %p101, %p102
    %p104 = scmp.ne.s32.totalorder %s90, %s91
    %p105 = scmp.eq.s32.totalorder %s15, 18
    %p106 = por %p104, %p105
    %p108 = scmp.ne.s32.totalorder %s91, %s107
    %p109 = scmp.eq.s32.totalorder %s15, 0
    %p110 = por %p108, %p109
    %p111 = scmp.le.s32.totalorder 1, %s9
    %p112 = scmp.lt.s32.totalorder %s9, 20
    %p113 = pnand %p111, %p112
    %p114 = pneg %p113
    // Predicated region
    $region9: #{_lambda_.7} parent=5 // pred_check
      _
    $region10: #{_lambda_.7} parent=5 // pred_check_branch
      %116 = sbr.rel (%p113) target = $region12
    $region11: #{_lambda_.7} parent=5 // pred_region
      %s117 = ssub.s32 %s9, 1
      // Predicated region
      $region13: #{_lambda_.7} parent=11 // pred_check
        %p118 = pneg %p56
      $region14: #{_lambda_.7} parent=11 // pred_check_branch
        %120 = sbr.rel (%p118) target = $region16
      $region15: #{_lambda_.7} parent=11 // pred_region
        _
      $region16: #{_lambda_.7} parent=11 // pred_fallthru
        _
      // Predicated region
      $region17: #{_lambda_.7} parent=11 // pred_check
        %p121 = pneg %p77
      $region18: #{_lambda_.7} parent=11 // pred_check_branch
        %123 = sbr.rel (%p121) target = $region20
      $region19: #{_lambda_.7} parent=11 // pred_region
        _
      $region20: #{_lambda_.7} parent=11 // pred_fallthru
        _
    $region12: #{_lambda_.7} parent=5 // pred_fallthru
      _
    %p124 = scmp.lt.s32.totalorder %s9, 19
    // Predicated region
    $region21: #{_lambda_.7} parent=5 // pred_check
      %p125 = pneg %p124
    $region22: #{_lambda_.7} parent=5 // pred_check_branch
      %127 = sbr.rel (%p125) target = $region24
    $region23: #{_lambda_.7} parent=5 // pred_region
      // Predicated region
      $region25: #{_lambda_.7} parent=23 // pred_check
        %p128 = pneg %p29
      $region26: #{_lambda_.7} parent=23 // pred_check_branch
        %130 = sbr.rel (%p128) target = $region28
      $region27: #{_lambda_.7} parent=23 // pred_region
        %s131 = smul.u32 48, %s9
        %p132 = scmp.lt.s32.totalorder %s131, 911
        %s133 = scalar_select %p132, %s131, 911
        %s134 = smul.addr %s133, 4
        %s135 = smul.addr %s134, 4
        %s136 = scalar_lea.vmem %s0, %s135
        %s137 = smul.u32 48, %s9
      $region28: #{_lambda_.7} parent=23 // pred_fallthru
        _
    $region24: #{_lambda_.7} parent=5 // pred_fallthru
      _
    %p138 = scmp.le.s32.totalorder 1, %s9
    %p139 = scmp.lt.s32.totalorder %s9, 20
    %p140 = pnand %p138, %p139
    %p141 = pneg %p140
    // Predicated region
    $region29: #{_lambda_.7} parent=5 // pred_check
      _
    $region30: #{_lambda_.7} parent=5 // pred_check_branch
      %143 = sbr.rel (%p140) target = $region32
    $region31: #{_lambda_.7} parent=5 // pred_region
      %s144 = ssub.s32 %s9, 1
      %s145 = smul.u32 48, %s14
      %p146 = scmp.lt.s32.totalorder %s145, 911
      %s147 = scalar_select %p146, %s145, 911
      %s148 = smul.addr %s147, 4
      %s149 = smul.addr %s148, 4
      %s150 = scalar_lea.vmem %s0, %s149
      %p151 = pneg %p35
      %p152 = pneg %p32
      %p153 = pneg %p56
      %p154 = pneg %p53
      %p155 = pneg %p77
      %p156 = pneg %p74
      %p157 = pneg %p103
      %p158 = pneg %p100
      %s159 = smul.u32 48, %s14
      %p160 = scmp.lt.s32.totalorder %s159, 911
      %s161 = scalar_select %p160, %s159, 911
      %s162 = smul.addr %s161, 8
      %s163 = scalar_lea.vmem %s3, %s162
      %s164 = smul.u32 48, %s14
      %p165 = scmp.lt.s32.totalorder %s164, 911
      %s166 = scalar_select %p165, %s164, 911
      %s167 = smul.addr %s166, 4
      %s168 = smul.addr %s167, 4
      %s169 = scalar_lea.vmem %s0, %s168
      %s170 = smul.u32 48, %s14
      %s171 = smul.u32 48, %s14
      %p172 = scmp.lt.s32.totalorder %s171, 911
      %s173 = scalar_select %p172, %s171, 911
      %s174 = smul.addr %s173, 8
      %s175 = scalar_lea.vmem %s3, %s174
      %s176 = smul.u32 48, %s14
      %v178 = vld [vmem:[%s169] sm:$0xff]
      %v179 = vld [vmem:[%s169 + $0x8] sm:$0xff]
      %v180 = vld [vmem:[%s169 + $0x10] sm:$0xff]
      %v181 = vld [vmem:[%s169 + $0x18] sm:$0xff]
      %v182 = vld [vmem:[%s169 + $0x20] sm:$0xff]
      %v183 = vld [vmem:[%s169 + $0x28] sm:$0xff]
      %v184 = vld [vmem:[%s169 + $0x30] sm:$0xff]
      %v185 = vld [vmem:[%s169 + $0x38] sm:$0xff]
      %v186 = vld [vmem:[%s169 + $0x40] sm:$0xff]
      %v187 = vld [vmem:[%s169 + $0x48] sm:$0xff]
      %v188 = vld [vmem:[%s169 + $0x50] sm:$0xff]
      %v189 = vld [vmem:[%s169 + $0x58] sm:$0xff]
      %v190 = vld [vmem:[%s169 + $0x60] sm:$0xff]
      %v191 = vld [vmem:[%s169 + $0x68] sm:$0xff]
      %v192 = vld [vmem:[%s169 + $0x70] sm:$0xff]
      %v193 = vld [vmem:[%s169 + $0x78] sm:$0xff]
      %v194 = vld [vmem:[%s169 + $0x80] sm:$0xff]
      %v195 = vld [vmem:[%s169 + $0x88] sm:$0xff]
      %v196 = vld [vmem:[%s169 + $0x90] sm:$0xff]
      %v197 = vld [vmem:[%s169 + $0x98] sm:$0xff]
      %v198 = vld [vmem:[%s169 + $0xa0] sm:$0xff]
      %v199 = vld [vmem:[%s169 + $0xa8] sm:$0xff]
      %v200 = vld [vmem:[%s169 + $0xb0] sm:$0xff]
      %v201 = vld [vmem:[%s169 + $0xb8] sm:$0xff]
      %v202 = vld [vmem:[%s169 + $0xc0] sm:$0xff]
      %v203 = vld [vmem:[%s169 + $0xc8] sm:$0xff]
      %v204 = vld [vmem:[%s169 + $0xd0] sm:$0xff]
      %v205 = vld [vmem:[%s169 + $0xd8] sm:$0xff]
      %v206 = vld [vmem:[%s169 + $0xe0] sm:$0xff]
      %v207 = vld [vmem:[%s169 + $0xe8] sm:$0xff]
      %v208 = vld [vmem:[%s169 + $0xf0] sm:$0xff]
      %v209 = vld [vmem:[%s169 + $0xf8] sm:$0xff]
      %v210 = vld [vmem:[%s169 + $0x100] sm:$0xff]
      %v211 = vld [vmem:[%s169 + $0x108] sm:$0xff]
      %v212 = vld [vmem:[%s169 + $0x110] sm:$0xff]
      %v213 = vld [vmem:[%s169 + $0x118] sm:$0xff]
      %v214 = vld [vmem:[%s169 + $0x120] sm:$0xff]
      %v215 = vld [vmem:[%s169 + $0x128] sm:$0xff]
      %v216 = vld [vmem:[%s169 + $0x130] sm:$0xff]
      %v217 = vld [vmem:[%s169 + $0x138] sm:$0xff]
      %v218 = vld [vmem:[%s169 + $0x140] sm:$0xff]
      %v219 = vld [vmem:[%s169 + $0x148] sm:$0xff]
      %v220 = vld [vmem:[%s169 + $0x150] sm:$0xff]
      %v221 = vld [vmem:[%s169 + $0x158] sm:$0xff]
      %v222 = vld [vmem:[%s169 + $0x160] sm:$0xff]
      %v223 = vld [vmem:[%s169 + $0x168] sm:$0xff]
      %v224 = vld [vmem:[%s169 + $0x170] sm:$0xff]
      %v225 = vld [vmem:[%s169 + $0x178] sm:$0xff]
      %v226 = vld [vmem:[%s169 + $0x180] sm:$0xff]
      %v227 = vld [vmem:[%s169 + $0x188] sm:$0xff]
      %v228 = vld [vmem:[%s169 + $0x190] sm:$0xff]
      %v229 = vld [vmem:[%s169 + $0x198] sm:$0xff]
      %v230 = vld [vmem:[%s169 + $0x1a0] sm:$0xff]
      %v231 = vld [vmem:[%s169 + $0x1a8] sm:$0xff]
      %v232 = vld [vmem:[%s169 + $0x1b0] sm:$0xff]
      %v233 = vld [vmem:[%s169 + $0x1b8] sm:$0xff]
      %v234 = vld [vmem:[%s169 + $0x1c0] sm:$0xff]
      %v235 = vld [vmem:[%s169 + $0x1c8] sm:$0xff]
      %v236 = vld [vmem:[%s169 + $0x1d0] sm:$0xff]
      %v237 = vld [vmem:[%s169 + $0x1d8] sm:$0xff]
      %v238 = vld [vmem:[%s169 + $0x1e0] sm:$0xff]
      %v239 = vld [vmem:[%s169 + $0x1e8] sm:$0xff]
      %v240 = vld [vmem:[%s169 + $0x1f0] sm:$0xff]
      %v241 = vld [vmem:[%s169 + $0x1f8] sm:$0xff]
      %v242 = vld [vmem:[%s169 + $0x200] sm:$0xff]
      %v243 = vld [vmem:[%s169 + $0x208] sm:$0xff]
      %v244 = vld [vmem:[%s169 + $0x210] sm:$0xff]
      %v245 = vld [vmem:[%s169 + $0x218] sm:$0xff]
      %v246 = vld [vmem:[%s169 + $0x220] sm:$0xff]
      %v247 = vld [vmem:[%s169 + $0x228] sm:$0xff]
      %v248 = vld [vmem:[%s169 + $0x230] sm:$0xff]
      %v249 = vld [vmem:[%s169 + $0x238] sm:$0xff]
      %v250 = vld [vmem:[%s169 + $0x240] sm:$0xff]
      %v251 = vld [vmem:[%s169 + $0x248] sm:$0xff]
      %v252 = vld [vmem:[%s169 + $0x250] sm:$0xff]
      %v253 = vld [vmem:[%s169 + $0x258] sm:$0xff]
      %v254 = vld [vmem:[%s169 + $0x260] sm:$0xff]
      %v255 = vld [vmem:[%s169 + $0x268] sm:$0xff]
      %v256 = vld [vmem:[%s169 + $0x270] sm:$0xff]
      %v257 = vld [vmem:[%s169 + $0x278] sm:$0xff]
      %v258 = vld [vmem:[%s169 + $0x280] sm:$0xff]
      %v259 = vld [vmem:[%s169 + $0x288] sm:$0xff]
      %v260 = vld [vmem:[%s169 + $0x290] sm:$0xff]
      %v261 = vld [vmem:[%s169 + $0x298] sm:$0xff]
      %v262 = vld [vmem:[%s169 + $0x2a0] sm:$0xff]
      %v263 = vld [vmem:[%s169 + $0x2a8] sm:$0xff]
      %v264 = vld [vmem:[%s169 + $0x2b0] sm:$0xff]
      %v265 = vld [vmem:[%s169 + $0x2b8] sm:$0xff]
      %v266 = vld [vmem:[%s169 + $0x2c0] sm:$0xff]
      %v267 = vld [vmem:[%s169 + $0x2c8] sm:$0xff]
      %v268 = vld [vmem:[%s169 + $0x2d0] sm:$0xff]
      %v269 = vld [vmem:[%s169 + $0x2d8] sm:$0xff]
      %v270 = vld [vmem:[%s169 + $0x2e0] sm:$0xff]
      %v271 = vld [vmem:[%s169 + $0x2e8] sm:$0xff]
      %v272 = vld [vmem:[%s169 + $0x2f0] sm:$0xff]
      %v273 = vld [vmem:[%s169 + $0x2f8] sm:$0xff]
      %v274 = vld [vmem:[%s1] sm:$0xf]
      %v275 = vld [vmem:[%s1 + $0x4] sm:$0xf]
      %v276 = vld [vmem:[%s1 + $0x8] sm:$0xf]
      %v277 = vld [vmem:[%s1 + $0xc] sm:$0xf]
      %v278 = vld [vmem:[%s1 + $0x10] sm:$0xf]
      %v279 = vld [vmem:[%s1 + $0x14] sm:$0xf]
      %v280 = vld [vmem:[%s1 + $0x18] sm:$0xf]
      %v281 = vld [vmem:[%s1 + $0x1c] sm:$0xf]
      %v282 = vld [vmem:[%s1 + $0x20] sm:$0xf]
      %v283 = vld [vmem:[%s1 + $0x24] sm:$0xf]
      %v284 = vld [vmem:[%s1 + $0x28] sm:$0xf]
      %v285 = vld [vmem:[%s1 + $0x2c] sm:$0xf]
      %v286 = vld [vmem:[%s1 + $0x30] sm:$0xf]
      %v287 = vld [vmem:[%s1 + $0x34] sm:$0xf]
      %v288 = vld [vmem:[%s1 + $0x38] sm:$0xf]
      %v289 = vld [vmem:[%s1 + $0x3c] sm:$0xf]
      %v290 = vld [vmem:[%s1 + $0x40] sm:$0xf]
      %v291 = vld [vmem:[%s1 + $0x44] sm:$0xf]
      %v292 = vld [vmem:[%s1 + $0x48] sm:$0xf]
      %v293 = vld [vmem:[%s1 + $0x4c] sm:$0xf]
      %v294 = vld [vmem:[%s1 + $0x50] sm:$0xf]
      %v295 = vld [vmem:[%s1 + $0x54] sm:$0xf]
      %v296 = vld [vmem:[%s1 + $0x58] sm:$0xf]
      %v297 = vld [vmem:[%s1 + $0x5c] sm:$0xf]
      %v298 = vld [vmem:[%s1 + $0x60] sm:$0xf]
      %v299 = vld [vmem:[%s1 + $0x64] sm:$0xf]
      %v300 = vld [vmem:[%s1 + $0x68] sm:$0xf]
      %v301 = vld [vmem:[%s1 + $0x6c] sm:$0xf]
      %v302 = vld [vmem:[%s1 + $0x70] sm:$0xf]
      %v303 = vld [vmem:[%s1 + $0x74] sm:$0xf]
      %v304 = vld [vmem:[%s1 + $0x78] sm:$0xf]
      %v305 = vld [vmem:[%s1 + $0x7c] sm:$0xf]
      %v306 = vld [vmem:[%s1 + $0x80] sm:$0xf]
      %v307 = vld [vmem:[%s1 + $0x84] sm:$0xf]
      %v308 = vld [vmem:[%s1 + $0x88] sm:$0xf]
      %v309 = vld [vmem:[%s1 + $0x8c] sm:$0xf]
      %v310 = vld [vmem:[%s1 + $0x90] sm:$0xf]
      %v311 = vld [vmem:[%s1 + $0x94] sm:$0xf]
      %v312 = vld [vmem:[%s1 + $0x98] sm:$0xf]
      %v313 = vld [vmem:[%s1 + $0x9c] sm:$0xf]
      %v314 = vld [vmem:[%s1 + $0xa0] sm:$0xf]
      %v315 = vld [vmem:[%s1 + $0xa4] sm:$0xf]
      %v316 = vld [vmem:[%s1 + $0xa8] sm:$0xf]
      %v317 = vld [vmem:[%s1 + $0xac] sm:$0xf]
      %v318 = vld [vmem:[%s1 + $0xb0] sm:$0xf]
      %v319 = vld [vmem:[%s1 + $0xb4] sm:$0xf]
      %v320 = vld [vmem:[%s1 + $0xb8] sm:$0xf]
      %v321 = vld [vmem:[%s1 + $0xbc] sm:$0xf]
      %v322 = vld [vmem:[%s1 + $0xc0] sm:$0xf]
      %v323 = vld [vmem:[%s2] sm:$0x1]
      %v325 = vlaneseq
      %v326 = vshrl.u32 %v325, 7
      %v327 = vsub.s32 0, %v326
      %v328 = vrot.slane %v323, %v327
      %v426 = vunpack.c.l.b16 %v178
      %v427 = vunpack.c.h.b16 %v178
      %v428 = vunpack.c.l.b16 %v179
      %v429 = vunpack.c.h.b16 %v179
      %v430 = vunpack.c.l.b16 %v180
      %v431 = vunpack.c.h.b16 %v180
      %v432 = vunpack.c.l.b16 %v181
      %v433 = vunpack.c.h.b16 %v181
      %v434 = vunpack.c.l.b16 %v182
      %v435 = vunpack.c.h.b16 %v182
      %v436 = vunpack.c.l.b16 %v183
      %v437 = vunpack.c.h.b16 %v183
      %v438 = vunpack.c.l.b16 %v184
      %v439 = vunpack.c.h.b16 %v184
      %v440 = vunpack.c.l.b16 %v185
      %v441 = vunpack.c.h.b16 %v185
      %v442 = vunpack.c.l.b16 %v186
      %v443 = vunpack.c.h.b16 %v186
      %v444 = vunpack.c.l.b16 %v187
      %v445 = vunpack.c.h.b16 %v187
      %v446 = vunpack.c.l.b16 %v188
      %v447 = vunpack.c.h.b16 %v188
      %v448 = vunpack.c.l.b16 %v189
      %v449 = vunpack.c.h.b16 %v189
      %v450 = vunpack.c.l.b16 %v190
      %v451 = vunpack.c.h.b16 %v190
      %v452 = vunpack.c.l.b16 %v191
      %v453 = vunpack.c.h.b16 %v191
      %v454 = vunpack.c.l.b16 %v192
      %v455 = vunpack.c.h.b16 %v192
      %v456 = vunpack.c.l.b16 %v193
      %v457 = vunpack.c.h.b16 %v193
      %v458 = vunpack.c.l.b16 %v194
      %v459 = vunpack.c.h.b16 %v194
      %v460 = vunpack.c.l.b16 %v195
      %v461 = vunpack.c.h.b16 %v195
      %v462 = vunpack.c.l.b16 %v196
      %v463 = vunpack.c.h.b16 %v196
      %v464 = vunpack.c.l.b16 %v197
      %v465 = vunpack.c.h.b16 %v197
      %v466 = vunpack.c.l.b16 %v198
      %v467 = vunpack.c.h.b16 %v198
      %v468 = vunpack.c.l.b16 %v199
      %v469 = vunpack.c.h.b16 %v199
      %v470 = vunpack.c.l.b16 %v200
      %v471 = vunpack.c.h.b16 %v200
      %v472 = vunpack.c.l.b16 %v201
      %v473 = vunpack.c.h.b16 %v201
      %v474 = vunpack.c.l.b16 %v202
      %v475 = vunpack.c.h.b16 %v202
      %v476 = vunpack.c.l.b16 %v203
      %v477 = vunpack.c.h.b16 %v203
      %v478 = vunpack.c.l.b16 %v204
      %v479 = vunpack.c.h.b16 %v204
      %v480 = vunpack.c.l.b16 %v205
      %v481 = vunpack.c.h.b16 %v205
      %v482 = vunpack.c.l.b16 %v206
      %v483 = vunpack.c.h.b16 %v206
      %v484 = vunpack.c.l.b16 %v207
      %v485 = vunpack.c.h.b16 %v207
      %v486 = vunpack.c.l.b16 %v208
      %v487 = vunpack.c.h.b16 %v208
      %v488 = vunpack.c.l.b16 %v209
      %v489 = vunpack.c.h.b16 %v209
      %v490 = vunpack.c.l.b16 %v210
      %v491 = vunpack.c.h.b16 %v210
      %v492 = vunpack.c.l.b16 %v211
      %v493 = vunpack.c.h.b16 %v211
      %v494 = vunpack.c.l.b16 %v212
      %v495 = vunpack.c.h.b16 %v212
      %v496 = vunpack.c.l.b16 %v213
      %v497 = vunpack.c.h.b16 %v213
      %v498 = vunpack.c.l.b16 %v214
      %v499 = vunpack.c.h.b16 %v214
      %v500 = vunpack.c.l.b16 %v215
      %v501 = vunpack.c.h.b16 %v215
      %v502 = vunpack.c.l.b16 %v216
      %v503 = vunpack.c.h.b16 %v216
      %v504 = vunpack.c.l.b16 %v217
      %v505 = vunpack.c.h.b16 %v217
      %v506 = vunpack.c.l.b16 %v218
      %v507 = vunpack.c.h.b16 %v218
      %v508 = vunpack.c.l.b16 %v219
      %v509 = vunpack.c.h.b16 %v219
      %v510 = vunpack.c.l.b16 %v220
      %v511 = vunpack.c.h.b16 %v220
      %v512 = vunpack.c.l.b16 %v221
      %v513 = vunpack.c.h.b16 %v221
      %v514 = vunpack.c.l.b16 %v222
      %v515 = vunpack.c.h.b16 %v222
      %v516 = vunpack.c.l.b16 %v223
      %v517 = vunpack.c.h.b16 %v223
      %v518 = vunpack.c.l.b16 %v224
      %v519 = vunpack.c.h.b16 %v224
      %v520 = vunpack.c.l.b16 %v225
      %v521 = vunpack.c.h.b16 %v225
      %v522 = vunpack.c.l.b16 %v226
      %v523 = vunpack.c.h.b16 %v226
      %v524 = vunpack.c.l.b16 %v227
      %v525 = vunpack.c.h.b16 %v227
      %v526 = vunpack.c.l.b16 %v228
      %v527 = vunpack.c.h.b16 %v228
      %v528 = vunpack.c.l.b16 %v229
      %v529 = vunpack.c.h.b16 %v229
      %v530 = vunpack.c.l.b16 %v230
      %v531 = vunpack.c.h.b16 %v230
      %v532 = vunpack.c.l.b16 %v231
      %v533 = vunpack.c.h.b16 %v231
      %v534 = vunpack.c.l.b16 %v232
      %v535 = vunpack.c.h.b16 %v232
      %v536 = vunpack.c.l.b16 %v233
      %v537 = vunpack.c.h.b16 %v233
      %v538 = vunpack.c.l.b16 %v234
      %v539 = vunpack.c.h.b16 %v234
      %v540 = vunpack.c.l.b16 %v235
      %v541 = vunpack.c.h.b16 %v235
      %v542 = vunpack.c.l.b16 %v236
      %v543 = vunpack.c.h.b16 %v236
      %v544 = vunpack.c.l.b16 %v237
      %v545 = vunpack.c.h.b16 %v237
      %v546 = vunpack.c.l.b16 %v238
      %v547 = vunpack.c.h.b16 %v238
      %v548 = vunpack.c.l.b16 %v239
      %v549 = vunpack.c.h.b16 %v239
      %v550 = vunpack.c.l.b16 %v240
      %v551 = vunpack.c.h.b16 %v240
      %v552 = vunpack.c.l.b16 %v241
      %v553 = vunpack.c.h.b16 %v241
      %v554 = vunpack.c.l.b16 %v242
      %v555 = vunpack.c.h.b16 %v242
      %v556 = vunpack.c.l.b16 %v243
      %v557 = vunpack.c.h.b16 %v243
      %v558 = vunpack.c.l.b16 %v244
      %v559 = vunpack.c.h.b16 %v244
      %v560 = vunpack.c.l.b16 %v245
      %v561 = vunpack.c.h.b16 %v245
      %v562 = vunpack.c.l.b16 %v246
      %v563 = vunpack.c.h.b16 %v246
      %v564 = vunpack.c.l.b16 %v247
      %v565 = vunpack.c.h.b16 %v247
      %v566 = vunpack.c.l.b16 %v248
      %v567 = vunpack.c.h.b16 %v248
      %v568 = vunpack.c.l.b16 %v249
      %v569 = vunpack.c.h.b16 %v249
      %v570 = vunpack.c.l.b16 %v250
      %v571 = vunpack.c.h.b16 %v250
      %v572 = vunpack.c.l.b16 %v251
      %v573 = vunpack.c.h.b16 %v251
      %v574 = vunpack.c.l.b16 %v252
      %v575 = vunpack.c.h.b16 %v252
      %v576 = vunpack.c.l.b16 %v253
      %v577 = vunpack.c.h.b16 %v253
      %v578 = vunpack.c.l.b16 %v254
      %v579 = vunpack.c.h.b16 %v254
      %v580 = vunpack.c.l.b16 %v255
      %v581 = vunpack.c.h.b16 %v255
      %v582 = vunpack.c.l.b16 %v256
      %v583 = vunpack.c.h.b16 %v256
      %v584 = vunpack.c.l.b16 %v257
      %v585 = vunpack.c.h.b16 %v257
      %v586 = vunpack.c.l.b16 %v258
      %v587 = vunpack.c.h.b16 %v258
      %v588 = vunpack.c.l.b16 %v259
      %v589 = vunpack.c.h.b16 %v259
      %v590 = vunpack.c.l.b16 %v260
      %v591 = vunpack.c.h.b16 %v260
      %v592 = vunpack.c.l.b16 %v261
      %v593 = vunpack.c.h.b16 %v261
      %v594 = vunpack.c.l.b16 %v262
      %v595 = vunpack.c.h.b16 %v262
      %v596 = vunpack.c.l.b16 %v263
      %v597 = vunpack.c.h.b16 %v263
      %v598 = vunpack.c.l.b16 %v264
      %v599 = vunpack.c.h.b16 %v264
      %v600 = vunpack.c.l.b16 %v265
      %v601 = vunpack.c.h.b16 %v265
      %v602 = vunpack.c.l.b16 %v266
      %v603 = vunpack.c.h.b16 %v266
      %v604 = vunpack.c.l.b16 %v267
      %v605 = vunpack.c.h.b16 %v267
      %v606 = vunpack.c.l.b16 %v268
      %v607 = vunpack.c.h.b16 %v268
      %v608 = vunpack.c.l.b16 %v269
      %v609 = vunpack.c.h.b16 %v269
      %v610 = vunpack.c.l.b16 %v270
      %v611 = vunpack.c.h.b16 %v270
      %v612 = vunpack.c.l.b16 %v271
      %v613 = vunpack.c.h.b16 %v271
      %v614 = vunpack.c.l.b16 %v272
      %v615 = vunpack.c.h.b16 %v272
      %v616 = vunpack.c.l.b16 %v273
      %v617 = vunpack.c.h.b16 %v273
      %v618 = vpack.c.b16 %v430, %v426
      %v619 = vpack.c.b16 %v431, %v427
      %v620 = vpack.c.b16 %v432, %v428
      %v621 = vpack.c.b16 %v433, %v429
      %v622 = vpack.c.b16 %v438, %v434
      %v623 = vpack.c.b16 %v439, %v435
      %v624 = vpack.c.b16 %v440, %v436
      %v625 = vpack.c.b16 %v441, %v437
      %v626 = vpack.c.b16 %v446, %v442
      %v627 = vpack.c.b16 %v447, %v443
      %v628 = vpack.c.b16 %v448, %v444
      %v629 = vpack.c.b16 %v449, %v445
      %v630 = vpack.c.b16 %v454, %v450
      %v631 = vpack.c.b16 %v455, %v451
      %v632 = vpack.c.b16 %v456, %v452
      %v633 = vpack.c.b16 %v457, %v453
      %v634 = vpack.c.b16 %v462, %v458
      %v635 = vpack.c.b16 %v463, %v459
      %v636 = vpack.c.b16 %v464, %v460
      %v637 = vpack.c.b16 %v465, %v461
      %v638 = vpack.c.b16 %v470, %v466
      %v639 = vpack.c.b16 %v471, %v467
      %v640 = vpack.c.b16 %v472, %v468
      %v641 = vpack.c.b16 %v473, %v469
      %v642 = vpack.c.b16 %v478, %v474
      %v643 = vpack.c.b16 %v479, %v475
      %v644 = vpack.c.b16 %v480, %v476
      %v645 = vpack.c.b16 %v481, %v477
      %v646 = vpack.c.b16 %v486, %v482
      %v647 = vpack.c.b16 %v487, %v483
      %v648 = vpack.c.b16 %v488, %v484
      %v649 = vpack.c.b16 %v489, %v485
      %v650 = vpack.c.b16 %v494, %v490
      %v651 = vpack.c.b16 %v495, %v491
      %v652 = vpack.c.b16 %v496, %v492
      %v653 = vpack.c.b16 %v497, %v493
      %v654 = vpack.c.b16 %v502, %v498
      %v655 = vpack.c.b16 %v503, %v499
      %v656 = vpack.c.b16 %v504, %v500
      %v657 = vpack.c.b16 %v505, %v501
      %v658 = vpack.c.b16 %v510, %v506
      %v659 = vpack.c.b16 %v511, %v507
      %v660 = vpack.c.b16 %v512, %v508
      %v661 = vpack.c.b16 %v513, %v509
      %v662 = vpack.c.b16 %v518, %v514
      %v663 = vpack.c.b16 %v519, %v515
      %v664 = vpack.c.b16 %v520, %v516
      %v665 = vpack.c.b16 %v521, %v517
      %v666 = vpack.c.b16 %v526, %v522
      %v667 = vpack.c.b16 %v527, %v523
      %v668 = vpack.c.b16 %v528, %v524
      %v669 = vpack.c.b16 %v529, %v525
      %v670 = vpack.c.b16 %v534, %v530
      %v671 = vpack.c.b16 %v535, %v531
      %v672 = vpack.c.b16 %v536, %v532
      %v673 = vpack.c.b16 %v537, %v533
      %v674 = vpack.c.b16 %v542, %v538
      %v675 = vpack.c.b16 %v543, %v539
      %v676 = vpack.c.b16 %v544, %v540
      %v677 = vpack.c.b16 %v545, %v541
      %v678 = vpack.c.b16 %v550, %v546
      %v679 = vpack.c.b16 %v551, %v547
      %v680 = vpack.c.b16 %v552, %v548
      %v681 = vpack.c.b16 %v553, %v549
      %v682 = vpack.c.b16 %v558, %v554
      %v683 = vpack.c.b16 %v559, %v555
      %v684 = vpack.c.b16 %v560, %v556
      %v685 = vpack.c.b16 %v561, %v557
      %v686 = vpack.c.b16 %v566, %v562
      %v687 = vpack.c.b16 %v567, %v563
      %v688 = vpack.c.b16 %v568, %v564
      %v689 = vpack.c.b16 %v569, %v565
      %v690 = vpack.c.b16 %v574, %v570
      %v691 = vpack.c.b16 %v575, %v571
      %v692 = vpack.c.b16 %v576, %v572
      %v693 = vpack.c.b16 %v577, %v573
      %v694 = vpack.c.b16 %v582, %v578
      %v695 = vpack.c.b16 %v583, %v579
      %v696 = vpack.c.b16 %v584, %v580
      %v697 = vpack.c.b16 %v585, %v581
      %v698 = vpack.c.b16 %v590, %v586
      %v699 = vpack.c.b16 %v591, %v587
      %v700 = vpack.c.b16 %v592, %v588
      %v701 = vpack.c.b16 %v593, %v589
      %v702 = vpack.c.b16 %v598, %v594
      %v703 = vpack.c.b16 %v599, %v595
      %v704 = vpack.c.b16 %v600, %v596
      %v705 = vpack.c.b16 %v601, %v597
      %v706 = vpack.c.b16 %v606, %v602
      %v707 = vpack.c.b16 %v607, %v603
      %v708 = vpack.c.b16 %v608, %v604
      %v709 = vpack.c.b16 %v609, %v605
      %v710 = vpack.c.b16 %v614, %v610
      %v711 = vpack.c.b16 %v615, %v611
      %v712 = vpack.c.b16 %v616, %v612
      %v713 = vpack.c.b16 %v617, %v613
      %v835 = vunpack.c.l.b16 %v274
      %v836 = vunpack.c.l.b16 %v275
      %v837 = vunpack.c.l.b16 %v276
      %v838 = vunpack.c.l.b16 %v277
      %v839 = vunpack.c.l.b16 %v278
      %v840 = vunpack.c.l.b16 %v279
      %v841 = vunpack.c.l.b16 %v280
      %v842 = vunpack.c.l.b16 %v281
      %v843 = vunpack.c.l.b16 %v282
      %v844 = vunpack.c.l.b16 %v283
      %v845 = vunpack.c.l.b16 %v284
      %v846 = vunpack.c.l.b16 %v285
      %v847 = vunpack.c.l.b16 %v286
      %v848 = vunpack.c.l.b16 %v287
      %v849 = vunpack.c.l.b16 %v288
      %v850 = vunpack.c.l.b16 %v289
      %v851 = vunpack.c.l.b16 %v290
      %v852 = vunpack.c.l.b16 %v291
      %v853 = vunpack.c.l.b16 %v292
      %v854 = vunpack.c.l.b16 %v293
      %v855 = vunpack.c.l.b16 %v294
      %v856 = vunpack.c.l.b16 %v295
      %v857 = vunpack.c.l.b16 %v296
      %v858 = vunpack.c.l.b16 %v297
      %v859 = vunpack.c.l.b16 %v298
      %v860 = vunpack.c.l.b16 %v299
      %v861 = vunpack.c.l.b16 %v300
      %v862 = vunpack.c.l.b16 %v301
      %v863 = vunpack.c.l.b16 %v302
      %v864 = vunpack.c.l.b16 %v303
      %v865 = vunpack.c.l.b16 %v304
      %v866 = vunpack.c.l.b16 %v305
      %v867 = vunpack.c.l.b16 %v306
      %v868 = vunpack.c.l.b16 %v307
      %v869 = vunpack.c.l.b16 %v308
      %v870 = vunpack.c.l.b16 %v309
      %v871 = vunpack.c.l.b16 %v310
      %v872 = vunpack.c.l.b16 %v311
      %v873 = vunpack.c.l.b16 %v312
      %v874 = vunpack.c.l.b16 %v313
      %v875 = vunpack.c.l.b16 %v314
      %v876 = vunpack.c.l.b16 %v315
      %v877 = vunpack.c.l.b16 %v316
      %v878 = vunpack.c.l.b16 %v317
      %v879 = vunpack.c.l.b16 %v318
      %v880 = vunpack.c.l.b16 %v319
      %v881 = vunpack.c.l.b16 %v320
      %v882 = vunpack.c.l.b16 %v321
      %v883 = vunpack.c.l.b16 %v322
      %v884 = vpack.c.b16 %v836, %v835
      %v885 = vpack.c.b16 %v838, %v837
      %v886 = vpack.c.b16 %v840, %v839
      %v887 = vpack.c.b16 %v842, %v841
      %v888 = vpack.c.b16 %v844, %v843
      %v889 = vpack.c.b16 %v846, %v845
      %v890 = vpack.c.b16 %v848, %v847
      %v891 = vpack.c.b16 %v850, %v849
      %v892 = vpack.c.b16 %v852, %v851
      %v893 = vpack.c.b16 %v854, %v853
      %v894 = vpack.c.b16 %v856, %v855
      %v895 = vpack.c.b16 %v858, %v857
      %v896 = vpack.c.b16 %v860, %v859
      %v897 = vpack.c.b16 %v862, %v861
      %v898 = vpack.c.b16 %v864, %v863
      %v899 = vpack.c.b16 %v866, %v865
      %v900 = vpack.c.b16 %v868, %v867
      %v901 = vpack.c.b16 %v870, %v869
      %v902 = vpack.c.b16 %v872, %v871
      %v903 = vpack.c.b16 %v874, %v873
      %v904 = vpack.c.b16 %v876, %v875
      %v905 = vpack.c.b16 %v878, %v877
      %v906 = vpack.c.b16 %v880, %v879
      %v907 = vpack.c.b16 %v882, %v881
      %v908 = vpack.c.b16 %v883, %v883
      %vm933 = vcmask 64512
      %v935 = vsel %vm933, %v621, 0
      %v938 = vsel %vm933, %v625, 0
      %v941 = vsel %vm933, %v629, 0
      %v944 = vsel %vm933, %v633, 0
      %v947 = vsel %vm933, %v637, 0
      %v950 = vsel %vm933, %v641, 0
      %v953 = vsel %vm933, %v645, 0
      %v956 = vsel %vm933, %v649, 0
      %v959 = vsel %vm933, %v653, 0
      %v962 = vsel %vm933, %v657, 0
      %v965 = vsel %vm933, %v661, 0
      %v968 = vsel %vm933, %v665, 0
      %v971 = vsel %vm933, %v669, 0
      %v974 = vsel %vm933, %v673, 0
      %v977 = vsel %vm933, %v677, 0
      %v980 = vsel %vm933, %v681, 0
      %v983 = vsel %vm933, %v685, 0
      %v986 = vsel %vm933, %v689, 0
      %v989 = vsel %vm933, %v693, 0
      %v992 = vsel %vm933, %v697, 0
      %v995 = vsel %vm933, %v701, 0
      %v998 = vsel %vm933, %v705, 0
      %v1001 = vsel %vm933, %v709, 0
      %v1004 = vsel %vm933, %v713, 0
      %vm1006 = vcmask 1043456
      %v1008 = vsel %vm1006, %v908, 0
      %1010 = vmatprep.subr.bf16.mxu0 0
      %1011 = vmatpush1.bf16.msra.mxu0 %v884
      %1012 = vmatprep.subr.bf16.mxu0 0
      %1013 = vmatpush1.bf16.msra.mxu0 %v885
      %1014 = vmatprep.subr.bf16.mxu0 0
      %1015 = vmatpush1.bf16.msra.mxu0 %v886
      %1016 = vmatprep.subr.bf16.mxu0 0
      %1017 = vmatpush1.bf16.msra.mxu0 %v887
      %1018 = vmatprep.subr.bf16.mxu0 0
      %1019 = vmatpush1.bf16.msra.mxu0 %v888
      %1020 = vmatprep.subr.bf16.mxu0 0
      %1021 = vmatpush1.bf16.msra.mxu0 %v889
      %1022 = vmatprep.subr.bf16.mxu0 0
      %1023 = vmatpush1.bf16.msra.mxu0 %v890
      %1024 = vmatprep.subr.bf16.mxu0 0
      %1025 = vmatpush1.bf16.msra.mxu0 %v891
      %1026 = vmatprep.subr.bf16.mxu0 0
      %1027 = vmatpush1.bf16.msra.mxu0 %v892
      %1028 = vmatprep.subr.bf16.mxu0 0
      %1029 = vmatpush1.bf16.msra.mxu0 %v893
      %1030 = vmatprep.subr.bf16.mxu0 0
      %1031 = vmatpush1.bf16.msra.mxu0 %v894
      %1032 = vmatprep.subr.bf16.mxu0 0
      %1033 = vmatpush1.bf16.msra.mxu0 %v895
      %1034 = vmatprep.subr.bf16.mxu0 0
      %1035 = vmatpush1.bf16.msra.mxu0 %v896
      %1036 = vmatprep.subr.bf16.mxu0 0
      %1037 = vmatpush1.bf16.msra.mxu0 %v897
      %1038 = vmatprep.subr.bf16.mxu0 0
      %1039 = vmatpush1.bf16.msra.mxu0 %v898
      %1040 = vmatprep.subr.bf16.mxu0 0
      %1041 = vmatpush1.bf16.msra.mxu0 %v899
      %1042 = vmatprep.mubr.bf16.mxu0 %v619
      %1043 = vmatmul.mubr.bf16.gmra.mrb[0].mxu0 %v618
      %v1044 = vpop.f32.mrb[0].mxu0
      %v1045 = vadd.f32 %v328, %v1044
      %v1046 = vpop.f32.mrb[0].mxu0
      %v1047 = vpop.f32.mrb[0].mxu0
      %v1048 = vadd.f32 %v328, %v1047
      %v1049 = vpop.f32.mrb[0].mxu0
      %1050 = vmatprep.mubr.bf16.mxu0 %v623
      %1051 = vmatmul.mubr.bf16.gmra.mrb[0].mxu0 %v622
      %v1052 = vpop.f32.mrb[0].mxu0
      %v1053 = vadd.f32 %v328, %v1052
      %v1054 = vpop.f32.mrb[0].mxu0
      %v1055 = vpop.f32.mrb[0].mxu0
      %v1056 = vadd.f32 %v328, %v1055
      %v1057 = vpop.f32.mrb[0].mxu0
      %1058 = vmatprep.mubr.bf16.mxu0 %v627
      %1059 = vmatmul.mubr.bf16.gmra.mrb[0].mxu0 %v626
      %v1060 = vpop.f32.mrb[0].mxu0
      %v1061 = vadd.f32 %v328, %v1060
      %v1062 = vpop.f32.mrb[0].mxu0
      %v1063 = vpop.f32.mrb[0].mxu0
      %v1064 = vadd.f32 %v328, %v1063
      %v1065 = vpop.f32.mrb[0].mxu0
      %1066 = vmatprep.mubr.bf16.mxu0 %v631
      %1067 = vmatmul.mubr.bf16.gmra.mrb[0].mxu0 %v630
      %v1068 = vpop.f32.mrb[0].mxu0
      %v1069 = vadd.f32 %v328, %v1068
      %v1070 = vpop.f32.mrb[0].mxu0
      %v1071 = vpop.f32.mrb[0].mxu0
      %v1072 = vadd.f32 %v328, %v1071
      %v1073 = vpop.f32.mrb[0].mxu0
      %1074 = vmatprep.mubr.bf16.mxu0 %v635
      %1075 = vmatmul.mubr.bf16.gmra.mrb[0].mxu0 %v634
      %v1076 = vpop.f32.mrb[0].mxu0
      %v1077 = vadd.f32 %v328, %v1076
      %v1078 = vpop.f32.mrb[0].mxu0
      %v1079 = vpop.f32.mrb[0].mxu0
      %v1080 = vadd.f32 %v328, %v1079
      %v1081 = vpop.f32.mrb[0].mxu0
      %1082 = vmatprep.mubr.bf16.mxu0 %v639
      %1083 = vmatmul.mubr.bf16.gmra.mrb[0].mxu0 %v638
      %v1084 = vpop.f32.mrb[0].mxu0
      %v1085 = vadd.f32 %v328, %v1084
      %v1086 = vpop.f32.mrb[0].mxu0
      %v1087 = vpop.f32.mrb[0].mxu0
      %v1088 = vadd.f32 %v328, %v1087
      %v1089 = vpop.f32.mrb[0].mxu0
      %1090 = vmatprep.mubr.bf16.mxu0 %v643
      %1091 = vmatmul.mubr.bf16.gmra.mrb[0].mxu0 %v642
      %v1092 = vpop.f32.mrb[0].mxu0
      %v1093 = vadd.f32 %v328, %v1092
      %v1094 = vpop.f32.mrb[0].mxu0
      %v1095 = vpop.f32.mrb[0].mxu0
      %v1096 = vadd.f32 %v328, %v1095
      %v1097 = vpop.f32.mrb[0].mxu0
      %1098 = vmatprep.mubr.bf16.mxu0 %v647
      %1099 = vmatmul.mubr.bf16.gmra.mrb[0].mxu0 %v646
      %v1100 = vpop.f32.mrb[0].mxu0
      %v1101 = vadd.f32 %v328, %v1100
      %v1102 = vpop.f32.mrb[0].mxu0
      %v1103 = vpop.f32.mrb[0].mxu0
      %v1104 = vadd.f32 %v328, %v1103
      %v1105 = vpop.f32.mrb[0].mxu0
      %1106 = vmatprep.mubr.bf16.mxu0 %v651
      %1107 = vmatmul.mubr.bf16.gmra.mrb[0].mxu0 %v650
      %v1108 = vpop.f32.mrb[0].mxu0
      %v1109 = vadd.f32 %v328, %v1108
      %v1110 = vpop.f32.mrb[0].mxu0
      %v1111 = vpop.f32.mrb[0].mxu0
      %v1112 = vadd.f32 %v328, %v1111
      %v1113 = vpop.f32.mrb[0].mxu0
      %1114 = vmatprep.mubr.bf16.mxu0 %v655
      %1115 = vmatmul.mubr.bf16.gmra.mrb[0].mxu0 %v654
      %v1116 = vpop.f32.mrb[0].mxu0
      %v1117 = vadd.f32 %v328, %v1116
      %v1118 = vpop.f32.mrb[0].mxu0
      %v1119 = vpop.f32.mrb[0].mxu0
      %v1120 = vadd.f32 %v328, %v1119
      %v1121 = vpop.f32.mrb[0].mxu0
      %1122 = vmatprep.mubr.bf16.mxu0 %v659
      %1123 = vmatmul.mubr.bf16.gmra.mrb[0].mxu0 %v658
      %v1124 = vpop.f32.mrb[0].mxu0
      %v1125 = vadd.f32 %v328, %v1124
      %v1126 = vpop.f32.mrb[0].mxu0
      %v1127 = vpop.f32.mrb[0].mxu0
      %v1128 = vadd.f32 %v328, %v1127
      %v1129 = vpop.f32.mrb[0].mxu0
      %1130 = vmatprep.mubr.bf16.mxu0 %v663
      %1131 = vmatmul.mubr.bf16.gmra.mrb[0].mxu0 %v662
      %v1132 = vpop.f32.mrb[0].mxu0
      %v1133 = vadd.f32 %v328, %v1132
      %v1134 = vpop.f32.mrb[0].mxu0
      %v1135 = vpop.f32.mrb[0].mxu0
      %v1136 = vadd.f32 %v328, %v1135
      %v1137 = vpop.f32.mrb[0].mxu0
      %1138 = vmatprep.mubr.bf16.mxu0 %v667
      %1139 = vmatmul.mubr.bf16.gmra.mrb[0].mxu0 %v666
      %v1140 = vpop.f32.mrb[0].mxu0
      %v1141 = vadd.f32 %v328, %v1140
      %v1142 = vpop.f32.mrb[0].mxu0
      %v1143 = vpop.f32.mrb[0].mxu0
      %v1144 = vadd.f32 %v328, %v1143
      %v1145 = vpop.f32.mrb[0].mxu0
      %1146 = vmatprep.mubr.bf16.mxu0 %v671
      %1147 = vmatmul.mubr.bf16.gmra.mrb[0].mxu0 %v670
      %v1148 = vpop.f32.mrb[0].mxu0
      %v1149 = vadd.f32 %v328, %v1148
      %v1150 = vpop.f32.mrb[0].mxu0
      %v1151 = vpop.f32.mrb[0].mxu0
      %v1152 = vadd.f32 %v328, %v1151
      %v1153 = vpop.f32.mrb[0].mxu0
      %1154 = vmatprep.mubr.bf16.mxu0 %v675
      %1155 = vmatmul.mubr.bf16.gmra.mrb[0].mxu0 %v674
      %v1156 = vpop.f32.mrb[0].mxu0
      %v1157 = vadd.f32 %v328, %v1156
      %v1158 = vpop.f32.mrb[0].mxu0
      %v1159 = vpop.f32.mrb[0].mxu0
      %v1160 = vadd.f32 %v328, %v1159
      %v1161 = vpop.f32.mrb[0].mxu0
      %1162 = vmatprep.mubr.bf16.mxu0 %v679
      %1163 = vmatmul.mubr.bf16.gmra.mrb[0].mxu0 %v678
      %v1164 = vpop.f32.mrb[0].mxu0
      %v1165 = vadd.f32 %v328, %v1164
      %v1166 = vpop.f32.mrb[0].mxu0
      %v1167 = vpop.f32.mrb[0].mxu0
      %v1168 = vadd.f32 %v328, %v1167
      %v1169 = vpop.f32.mrb[0].mxu0
      %1170 = vmatprep.mubr.bf16.mxu0 %v683
      %1171 = vmatmul.mubr.bf16.gmra.mrb[0].mxu0 %v682
      %v1172 = vpop.f32.mrb[0].mxu0
      %v1173 = vadd.f32 %v328, %v1172
      %v1174 = vpop.f32.mrb[0].mxu0
      %v1175 = vpop.f32.mrb[0].mxu0
      %v1176 = vadd.f32 %v328, %v1175
      %v1177 = vpop.f32.mrb[0].mxu0
      %1178 = vmatprep.mubr.bf16.mxu0 %v687
      %1179 = vmatmul.mubr.bf16.gmra.mrb[0].mxu0 %v686
      %v1180 = vpop.f32.mrb[0].mxu0
      %v1181 = vadd.f32 %v328, %v1180
      %v1182 = vpop.f32.mrb[0].mxu0
      %v1183 = vpop.f32.mrb[0].mxu0
      %v1184 = vadd.f32 %v328, %v1183
      %v1185 = vpop.f32.mrb[0].mxu0
      %1186 = vmatprep.mubr.bf16.mxu0 %v691
      %1187 = vmatmul.mubr.bf16.gmra.mrb[0].mxu0 %v690
      %v1188 = vpop.f32.mrb[0].mxu0
      %v1189 = vadd.f32 %v328, %v1188
      %v1190 = vpop.f32.mrb[0].mxu0
      %v1191 = vpop.f32.mrb[0].mxu0
      %v1192 = vadd.f32 %v328, %v1191
      %v1193 = vpop.f32.mrb[0].mxu0
      %1194 = vmatprep.mubr.bf16.mxu0 %v695
      %1195 = vmatmul.mubr.bf16.gmra.mrb[0].mxu0 %v694
      %v1196 = vpop.f32.mrb[0].mxu0
      %v1197 = vadd.f32 %v328, %v1196
      %v1198 = vpop.f32.mrb[0].mxu0
      %v1199 = vpop.f32.mrb[0].mxu0
      %v1200 = vadd.f32 %v328, %v1199
      %v1201 = vpop.f32.mrb[0].mxu0
      %1202 = vmatprep.mubr.bf16.mxu0 %v699
      %1203 = vmatmul.mubr.bf16.gmra.mrb[0].mxu0 %v698
      %v1204 = vpop.f32.mrb[0].mxu0
      %v1205 = vadd.f32 %v328, %v1204
      %v1206 = vpop.f32.mrb[0].mxu0
      %v1207 = vpop.f32.mrb[0].mxu0
      %v1208 = vadd.f32 %v328, %v1207
      %v1209 = vpop.f32.mrb[0].mxu0
      %1210 = vmatprep.mubr.bf16.mxu0 %v703
      %1211 = vmatmul.mubr.bf16.gmra.mrb[0].mxu0 %v702
      %v1212 = vpop.f32.mrb[0].mxu0
      %v1213 = vadd.f32 %v328, %v1212
      %v1214 = vpop.f32.mrb[0].mxu0
      %v1215 = vpop.f32.mrb[0].mxu0
      %v1216 = vadd.f32 %v328, %v1215
      %v1217 = vpop.f32.mrb[0].mxu0
      %1218 = vmatprep.mubr.bf16.mxu0 %v707
      %1219 = vmatmul.mubr.bf16.gmra.mrb[0].mxu0 %v706
      %v1220 = vpop.f32.mrb[0].mxu0
      %v1221 = vadd.f32 %v328, %v1220
      %v1222 = vpop.f32.mrb[0].mxu0
      %v1223 = vpop.f32.mrb[0].mxu0
      %v1224 = vadd.f32 %v328, %v1223
      %v1225 = vpop.f32.mrb[0].mxu0
      %1226 = vmatprep.mubr.bf16.mxu0 %v711
      %1227 = vmatmul.mubr.bf16.gmra.mrb[0].mxu0 %v710
      %v1228 = vpop.f32.mrb[0].mxu0
      %v1229 = vadd.f32 %v328, %v1228
      %v1230 = vpop.f32.mrb[0].mxu0
      %v1231 = vpop.f32.mrb[0].mxu0
      %v1232 = vadd.f32 %v328, %v1231
      %v1233 = vpop.f32.mrb[0].mxu0
      %1234 = vdwg.mxu0
      %1235 = vmatprep.subr.bf16.mxu0 0
      %1236 = vmatpush1.bf16.msra.mxu0 %v900
      %1237 = vmatprep.subr.bf16.mxu0 0
      %1238 = vmatpush1.bf16.msra.mxu0 %v901
      %1239 = vmatprep.subr.bf16.mxu0 0
      %1240 = vmatpush1.bf16.msra.mxu0 %v902
      %1241 = vmatprep.subr.bf16.mxu0 0
      %1242 = vmatpush1.bf16.msra.mxu0 %v903
      %1243 = vmatprep.subr.bf16.mxu0 0
      %1244 = vmatpush1.bf16.msra.mxu0 %v904
      %1245 = vmatprep.subr.bf16.mxu0 0
      %1246 = vmatpush1.bf16.msra.mxu0 %v905
      %1247 = vmatprep.subr.bf16.mxu0 0
      %1248 = vmatpush1.bf16.msra.mxu0 %v906
      %1249 = vmatprep.subr.bf16.mxu0 0
      %1250 = vmatpush1.bf16.msra.mxu0 %v907
      %1251 = vmatprep.subr.bf16.mxu0 0
      %1252 = vmatpush1.bf16.msra.mxu0 %v1008
      %1253 = vmatprep.subr.bf16.mxu0 0
      %1254 = vmatpush1.bf16.msra.mxu0 0
      %1255 = vmatprep.subr.bf16.mxu0 0
      %1256 = vmatpush1.bf16.msra.mxu0 0
      %1257 = vmatprep.subr.bf16.mxu0 0
      %1258 = vmatpush1.bf16.msra.mxu0 0
      %1259 = vmatprep.subr.bf16.mxu0 0
      %1260 = vmatpush1.bf16.msra.mxu0 0
      %1261 = vmatprep.subr.bf16.mxu0 0
      %1262 = vmatpush1.bf16.msra.mxu0 0
      %1263 = vmatprep.subr.bf16.mxu0 0
      %1264 = vmatpush1.bf16.msra.mxu0 0
      %1265 = vmatprep.subr.bf16.mxu0 0
      %1266 = vmatpush1.bf16.msra.mxu0 0
      %1267 = vmatprep.mubr.bf16.mxu0 %v935
      %1268 = vmatmul.mubr.bf16.gmra.mrb[0].mxu0 %v620
      %v1269 = vpop.f32.mrb[0].mxu0
      %v1270 = vadd.f32 %v1045, %v1269
      %v1271 = vpop.f32.mrb[0].mxu0
      %v1272 = vpop.f32.mrb[0].mxu0
      %v1273 = vadd.f32 %v1048, %v1272
      %v1274 = vpop.f32.mrb[0].mxu0
      %1275 = vmatprep.mubr.bf16.mxu0 %v938
      %1276 = vmatmul.mubr.bf16.gmra.mrb[0].mxu0 %v624
      %v1277 = vpop.f32.mrb[0].mxu0
      %v1278 = vadd.f32 %v1053, %v1277
      %v1279 = vpop.f32.mrb[0].mxu0
      %v1280 = vpop.f32.mrb[0].mxu0
      %v1281 = vadd.f32 %v1056, %v1280
      %v1282 = vpop.f32.mrb[0].mxu0
      %1283 = vmatprep.mubr.bf16.mxu0 %v941
      %1284 = vmatmul.mubr.bf16.gmra.mrb[0].mxu0 %v628
      %v1285 = vpop.f32.mrb[0].mxu0
      %v1286 = vadd.f32 %v1061, %v1285
      %v1287 = vpop.f32.mrb[0].mxu0
      %v1288 = vpop.f32.mrb[0].mxu0
      %v1289 = vadd.f32 %v1064, %v1288
      %v1290 = vpop.f32.mrb[0].mxu0
      %1291 = vmatprep.mubr.bf16.mxu0 %v944
      %1292 = vmatmul.mubr.bf16.gmra.mrb[0].mxu0 %v632
      %v1293 = vpop.f32.mrb[0].mxu0
      %v1294 = vadd.f32 %v1069, %v1293
      %v1295 = vpop.f32.mrb[0].mxu0
      %v1296 = vpop.f32.mrb[0].mxu0
      %v1297 = vadd.f32 %v1072, %v1296
      %v1298 = vpop.f32.mrb[0].mxu0
      %1299 = vmatprep.mubr.bf16.mxu0 %v947
      %1300 = vmatmul.mubr.bf16.gmra.mrb[0].mxu0 %v636
      %v1301 = vpop.f32.mrb[0].mxu0
      %v1302 = vadd.f32 %v1077, %v1301
      %v1303 = vpop.f32.mrb[0].mxu0
      %v1304 = vpop.f32.mrb[0].mxu0
      %v1305 = vadd.f32 %v1080, %v1304
      %v1306 = vpop.f32.mrb[0].mxu0
      %1307 = vmatprep.mubr.bf16.mxu0 %v950
      %1308 = vmatmul.mubr.bf16.gmra.mrb[0].mxu0 %v640
      %v1309 = vpop.f32.mrb[0].mxu0
      %v1310 = vadd.f32 %v1085, %v1309
      %v1311 = vpop.f32.mrb[0].mxu0
      %v1312 = vpop.f32.mrb[0].mxu0
      %v1313 = vadd.f32 %v1088, %v1312
      %v1314 = vpop.f32.mrb[0].mxu0
      %1315 = vmatprep.mubr.bf16.mxu0 %v953
      %1316 = vmatmul.mubr.bf16.gmra.mrb[0].mxu0 %v644
      %v1317 = vpop.f32.mrb[0].mxu0
      %v1318 = vadd.f32 %v1093, %v1317
      %v1319 = vpop.f32.mrb[0].mxu0
      %v1320 = vpop.f32.mrb[0].mxu0
      %v1321 = vadd.f32 %v1096, %v1320
      %v1322 = vpop.f32.mrb[0].mxu0
      %1323 = vmatprep.mubr.bf16.mxu0 %v956
      %1324 = vmatmul.mubr.bf16.gmra.mrb[0].mxu0 %v648
      %v1325 = vpop.f32.mrb[0].mxu0
      %v1326 = vadd.f32 %v1101, %v1325
      %v1327 = vpop.f32.mrb[0].mxu0
      %v1328 = vpop.f32.mrb[0].mxu0
      %v1329 = vadd.f32 %v1104, %v1328
      %v1330 = vpop.f32.mrb[0].mxu0
      %1331 = vmatprep.mubr.bf16.mxu0 %v959
      %1332 = vmatmul.mubr.bf16.gmra.mrb[0].mxu0 %v652
      %v1333 = vpop.f32.mrb[0].mxu0
      %v1334 = vadd.f32 %v1109, %v1333
      %v1335 = vpop.f32.mrb[0].mxu0
      %v1336 = vpop.f32.mrb[0].mxu0
      %v1337 = vadd.f32 %v1112, %v1336
      %v1338 = vpop.f32.mrb[0].mxu0
      %1339 = vmatprep.mubr.bf16.mxu0 %v962
      %1340 = vmatmul.mubr.bf16.gmra.mrb[0].mxu0 %v656
      %v1341 = vpop.f32.mrb[0].mxu0
      %v1342 = vadd.f32 %v1117, %v1341
      %v1343 = vpop.f32.mrb[0].mxu0
      %v1344 = vpop.f32.mrb[0].mxu0
      %v1345 = vadd.f32 %v1120, %v1344
      %v1346 = vpop.f32.mrb[0].mxu0
      %1347 = vmatprep.mubr.bf16.mxu0 %v965
      %1348 = vmatmul.mubr.bf16.gmra.mrb[0].mxu0 %v660
      %v1349 = vpop.f32.mrb[0].mxu0
      %v1350 = vadd.f32 %v1125, %v1349
      %v1351 = vpop.f32.mrb[0].mxu0
      %v1352 = vpop.f32.mrb[0].mxu0
      %v1353 = vadd.f32 %v1128, %v1352
      %v1354 = vpop.f32.mrb[0].mxu0
      %1355 = vmatprep.mubr.bf16.mxu0 %v968
      %1356 = vmatmul.mubr.bf16.gmra.mrb[0].mxu0 %v664
      %v1357 = vpop.f32.mrb[0].mxu0
      %v1358 = vadd.f32 %v1133, %v1357
      %v1359 = vpop.f32.mrb[0].mxu0
      %v1360 = vpop.f32.mrb[0].mxu0
      %v1361 = vadd.f32 %v1136, %v1360
      %v1362 = vpop.f32.mrb[0].mxu0
      %1363 = vmatprep.mubr.bf16.mxu0 %v971
      %1364 = vmatmul.mubr.bf16.gmra.mrb[0].mxu0 %v668
      %v1365 = vpop.f32.mrb[0].mxu0
      %v1366 = vadd.f32 %v1141, %v1365
      %v1367 = vpop.f32.mrb[0].mxu0
      %v1368 = vpop.f32.mrb[0].mxu0
      %v1369 = vadd.f32 %v1144, %v1368
      %v1370 = vpop.f32.mrb[0].mxu0
      %1371 = vmatprep.mubr.bf16.mxu0 %v974
      %1372 = vmatmul.mubr.bf16.gmra.mrb[0].mxu0 %v672
      %v1373 = vpop.f32.mrb[0].mxu0
      %v1374 = vadd.f32 %v1149, %v1373
      %v1375 = vpop.f32.mrb[0].mxu0
      %v1376 = vpop.f32.mrb[0].mxu0
      %v1377 = vadd.f32 %v1152, %v1376
      %v1378 = vpop.f32.mrb[0].mxu0
      %1379 = vmatprep.mubr.bf16.mxu0 %v977
      %1380 = vmatmul.mubr.bf16.gmra.mrb[0].mxu0 %v676
      %v1381 = vpop.f32.mrb[0].mxu0
      %v1382 = vadd.f32 %v1157, %v1381
      %v1383 = vpop.f32.mrb[0].mxu0
      %v1384 = vpop.f32.mrb[0].mxu0
      %v1385 = vadd.f32 %v1160, %v1384
      %v1386 = vpop.f32.mrb[0].mxu0
      %1387 = vmatprep.mubr.bf16.mxu0 %v980
      %1388 = vmatmul.mubr.bf16.gmra.mrb[0].mxu0 %v680
      %v1389 = vpop.f32.mrb[0].mxu0
      %v1390 = vadd.f32 %v1165, %v1389
      %v1391 = vpop.f32.mrb[0].mxu0
      %v1392 = vpop.f32.mrb[0].mxu0
      %v1393 = vadd.f32 %v1168, %v1392
      %v1394 = vpop.f32.mrb[0].mxu0
      %1395 = vmatprep.mubr.bf16.mxu0 %v983
      %1396 = vmatmul.mubr.bf16.gmra.mrb[0].mxu0 %v684
      %v1397 = vpop.f32.mrb[0].mxu0
      %v1398 = vadd.f32 %v1173, %v1397
      %v1399 = vpop.f32.mrb[0].mxu0
      %v1400 = vpop.f32.mrb[0].mxu0
      %v1401 = vadd.f32 %v1176, %v1400
      %v1402 = vpop.f32.mrb[0].mxu0
      %1403 = vmatprep.mubr.bf16.mxu0 %v986
      %1404 = vmatmul.mubr.bf16.gmra.mrb[0].mxu0 %v688
      %v1405 = vpop.f32.mrb[0].mxu0
      %v1406 = vadd.f32 %v1181, %v1405
      %v1407 = vpop.f32.mrb[0].mxu0
      %v1408 = vpop.f32.mrb[0].mxu0
      %v1409 = vadd.f32 %v1184, %v1408
      %v1410 = vpop.f32.mrb[0].mxu0
      %1411 = vmatprep.mubr.bf16.mxu0 %v989
      %1412 = vmatmul.mubr.bf16.gmra.mrb[0].mxu0 %v692
      %v1413 = vpop.f32.mrb[0].mxu0
      %v1414 = vadd.f32 %v1189, %v1413
      %v1415 = vpop.f32.mrb[0].mxu0
      %v1416 = vpop.f32.mrb[0].mxu0
      %v1417 = vadd.f32 %v1192, %v1416
      %v1418 = vpop.f32.mrb[0].mxu0
      %1419 = vmatprep.mubr.bf16.mxu0 %v992
      %1420 = vmatmul.mubr.bf16.gmra.mrb[0].mxu0 %v696
      %v1421 = vpop.f32.mrb[0].mxu0
      %v1422 = vadd.f32 %v1197, %v1421
      %v1423 = vpop.f32.mrb[0].mxu0
      %v1424 = vpop.f32.mrb[0].mxu0
      %v1425 = vadd.f32 %v1200, %v1424
      %v1426 = vpop.f32.mrb[0].mxu0
      %1427 = vmatprep.mubr.bf16.mxu0 %v995
      %1428 = vmatmul.mubr.bf16.gmra.mrb[0].mxu0 %v700
      %v1429 = vpop.f32.mrb[0].mxu0
      %v1430 = vadd.f32 %v1205, %v1429
      %v1431 = vpop.f32.mrb[0].mxu0
      %v1432 = vpop.f32.mrb[0].mxu0
      %v1433 = vadd.f32 %v1208, %v1432
      %v1434 = vpop.f32.mrb[0].mxu0
      %1435 = vmatprep.mubr.bf16.mxu0 %v998
      %1436 = vmatmul.mubr.bf16.gmra.mrb[0].mxu0 %v704
      %v1437 = vpop.f32.mrb[0].mxu0
      %v1438 = vadd.f32 %v1213, %v1437
      %v1439 = vpop.f32.mrb[0].mxu0
      %v1440 = vpop.f32.mrb[0].mxu0
      %v1441 = vadd.f32 %v1216, %v1440
      %v1442 = vpop.f32.mrb[0].mxu0
      %1443 = vmatprep.mubr.bf16.mxu0 %v1001
      %1444 = vmatmul.mubr.bf16.gmra.mrb[0].mxu0 %v708
      %v1445 = vpop.f32.mrb[0].mxu0
      %v1446 = vadd.f32 %v1221, %v1445
      %v1447 = vpop.f32.mrb[0].mxu0
      %v1448 = vpop.f32.mrb[0].mxu0
      %v1449 = vadd.f32 %v1224, %v1448
      %v1450 = vpop.f32.mrb[0].mxu0
      %1451 = vmatprep.mubr.bf16.mxu0 %v1004
      %1452 = vmatmul.mubr.bf16.gmra.mrb[0].mxu0 %v712
      %v1453 = vpop.f32.mrb[0].mxu0
      %v1454 = vadd.f32 %v1229, %v1453
      %v1455 = vpop.f32.mrb[0].mxu0
      %v1456 = vpop.f32.mrb[0].mxu0
      %v1457 = vadd.f32 %v1232, %v1456
      %v1458 = vpop.f32.mrb[0].mxu0
      %1459 = vdwg.mxu0
      %v1460 = vtanh.pop %v1270
      %v1461 = vtanh.pop %v1273
      %v1462 = vtanh.pop %v1278
      %v1463 = vtanh.pop %v1281
      %v1464 = vtanh.pop %v1286
      %v1465 = vtanh.pop %v1289
      %v1466 = vtanh.pop %v1294
      %v1467 = vtanh.pop %v1297
      %v1468 = vtanh.pop %v1302
      %v1469 = vtanh.pop %v1305
      %v1470 = vtanh.pop %v1310
      %v1471 = vtanh.pop %v1313
      %v1472 = vtanh.pop %v1318
      %v1473 = vtanh.pop %v1321
      %v1474 = vtanh.pop %v1326
      %v1475 = vtanh.pop %v1329
      %v1476 = vtanh.pop %v1334
      %v1477 = vtanh.pop %v1337
      %v1478 = vtanh.pop %v1342
      %v1479 = vtanh.pop %v1345
      %v1480 = vtanh.pop %v1350
      %v1481 = vtanh.pop %v1353
      %v1482 = vtanh.pop %v1358
      %v1483 = vtanh.pop %v1361
      %v1484 = vtanh.pop %v1366
      %v1485 = vtanh.pop %v1369
      %v1486 = vtanh.pop %v1374
      %v1487 = vtanh.pop %v1377
      %v1488 = vtanh.pop %v1382
      %v1489 = vtanh.pop %v1385
      %v1490 = vtanh.pop %v1390
      %v1491 = vtanh.pop %v1393
      %v1492 = vtanh.pop %v1398
      %v1493 = vtanh.pop %v1401
      %v1494 = vtanh.pop %v1406
      %v1495 = vtanh.pop %v1409
      %v1496 = vtanh.pop %v1414
      %v1497 = vtanh.pop %v1417
      %v1498 = vtanh.pop %v1422
      %v1499 = vtanh.pop %v1425
      %v1500 = vtanh.pop %v1430
      %v1501 = vtanh.pop %v1433
      %v1502 = vtanh.pop %v1438
      %v1503 = vtanh.pop %v1441
      %v1504 = vtanh.pop %v1446
      %v1505 = vtanh.pop %v1449
      %v1506 = vtanh.pop %v1454
      %v1507 = vtanh.pop %v1457
      %1508 = vst [vmem:[%s175] sm:$0xff] %v1460
      %1509 = vst [vmem:[%s175 + $0x8] sm:$0xff] %v1461
      %1510 = vst [vmem:[%s175 + $0x10] sm:$0xff] %v1462
      %1511 = vst [vmem:[%s175 + $0x18] sm:$0xff] %v1463
      %1512 = vst [vmem:[%s175 + $0x20] sm:$0xff] %v1464
      %1513 = vst [vmem:[%s175 + $0x28] sm:$0xff] %v1465
      %1514 = vst [vmem:[%s175 + $0x30] sm:$0xff] %v1466
      %1515 = vst [vmem:[%s175 + $0x38] sm:$0xff] %v1467
      %1516 = vst [vmem:[%s175 + $0x40] sm:$0xff] %v1468
      %1517 = vst [vmem:[%s175 + $0x48] sm:$0xff] %v1469
      %1518 = vst [vmem:[%s175 + $0x50] sm:$0xff] %v1470
      %1519 = vst [vmem:[%s175 + $0x58] sm:$0xff] %v1471
      %1520 = vst [vmem:[%s175 + $0x60] sm:$0xff] %v1472
      %1521 = vst [vmem:[%s175 + $0x68] sm:$0xff] %v1473
      %1522 = vst [vmem:[%s175 + $0x70] sm:$0xff] %v1474
      %1523 = vst [vmem:[%s175 + $0x78] sm:$0xff] %v1475
      %1524 = vst [vmem:[%s175 + $0x80] sm:$0xff] %v1476
      %1525 = vst [vmem:[%s175 + $0x88] sm:$0xff] %v1477
      %1526 = vst [vmem:[%s175 + $0x90] sm:$0xff] %v1478
      %1527 = vst [vmem:[%s175 + $0x98] sm:$0xff] %v1479
      %1528 = vst [vmem:[%s175 + $0xa0] sm:$0xff] %v1480
      %1529 = vst [vmem:[%s175 + $0xa8] sm:$0xff] %v1481
      %1530 = vst [vmem:[%s175 + $0xb0] sm:$0xff] %v1482
      %1531 = vst [vmem:[%s175 + $0xb8] sm:$0xff] %v1483
      %1532 = vst [vmem:[%s175 + $0xc0] sm:$0xff] %v1484
      %1533 = vst [vmem:[%s175 + $0xc8] sm:$0xff] %v1485
      %1534 = vst [vmem:[%s175 + $0xd0] sm:$0xff] %v1486
      %1535 = vst [vmem:[%s175 + $0xd8] sm:$0xff] %v1487
      %1536 = vst [vmem:[%s175 + $0xe0] sm:$0xff] %v1488
      %1537 = vst [vmem:[%s175 + $0xe8] sm:$0xff] %v1489
      %1538 = vst [vmem:[%s175 + $0xf0] sm:$0xff] %v1490
      %1539 = vst [vmem:[%s175 + $0xf8] sm:$0xff] %v1491
      %1540 = vst [vmem:[%s175 + $0x100] sm:$0xff] %v1492
      %1541 = vst [vmem:[%s175 + $0x108] sm:$0xff] %v1493
      %1542 = vst [vmem:[%s175 + $0x110] sm:$0xff] %v1494
      %1543 = vst [vmem:[%s175 + $0x118] sm:$0xff] %v1495
      %1544 = vst [vmem:[%s175 + $0x120] sm:$0xff] %v1496
      %1545 = vst [vmem:[%s175 + $0x128] sm:$0xff] %v1497
      %1546 = vst [vmem:[%s175 + $0x130] sm:$0xff] %v1498
      %1547 = vst [vmem:[%s175 + $0x138] sm:$0xff] %v1499
      %1548 = vst [vmem:[%s175 + $0x140] sm:$0xff] %v1500
      %1549 = vst [vmem:[%s175 + $0x148] sm:$0xff] %v1501
      %1550 = vst [vmem:[%s175 + $0x150] sm:$0xff] %v1502
      %1551 = vst [vmem:[%s175 + $0x158] sm:$0xff] %v1503
      %1552 = vst [vmem:[%s175 + $0x160] sm:$0xff] %v1504
      %1553 = vst [vmem:[%s175 + $0x168] sm:$0xff] %v1505
      %1554 = vst [vmem:[%s175 + $0x170] sm:$0xff] %v1506
      %1555 = vst [vmem:[%s175 + $0x178] sm:$0xff] %v1507
      %s1556 = smul.u32 48, %s14
      %p1557 = scmp.lt.s32.totalorder %s1556, 911
      %s1558 = scalar_select %p1557, %s1556, 911
      %s1559 = smul.addr %s1558, 8
      %s1560 = scalar_lea.vmem %s3, %s1559
      // Predicated region
      $region33: #{_lambda_.7} parent=31 // pred_check
        %p1561 = pneg %p100
      $region34: #{_lambda_.7} parent=31 // pred_check_branch
        %1563 = sbr.rel (%p1561) target = $region36
      $region35: #{_lambda_.7} parent=31 // pred_region
        %s1564 = smul.u32 48, %s14
      $region36: #{_lambda_.7} parent=31 // pred_fallthru
        _
    $region32: #{_lambda_.7} parent=5 // pred_fallthru
      _
    %p1565 = scmp.le.s32.totalorder 2, %s9
    // Predicated region
    $region37: #{_lambda_.7} parent=5 // pred_check
      %p1566 = pneg %p1565
    $region38: #{_lambda_.7} parent=5 // pred_check_branch
      %1568 = sbr.rel (%p1566) target = $region40
    $region39: #{_lambda_.7} parent=5 // pred_region
      %s1569 = ssub.s32 %s9, 2
      // Predicated region
      $region41: #{_lambda_.7} parent=39 // pred_check
        %p1570 = pneg %p106
      $region42: #{_lambda_.7} parent=39 // pred_check_branch
        %1572 = sbr.rel (%p1570) target = $region44
      $region43: #{_lambda_.7} parent=39 // pred_region
        %s1573 = smul.u32 48, %s15
        %p1574 = scmp.lt.s32.totalorder %s1573, 911
        %s1575 = scalar_select %p1574, %s1573, 911
        %s1576 = smul.addr %s1575, 8
        %s1577 = scalar_lea.vmem %s3, %s1576
      $region44: #{_lambda_.7} parent=39 // pred_fallthru
        _
    $region40: #{_lambda_.7} parent=5 // pred_fallthru
      _
  $region6: #{_lambda_.7} parent=0 // loop_footer
    %s13 = sadd.s32 1, %s9
  $region7: #{_lambda_.7} parent=0 // loop_footer_branch
    %8 = sbr.rel target = $region3
  $region8: #{_lambda_.7} parent=0 // loop_exit
    _

</llo_original>
